<compile_context>
chip_gen: v7x
topology: tpu7x:2x2x1
jax: 0.10.0
libtpu: 0.0.40
codegen_flags: <defaults>
</compile_context>

<pallas_src>
import functools

import jax
import jax.numpy as jnp
import numpy as np
from jax import lax
from jax.experimental import pallas as pl
from jax.experimental.pallas import tpu as pltpu

BF16 = jnp.bfloat16
F32 = jnp.float32


def _round_up(x, m):
    return (x + m - 1) // m * m


# --------------------------------- kernel -----------------------------------


def imp_kernel(
    num_iter, hidden_dim,
    # per-chunk data (block-indexed by the chunk grid axis)
    roi_ref, union_ref, sub_idx_ref, obj_idx_ref,
    # up_dim / unary linears (bf16 weights, f32 biases)
    up_w, up_b, ou_w, ou_b, eu_w, eu_b,
    # node / edge GRU, fully fused: W (2H, 4H) bf16, b (1, 4H) f32
    #   columns: [ r (x+h summed) | z (x+h summed) | n_x | n_h ]
    ng_w, ng_b, eg_w, eg_b,
    # fused gate linears: (3H, 128) bf16 weight, (1, 128) f32 bias
    #   input rows: [ sub_vert | obj_vert | edge ]; live cols 0..3 =
    #   sub_vert_w, obj_vert_w, out_edge_w, in_edge_w
    gate_w, gate_b,
    # output heads (class dim zero-padded to a multiple of 128)
    of_w, of_b, rf_w, rf_b,
    # outputs
    obj_out_ref, rel_out_ref,
):
    H = hidden_dim
    mo = roi_ref.shape[0]    # padded objects in this chunk (chunk*MAX_OBJ)
    mr = union_ref.shape[0]  # padded relations in this chunk (chunk*MAX_REL)

    def bdot(x, w_ref):
        # bf16 operands, f32 accumulation on the MXU
        return jnp.dot(x.astype(BF16), w_ref[...], preferred_element_type=F32)

    def gru(x, h, w_ref, b_ref):
        # fused nn.GRUCell: one MXU dot of [x|h] against the packed (2H,4H) weight
        xh = jnp.concatenate([x, h], axis=-1).astype(BF16)            # (rows, 2H)
        g = jnp.dot(xh, w_ref[...], preferred_element_type=F32) + b_ref[...]
        r = jax.nn.sigmoid(g[:, 0:H])                                  # gi_r+gh_r+b
        z = jax.nn.sigmoid(g[:, H:2 * H])                              # gi_z+gh_z+b
        n = jnp.tanh(g[:, 2 * H:3 * H] + r * g[:, 3 * H:4 * H])       # gi_n + r*gh_n
        return (1.0 - z) * n + z * h

    def gru_h0(x, w_ref, b_ref):
        # hidden state identically zero: only the x-rows of the packed weight
        g = jnp.dot(x.astype(BF16), w_ref[0:H, :],
                    preferred_element_type=F32) + b_ref[...]
        r = jax.nn.sigmoid(g[:, 0:H])
        z = jax.nn.sigmoid(g[:, H:2 * H])
        n = jnp.tanh(g[:, 2 * H:3 * H] + r * g[:, 3 * H:4 * H])       # gh_n == bhh_n
        return (1.0 - z) * n                                           # z * h == 0

    # Block-diagonal one-hot gather matrices [mr, mo] built on-chip from int32
    # chunk-local indices (padded slots carry -1 -> all-zero rows).
    sub_gather = jnp.where(
        lax.broadcasted_iota(jnp.int32, (mr, mo), 1) == sub_idx_ref[...], 1.0, 0.0
    ).astype(BF16)
    obj_gather = jnp.where(
        lax.broadcasted_iota(jnp.int32, (mr, mo), 1) == obj_idx_ref[...], 1.0, 0.0
    ).astype(BF16)

    # prelude: up_dim + unary projections
    union = bdot(union_ref[...], up_w) + up_b[...]
    obj_rep = bdot(roi_ref[...], ou_w) + ou_b[...]
    rel_rep = jnp.maximum(bdot(union, eu_w) + eu_b[...], 0.0)

    # initial GRU steps with zero hidden state
    vert = gru_h0(obj_rep, ng_w, ng_b)
    edge = gru_h0(rel_rep, eg_w, eg_b)

    # scatter = gather^T, expressed as a transposed-LHS contraction (MXU-native)
    tdims = (((0,), (0,)), ((), ()))

    # iterative message passing (static unrolled loop)
    for _ in range(num_iter):
        vert_b = vert.astype(BF16)
        sub_vert = jnp.dot(sub_gather, vert_b, preferred_element_type=F32)
        obj_vert = jnp.dot(obj_gather, vert_b, preferred_element_type=F32)

        # all four gates in one MXU dot (cols 0..3), sigmoid on the VPU/EUP
        cat = jnp.concatenate([sub_vert, obj_vert, edge], axis=-1).astype(BF16)
        gates = jax.nn.sigmoid(
            jnp.dot(cat, gate_w[...], preferred_element_type=F32) + gate_b[...])

        w_sub = gates[:, 0:1] * sub_vert
        w_obj = gates[:, 1:2] * obj_vert
        new_edge = gru(w_sub + w_obj, edge, eg_w, eg_b)

        # pre_out / pre_in use the *old* edge factor (matches the PyTorch IMP code)
        pre_out = (gates[:, 2:3] * edge).astype(BF16)
        pre_in = (gates[:, 3:4] * edge).astype(BF16)
        vert_ctx = (
            lax.dot_general(sub_gather, pre_out, tdims, preferred_element_type=F32)
            + lax.dot_general(obj_gather, pre_in, tdims, preferred_element_type=F32)
        )
        vert = gru(vert_ctx, vert, ng_w, ng_b)
        edge = new_edge

    # lane-dense (128-padded class dim) output stores
    obj_out_ref[...] = bdot(vert, of_w) + of_b[...]
    rel_out_ref[...] = bdot(edge, rf_w) + rf_b[...]


# --------------------------------- wrapper ----------------------------------


def imp_predictor_forward(data, params, *, num_iter, hidden_dim, num_chunks,
                          obj_rows, rel_rows, obj_pad, rel_pad):
    kernel = functools.partial(imp_kernel, num_iter, hidden_dim)

    def chunk_spec(x):  # per-chunk block, leading chunk axis squeezed
        nd = x.ndim
        return pl.BlockSpec((None,) + x.shape[1:],
                            lambda c, nd=nd: (c,) + (0,) * (nd - 1))

    def pin_spec(x):    # whole array, constant block index -> not re-DMA'd per step
        nd = x.ndim
        return pl.BlockSpec(x.shape, lambda c, nd=nd: (0,) * nd)

    in_specs = [chunk_spec(x) for x in data] + [pin_spec(p) for p in params]
    out_specs = (
        pl.BlockSpec((None, obj_rows, obj_pad), lambda c: (c, 0, 0)),
        pl.BlockSpec((None, rel_rows, rel_pad), lambda c: (c, 0, 0)),
    )
    obj_out, rel_out = pl.pallas_call(
        kernel,
        grid=(num_chunks,),
        out_shape=(
            jax.ShapeDtypeStruct((num_chunks, obj_rows, obj_pad), jnp.float32),
            jax.ShapeDtypeStruct((num_chunks, rel_rows, rel_pad), jnp.float32),
        ),
        in_specs=in_specs,
        out_specs=out_specs,
        compiler_params=pltpu.CompilerParams(
            dimension_semantics=("parallel",),
            vmem_limit_bytes=32 * 1024 * 1024),
    )(*data, *params)
    return obj_out, rel_out


# ------------------------------ pure-JAX reference ---------------------------
# Mirrors the PyTorch IMPContext math (index gather + index_add scatter) with
# the exact same fused-weight packing / bf16-matmul / f32-accumulate choices as
# the kernel, so the comparison isolates the Pallas plumbing.


def reference_forward(ref_params, roi, union_raw, sub_glob, obj_glob, n_obj,
                      num_iter, hidden_dim):
    (up_w, up_b, ou_w, ou_b, eu_w, eu_b,
     ng_w, ng_b, eg_w, eg_b, gate_w, gate_b, of_w, of_b, rf_w, rf_b) = ref_params
    H = hidden_dim

    def bdot(x, w):
        return jnp.dot(x.astype(BF16), w, preferred_element_type=F32)

    def b16(x):
        return x.astype(BF16).astype(F32)

    def gru(x, h, w, b):
        xh = jnp.concatenate([x, h], axis=-1).astype(BF16)
        g = jnp.dot(xh, w, preferred_element_type=F32) + b
        r = jax.nn.sigmoid(g[:, 0:H])
        z = jax.nn.sigmoid(g[:, H:2 * H])
        n = jnp.tanh(g[:, 2 * H:3 * H] + r * g[:, 3 * H:4 * H])
        return (1.0 - z) * n + z * h

    def gru_h0(x, w, b):
        g = jnp.dot(x.astype(BF16), w[0:H, :], preferred_element_type=F32) + b
        r = jax.nn.sigmoid(g[:, 0:H])
        z = jax.nn.sigmoid(g[:, H:2 * H])
        n = jnp.tanh(g[:, 2 * H:3 * H] + r * g[:, 3 * H:4 * H])
        return (1.0 - z) * n

    union = bdot(union_raw, up_w) + up_b
    obj_rep = bdot(roi, ou_w) + ou_b
    rel_rep = jax.nn.relu(bdot(union, eu_w) + eu_b)

    vert = gru_h0(obj_rep, ng_w, ng_b)
    edge = gru_h0(rel_rep, eg_w, eg_b)
    for _ in range(num_iter):
        vert_b = b16(vert)
        sub_vert = vert_b[sub_glob]
        obj_vert = vert_b[obj_glob]
        cat = jnp.concatenate([sub_vert, obj_vert, edge], axis=-1).astype(BF16)
        gates = jax.nn.sigmoid(jnp.dot(cat, gate_w, preferred_element_type=F32)
                               + gate_b)
        w_sub = gates[:, 0:1] * sub_vert
        w_obj = gates[:, 1:2] * obj_vert
        new_edge = gru(w_sub + w_obj, edge, eg_w, eg_b)
        pre_out = b16(gates[:, 2:3] * edge)
        pre_in = b16(gates[:, 3:4] * edge)
        vert_ctx = (jax.ops.segment_sum(pre_out, sub_glob, num_segments=n_obj)
                    + jax.ops.segment_sum(pre_in, obj_glob, num_segments=n_obj))
        vert = gru(vert_ctx, vert, ng_w, ng_b)
        edge = new_edge
    return bdot(vert, of_w) + of_b, bdot(edge, rf_w) + rf_b


# ----------------------------------- main ------------------------------------


if __name__ == "__main__":
    # synthetic config (small shapes)
    IN_CHANNELS = 64        # roi feature dim
    MLP_HEAD_DIM = 32       # config.MODEL.ROI_BOX_HEAD.MLP_HEAD_DIM
    POOLING_DIM = 64        # CONTEXT_POOLING_DIM != MLP_HEAD_DIM -> up_dim path used
    HIDDEN_DIM = 32         # CONTEXT_HIDDEN_DIM
    NUM_OBJ_CLS = 32        # ROI_BOX_HEAD.NUM_CLASSES
    NUM_REL_CLS = 16        # ROI_RELATION_HEAD.NUM_CLASSES
    NUM_ITER = 3
    num_objs = [4, 6, 5, 7]
    num_rels = [8, 10, 6, 9]
    IMGS_PER_CHUNK = 2      # images batched per grid step (fills MXU M rows)

    B = len(num_objs)
    n_obj = sum(num_objs)
    n_rel = sum(num_rels)

    num_chunks = -(-B // IMGS_PER_CHUNK)
    MAX_OBJ = _round_up(max(num_objs), 16)       # bf16 native (16,128) row tile
    MAX_REL = _round_up(max(num_rels), 16)
    OBJ_ROWS = IMGS_PER_CHUNK * MAX_OBJ          # object rows per grid step
    REL_ROWS = IMGS_PER_CHUNK * MAX_REL          # relation rows per grid step
    OBJ_PAD = _round_up(NUM_OBJ_CLS, 128)        # lane-dense output class dims
    REL_PAD = _round_up(NUM_REL_CLS, 128)

    keys = iter(jax.random.split(jax.random.PRNGKey(0), 64))

    def dense(in_dim, out_dim, scale=0.1):
        w = (scale * jax.random.normal(next(keys), (in_dim, out_dim), F32)).astype(BF16)
        b = scale * jax.random.normal(next(keys), (1, out_dim), F32)
        return w, b

    def gru_params(in_dim, h, scale=0.1):
        wih = (scale * jax.random.normal(next(keys), (3, in_dim, h), F32)).astype(BF16)
        whh = (scale * jax.random.normal(next(keys), (3, h, h), F32)).astype(BF16)
        bih = scale * jax.random.normal(next(keys), (3, 1, h), F32)
        bhh = scale * jax.random.normal(next(keys), (3, 1, h), F32)
        return wih, whh, bih, bhh

    def gate_params(h, scale=0.1):
        w = scale * jax.random.normal(next(keys), (2, h), F32)
        b = scale * jax.random.normal(next(keys), (1, 1), F32)
        return w, b

    def fuse_gru_params(p):
        # pack to W (2H, 4H): cols [ r(x)+r(h) | z(x)+z(h) | n(x) | n(h) ]
        wih, whh, bih, bhh = p
        h = whh.shape[-1]
        w = jnp.zeros((2 * h, 4 * h), BF16)
        w = w.at[0:h, 0:h].set(wih[0])
        w = w.at[0:h, h:2 * h].set(wih[1])
        w = w.at[0:h, 2 * h:3 * h].set(wih[2])
        w = w.at[h:2 * h, 0:h].set(whh[0])
        w = w.at[h:2 * h, h:2 * h].set(whh[1])
        w = w.at[h:2 * h, 3 * h:4 * h].set(whh[2])
        b = jnp.concatenate([bih[0] + bhh[0], bih[1] + bhh[1], bih[2], bhh[2]], axis=1)
        return w, b

    def pack_gates(sv, ov, oe, ie, h, lanes=128):
        # input rows: [ sub_vert | obj_vert | edge ]; cols 0..3 = sv, ov, oe, ie
        w = jnp.zeros((3 * h, lanes), F32)
        w = w.at[0:h, 0].set(sv[0][0]);      w = w.at[2 * h:3 * h, 0].set(sv[0][1])
        w = w.at[h:2 * h, 1].set(ov[0][0]);  w = w.at[2 * h:3 * h, 1].set(ov[0][1])
        w = w.at[0:h, 2].set(oe[0][0]);      w = w.at[2 * h:3 * h, 2].set(oe[0][1])
        w = w.at[h:2 * h, 3].set(ie[0][0]);  w = w.at[2 * h:3 * h, 3].set(ie[0][1])
        b = jnp.zeros((1, lanes), F32)
        b = b.at[0, 0].set(sv[1][0, 0]); b = b.at[0, 1].set(ov[1][0, 0])
        b = b.at[0, 2].set(oe[1][0, 0]); b = b.at[0, 3].set(ie[1][0, 0])
        return w.astype(BF16), b

    up_w, up_b = dense(MLP_HEAD_DIM, POOLING_DIM)          # self.up_dim
    ou_w, ou_b = dense(IN_CHANNELS, HIDDEN_DIM)            # obj_unary
    eu_w, eu_b = dense(POOLING_DIM, HIDDEN_DIM)            # edge_unary
    ng = gru_params(HIDDEN_DIM, HIDDEN_DIM)                # node_gru
    eg = gru_params(HIDDEN_DIM, HIDDEN_DIM)                # edge_gru
    sv = gate_params(HIDDEN_DIM)                           # sub_vert_w_fc
    ov = gate_params(HIDDEN_DIM)                           # obj_vert_w_fc
    oe = gate_params(HIDDEN_DIM)                           # out_edge_w_fc
    ie = gate_params(HIDDEN_DIM)                           # in_edge_w_fc
    of_w, of_b = dense(HIDDEN_DIM, NUM_OBJ_CLS)            # obj_fc
    rf_w, rf_b = dense(HIDDEN_DIM, NUM_REL_CLS)            # rel_fc

    ng_w, ng_b = fuse_gru_params(ng)
    eg_w, eg_b = fuse_gru_params(eg)
    gate_w, gate_b = pack_gates(sv, ov, oe, ie, HIDDEN_DIM)

    # zero-padded, lane-dense output heads for the kernel
    of_w_pad = jnp.zeros((HIDDEN_DIM, OBJ_PAD), BF16).at[:, :NUM_OBJ_CLS].set(of_w)
    of_b_pad = jnp.zeros((1, OBJ_PAD), F32).at[:, :NUM_OBJ_CLS].set(of_b)
    rf_w_pad = jnp.zeros((HIDDEN_DIM, REL_PAD), BF16).at[:, :NUM_REL_CLS].set(rf_w)
    rf_b_pad = jnp.zeros((1, REL_PAD), F32).at[:, :NUM_REL_CLS].set(rf_b)

    # synthetic forward inputs
    roi_features = jax.random.normal(next(keys), (n_obj, IN_CHANNELS), F32)
    union_features = jax.random.normal(next(keys), (n_rel, MLP_HEAD_DIM), F32)

    # rel_pair_idxs per image + global sub/obj indices (for the reference)
    rel_pair_idxs = []
    sub_glob, obj_glob = [], []
    obj_offset = 0
    for no, nr in zip(num_objs, num_rels):
        pairs = jax.random.randint(next(keys), (nr, 2), 0, no)
        rel_pair_idxs.append(pairs)
        sub_glob.append(pairs[:, 0] + obj_offset)
        obj_glob.append(pairs[:, 1] + obj_offset)
        obj_offset += no
    sub_glob = jnp.concatenate(sub_glob)
    obj_glob = jnp.concatenate(obj_glob)

    # --- build per-chunk padded/batched kernel inputs (host-side glue) ---
    roi_np = np.asarray(roi_features)
    union_np = np.asarray(union_features)
    roi_b = np.zeros((num_chunks, OBJ_ROWS, IN_CHANNELS), np.float32)
    union_b = np.zeros((num_chunks, REL_ROWS, MLP_HEAD_DIM), np.float32)
    sub_idx = np.full((num_chunks, REL_ROWS, 1), -1, np.int32)  # -1 -> zero one-hot row
    obj_idx = np.full((num_chunks, REL_ROWS, 1), -1, np.int32)
    o_off = r_off = 0
    for b, (no, nr) in enumerate(zip(num_objs, num_rels)):
        c, s = divmod(b, IMGS_PER_CHUNK)
        roi_b[c, s * MAX_OBJ:s * MAX_OBJ + no] = roi_np[o_off:o_off + no]
        union_b[c, s * MAX_REL:s * MAX_REL + nr] = union_np[r_off:r_off + nr]
        pr = np.asarray(rel_pair_idxs[b])
        # -1 sentinel scheme silently drops out-of-range messages; guard here.
        assert pr.size == 0 or (pr.min() >= 0 and pr.max() < no)
        sub_idx[c, s * MAX_REL:s * MAX_REL + nr, 0] = pr[:, 0] + s * MAX_OBJ
        obj_idx[c, s * MAX_REL:s * MAX_REL + nr, 0] = pr[:, 1] + s * MAX_OBJ
        o_off += no
        r_off += nr

    data = (jnp.asarray(roi_b).astype(BF16), jnp.asarray(union_b).astype(BF16),
            jnp.asarray(sub_idx), jnp.asarray(obj_idx))
    params = (up_w, up_b, ou_w, ou_b, eu_w, eu_b,
              ng_w, ng_b, eg_w, eg_b, gate_w, gate_b,
              of_w_pad, of_b_pad, rf_w_pad, rf_b_pad)

    obj_out, rel_out = imp_predictor_forward(
        data, params, num_iter=NUM_ITER, hidden_dim=HIDDEN_DIM,
        num_chunks=num_chunks, obj_rows=OBJ_ROWS, rel_rows=REL_ROWS,
        obj_pad=OBJ_PAD, rel_pad=REL_PAD)
    jax.block_until_ready((obj_out, rel_out))

    obj_out_np = np.asarray(obj_out)
    rel_out_np = np.asarray(rel_out)

    # verify against a pure-JAX reference of the PyTorch semantics
    ref_params = (up_w, up_b, ou_w, ou_b, eu_w, eu_b,
                  ng_w, ng_b, eg_w, eg_b, gate_w, gate_b,
                  of_w, of_b, rf_w, rf_b)
    obj_ref, rel_ref = reference_forward(
        ref_params, roi_features, union_features, sub_glob, obj_glob, n_obj,
        NUM_ITER, HIDDEN_DIM)
    obj_ref = np.asarray(obj_ref)
    rel_ref = np.asarray(rel_ref)

    # glue: per-image splits (list outputs), empty add_losses dict (use_bias=False)
    obj_splits, rel_splits = [], []
    o_off = r_off = 0
    for b, (no, nr) in enumerate(zip(num_objs, num_rels)):
        c, s = divmod(b, IMGS_PER_CHUNK)
        ob = obj_out_np[c, s * MAX_OBJ:s * MAX_OBJ + no, :NUM_OBJ_CLS]
        rb = rel_out_np[c, s * MAX_REL:s * MAX_REL + nr, :NUM_REL_CLS]
        np.testing.assert_allclose(ob, obj_ref[o_off:o_off + no], atol=5e-3, rtol=5e-3)
        np.testing.assert_allclose(rb, rel_ref[r_off:r_off + nr], atol=5e-3, rtol=5e-3)
        obj_splits.append(ob)
        rel_splits.append(rb)
        o_off += no
        r_off += nr
    add_losses = {}
    assert len(obj_splits) == len(num_objs) and len(rel_splits) == len(num_rels)

    print("KERNEL_OK")
</pallas_src>

<mosaic_0001>
module attributes {stable_mosaic.version = 11 : i64} {
  func.func @imp_kernel(%arg0: i32, %arg1: memref<1x32x64xbf16, #tpu.memory_space<vmem>>, %arg2: memref<1x32x32xbf16, #tpu.memory_space<vmem>>, %arg3: memref<1x32x1xi32, #tpu.memory_space<vmem>>, %arg4: memref<1x32x1xi32, #tpu.memory_space<vmem>>, %arg5: memref<32x64xbf16, #tpu.memory_space<vmem>>, %arg6: memref<1x64xf32, #tpu.memory_space<vmem>>, %arg7: memref<64x32xbf16, #tpu.memory_space<vmem>>, %arg8: memref<1x32xf32, #tpu.memory_space<vmem>>, %arg9: memref<64x32xbf16, #tpu.memory_space<vmem>>, %arg10: memref<1x32xf32, #tpu.memory_space<vmem>>, %arg11: memref<64x128xbf16, #tpu.memory_space<vmem>>, %arg12: memref<1x128xf32, #tpu.memory_space<vmem>>, %arg13: memref<64x128xbf16, #tpu.memory_space<vmem>>, %arg14: memref<1x128xf32, #tpu.memory_space<vmem>>, %arg15: memref<96x128xbf16, #tpu.memory_space<vmem>>, %arg16: memref<1x128xf32, #tpu.memory_space<vmem>>, %arg17: memref<32x128xbf16, #tpu.memory_space<vmem>>, %arg18: memref<1x128xf32, #tpu.memory_space<vmem>>, %arg19: memref<32x128xbf16, #tpu.memory_space<vmem>>, %arg20: memref<1x128xf32, #tpu.memory_space<vmem>>, %arg21: memref<1x32x128xf32, #tpu.memory_space<vmem>>, %arg22: memref<1x32x128xf32, #tpu.memory_space<vmem>>) attributes {dimension_semantics = [#tpu.dimension_semantics<parallel>], iteration_bounds = array<i64: 2>, scalar_prefetch = 0 : i64, scratch_operands = 0 : i64, tpu.core_type = #tpu.core_type<tc>, window_params = [{transform_indices = @transform_0, window_bounds = array<i64: 1, 32, 64>}, {transform_indices = @transform_1, window_bounds = array<i64: 1, 32, 32>}, {transform_indices = @transform_2, window_bounds = array<i64: 1, 32, 1>}, {transform_indices = @transform_3, window_bounds = array<i64: 1, 32, 1>}, {pipeline_mode = #tpu.pipeline_mode<synchronous>, transform_indices = @transform_4, window_bounds = array<i64: 32, 64>}, {pipeline_mode = #tpu.pipeline_mode<synchronous>, transform_indices = @transform_5, window_bounds = array<i64: 1, 64>}, {pipeline_mode = #tpu.pipeline_mode<synchronous>, transform_indices = @transform_6, window_bounds = array<i64: 64, 32>}, {pipeline_mode = #tpu.pipeline_mode<synchronous>, transform_indices = @transform_7, window_bounds = array<i64: 1, 32>}, {pipeline_mode = #tpu.pipeline_mode<synchronous>, transform_indices = @transform_8, window_bounds = array<i64: 64, 32>}, {pipeline_mode = #tpu.pipeline_mode<synchronous>, transform_indices = @transform_9, window_bounds = array<i64: 1, 32>}, {pipeline_mode = #tpu.pipeline_mode<synchronous>, transform_indices = @transform_10, window_bounds = array<i64: 64, 128>}, {pipeline_mode = #tpu.pipeline_mode<synchronous>, transform_indices = @transform_11, window_bounds = array<i64: 1, 128>}, {pipeline_mode = #tpu.pipeline_mode<synchronous>, transform_indices = @transform_12, window_bounds = array<i64: 64, 128>}, {pipeline_mode = #tpu.pipeline_mode<synchronous>, transform_indices = @transform_13, window_bounds = array<i64: 1, 128>}, {pipeline_mode = #tpu.pipeline_mode<synchronous>, transform_indices = @transform_14, window_bounds = array<i64: 96, 128>}, {pipeline_mode = #tpu.pipeline_mode<synchronous>, transform_indices = @transform_15, window_bounds = array<i64: 1, 128>}, {pipeline_mode = #tpu.pipeline_mode<synchronous>, transform_indices = @transform_16, window_bounds = array<i64: 32, 128>}, {pipeline_mode = #tpu.pipeline_mode<synchronous>, transform_indices = @transform_17, window_bounds = array<i64: 1, 128>}, {pipeline_mode = #tpu.pipeline_mode<synchronous>, transform_indices = @transform_18, window_bounds = array<i64: 32, 128>}, {pipeline_mode = #tpu.pipeline_mode<synchronous>, transform_indices = @transform_19, window_bounds = array<i64: 1, 128>}, {transform_indices = @transform_20, window_bounds = array<i64: 1, 32, 128>}, {transform_indices = @transform_21, window_bounds = array<i64: 1, 32, 128>}]} {
    %0 = tpu.iota {dimensions = array<i32: 1>} : vector<32x32xi32>
    %c0 = arith.constant 0 : index
    %c0_0 = arith.constant 0 : index
    %c0_1 = arith.constant 0 : index
    %1 = vector.load %arg3[%c0, %c0_0, %c0_1] : memref<1x32x1xi32, #tpu.memory_space<vmem>>, vector<1x32x1xi32>
    %2 = vector.shape_cast %1 : vector<1x32x1xi32> to vector<32x1xi32>
    %3 = vector.broadcast %2 : vector<32x1xi32> to vector<32x32xi32>
    %4 = arith.cmpi eq, %0, %3 : vector<32x32xi32>
    %cst = arith.constant 1.000000e+00 : f32
    %cst_2 = arith.constant 0.000000e+00 : f32
    %5 = vector.broadcast %cst : f32 to vector<32x32xf32>
    %6 = vector.broadcast %cst_2 : f32 to vector<32x32xf32>
    %7 = arith.select %4, %5, %6 : vector<32x32xi1>, vector<32x32xf32>
    %8 = arith.truncf %7 : vector<32x32xf32> to vector<32x32xbf16>
    %9 = tpu.iota {dimensions = array<i32: 1>} : vector<32x32xi32>
    %c0_3 = arith.constant 0 : index
    %c0_4 = arith.constant 0 : index
    %c0_5 = arith.constant 0 : index
    %10 = vector.load %arg4[%c0_3, %c0_4, %c0_5] : memref<1x32x1xi32, #tpu.memory_space<vmem>>, vector<1x32x1xi32>
    %11 = vector.shape_cast %10 : vector<1x32x1xi32> to vector<32x1xi32>
    %12 = vector.broadcast %11 : vector<32x1xi32> to vector<32x32xi32>
    %13 = arith.cmpi eq, %9, %12 : vector<32x32xi32>
    %cst_6 = arith.constant 1.000000e+00 : f32
    %cst_7 = arith.constant 0.000000e+00 : f32
    %14 = vector.broadcast %cst_6 : f32 to vector<32x32xf32>
    %15 = vector.broadcast %cst_7 : f32 to vector<32x32xf32>
    %16 = arith.select %13, %14, %15 : vector<32x32xi1>, vector<32x32xf32>
    %17 = arith.truncf %16 : vector<32x32xf32> to vector<32x32xbf16>
    %c0_8 = arith.constant 0 : index
    %c0_9 = arith.constant 0 : index
    %c0_10 = arith.constant 0 : index
    %18 = vector.load %arg2[%c0_8, %c0_9, %c0_10] : memref<1x32x32xbf16, #tpu.memory_space<vmem>>, vector<1x32x32xbf16>
    %19 = vector.shape_cast %18 : vector<1x32x32xbf16> to vector<32x32xbf16>
    %c0_11 = arith.constant 0 : index
    %c0_12 = arith.constant 0 : index
    %20 = vector.load %arg5[%c0_11, %c0_12] : memref<32x64xbf16, #tpu.memory_space<vmem>>, vector<32x64xbf16>
    %cst_13 = arith.constant dense<0.000000e+00> : vector<32x64xf32>
    %21 = tpu.matmul %19, %20, %cst_13 {dimension_numbers = #tpu.dot_dimension_numbers<[1], [0], [0], [1], [0, 0, 1, 1], [], []>} : vector<32x32xbf16>, vector<32x64xbf16>, vector<32x64xf32> -> vector<32x64xf32>
    %c0_14 = arith.constant 0 : index
    %c0_15 = arith.constant 0 : index
    %22 = vector.load %arg6[%c0_14, %c0_15] : memref<1x64xf32, #tpu.memory_space<vmem>>, vector<1x64xf32>
    %23 = vector.broadcast %22 : vector<1x64xf32> to vector<32x64xf32>
    %24 = arith.addf %21, %23 : vector<32x64xf32>
    %c0_16 = arith.constant 0 : index
    %c0_17 = arith.constant 0 : index
    %c0_18 = arith.constant 0 : index
    %25 = vector.load %arg1[%c0_16, %c0_17, %c0_18] : memref<1x32x64xbf16, #tpu.memory_space<vmem>>, vector<1x32x64xbf16>
    %26 = vector.shape_cast %25 : vector<1x32x64xbf16> to vector<32x64xbf16>
    %c0_19 = arith.constant 0 : index
    %c0_20 = arith.constant 0 : index
    %27 = vector.load %arg7[%c0_19, %c0_20] : memref<64x32xbf16, #tpu.memory_space<vmem>>, vector<64x32xbf16>
    %cst_21 = arith.constant dense<0.000000e+00> : vector<32x32xf32>
    %28 = tpu.matmul %26, %27, %cst_21 {dimension_numbers = #tpu.dot_dimension_numbers<[1], [0], [0], [1], [0, 0, 1, 1], [], []>} : vector<32x64xbf16>, vector<64x32xbf16>, vector<32x32xf32> -> vector<32x32xf32>
    %c0_22 = arith.constant 0 : index
    %c0_23 = arith.constant 0 : index
    %29 = vector.load %arg8[%c0_22, %c0_23] : memref<1x32xf32, #tpu.memory_space<vmem>>, vector<1x32xf32>
    %30 = vector.broadcast %29 : vector<1x32xf32> to vector<32x32xf32>
    %31 = arith.addf %28, %30 : vector<32x32xf32>
    %32 = arith.truncf %24 : vector<32x64xf32> to vector<32x64xbf16>
    %c0_24 = arith.constant 0 : index
    %c0_25 = arith.constant 0 : index
    %33 = vector.load %arg9[%c0_24, %c0_25] : memref<64x32xbf16, #tpu.memory_space<vmem>>, vector<64x32xbf16>
    %cst_26 = arith.constant dense<0.000000e+00> : vector<32x32xf32>
    %34 = tpu.matmul %32, %33, %cst_26 {dimension_numbers = #tpu.dot_dimension_numbers<[1], [0], [0], [1], [0, 0, 1, 1], [], []>} : vector<32x64xbf16>, vector<64x32xbf16>, vector<32x32xf32> -> vector<32x32xf32>
    %c0_27 = arith.constant 0 : index
    %c0_28 = arith.constant 0 : index
    %35 = vector.load %arg10[%c0_27, %c0_28] : memref<1x32xf32, #tpu.memory_space<vmem>>, vector<1x32xf32>
    %36 = vector.broadcast %35 : vector<1x32xf32> to vector<32x32xf32>
    %37 = arith.addf %34, %36 : vector<32x32xf32>
    %cst_29 = arith.constant 0.000000e+00 : f32
    %38 = vector.broadcast %cst_29 : f32 to vector<32x32xf32>
    %39 = arith.maximumf %37, %38 : vector<32x32xf32>
    %40 = arith.truncf %31 : vector<32x32xf32> to vector<32x32xbf16>
    %c0_30 = arith.constant 0 : index
    %c0_31 = arith.constant 0 : index
    %41 = vector.load %arg11[%c0_30, %c0_31] : memref<64x128xbf16, #tpu.memory_space<vmem>>, vector<32x128xbf16>
    %cst_32 = arith.constant dense<0.000000e+00> : vector<32x128xf32>
    %42 = tpu.matmul %40, %41, %cst_32 {dimension_numbers = #tpu.dot_dimension_numbers<[1], [0], [0], [1], [0, 0, 1, 1], [], []>} : vector<32x32xbf16>, vector<32x128xbf16>, vector<32x128xf32> -> vector<32x128xf32>
    %c0_33 = arith.constant 0 : index
    %c0_34 = arith.constant 0 : index
    %43 = vector.load %arg12[%c0_33, %c0_34] : memref<1x128xf32, #tpu.memory_space<vmem>>, vector<1x128xf32>
    %44 = vector.broadcast %43 : vector<1x128xf32> to vector<32x128xf32>
    %45 = arith.addf %42, %44 : vector<32x128xf32>
    %46 = vector.extract_strided_slice %45 {offsets = [0, 0], sizes = [32, 32], strides = [1, 1]} : vector<32x128xf32> to vector<32x32xf32>
    %47 = arith.negf %46 : vector<32x32xf32>
    %48 = math.exp %47 : vector<32x32xf32>
    %cst_35 = arith.constant 1.000000e+00 : f32
    %49 = vector.broadcast %cst_35 : f32 to vector<32x32xf32>
    %50 = arith.addf %49, %48 : vector<32x32xf32>
    %51 = arith.divf %49, %50 : vector<32x32xf32>
    %52 = vector.extract_strided_slice %45 {offsets = [0, 32], sizes = [32, 32], strides = [1, 1]} : vector<32x128xf32> to vector<32x32xf32>
    %53 = arith.negf %52 : vector<32x32xf32>
    %54 = math.exp %53 : vector<32x32xf32>
    %cst_36 = arith.constant 1.000000e+00 : f32
    %55 = vector.broadcast %cst_36 : f32 to vector<32x32xf32>
    %56 = arith.addf %55, %54 : vector<32x32xf32>
    %57 = arith.divf %55, %56 : vector<32x32xf32>
    %58 = vector.extract_strided_slice %45 {offsets = [0, 64], sizes = [32, 32], strides = [1, 1]} : vector<32x128xf32> to vector<32x32xf32>
    %59 = vector.extract_strided_slice %45 {offsets = [0, 96], sizes = [32, 32], strides = [1, 1]} : vector<32x128xf32> to vector<32x32xf32>
    %60 = arith.mulf %51, %59 : vector<32x32xf32>
    %61 = arith.addf %58, %60 : vector<32x32xf32>
    %62 = math.tanh %61 : vector<32x32xf32>
    %cst_37 = arith.constant 1.000000e+00 : f32
    %63 = vector.broadcast %cst_37 : f32 to vector<32x32xf32>
    %64 = arith.subf %63, %57 : vector<32x32xf32>
    %65 = arith.mulf %64, %62 : vector<32x32xf32>
    %66 = arith.truncf %39 : vector<32x32xf32> to vector<32x32xbf16>
    %c0_38 = arith.constant 0 : index
    %c0_39 = arith.constant 0 : index
    %67 = vector.load %arg13[%c0_38, %c0_39] : memref<64x128xbf16, #tpu.memory_space<vmem>>, vector<32x128xbf16>
    %cst_40 = arith.constant dense<0.000000e+00> : vector<32x128xf32>
    %68 = tpu.matmul %66, %67, %cst_40 {dimension_numbers = #tpu.dot_dimension_numbers<[1], [0], [0], [1], [0, 0, 1, 1], [], []>} : vector<32x32xbf16>, vector<32x128xbf16>, vector<32x128xf32> -> vector<32x128xf32>
    %c0_41 = arith.constant 0 : index
    %c0_42 = arith.constant 0 : index
    %69 = vector.load %arg14[%c0_41, %c0_42] : memref<1x128xf32, #tpu.memory_space<vmem>>, vector<1x128xf32>
    %70 = vector.broadcast %69 : vector<1x128xf32> to vector<32x128xf32>
    %71 = arith.addf %68, %70 : vector<32x128xf32>
    %72 = vector.extract_strided_slice %71 {offsets = [0, 0], sizes = [32, 32], strides = [1, 1]} : vector<32x128xf32> to vector<32x32xf32>
    %73 = arith.negf %72 : vector<32x32xf32>
    %74 = math.exp %73 : vector<32x32xf32>
    %cst_43 = arith.constant 1.000000e+00 : f32
    %75 = vector.broadcast %cst_43 : f32 to vector<32x32xf32>
    %76 = arith.addf %75, %74 : vector<32x32xf32>
    %77 = arith.divf %75, %76 : vector<32x32xf32>
    %78 = vector.extract_strided_slice %71 {offsets = [0, 32], sizes = [32, 32], strides = [1, 1]} : vector<32x128xf32> to vector<32x32xf32>
    %79 = arith.negf %78 : vector<32x32xf32>
    %80 = math.exp %79 : vector<32x32xf32>
    %cst_44 = arith.constant 1.000000e+00 : f32
    %81 = vector.broadcast %cst_44 : f32 to vector<32x32xf32>
    %82 = arith.addf %81, %80 : vector<32x32xf32>
    %83 = arith.divf %81, %82 : vector<32x32xf32>
    %84 = vector.extract_strided_slice %71 {offsets = [0, 64], sizes = [32, 32], strides = [1, 1]} : vector<32x128xf32> to vector<32x32xf32>
    %85 = vector.extract_strided_slice %71 {offsets = [0, 96], sizes = [32, 32], strides = [1, 1]} : vector<32x128xf32> to vector<32x32xf32>
    %86 = arith.mulf %77, %85 : vector<32x32xf32>
    %87 = arith.addf %84, %86 : vector<32x32xf32>
    %88 = math.tanh %87 : vector<32x32xf32>
    %cst_45 = arith.constant 1.000000e+00 : f32
    %89 = vector.broadcast %cst_45 : f32 to vector<32x32xf32>
    %90 = arith.subf %89, %83 : vector<32x32xf32>
    %91 = arith.mulf %90, %88 : vector<32x32xf32>
    %92 = arith.truncf %65 : vector<32x32xf32> to vector<32x32xbf16>
    %cst_46 = arith.constant dense<0.000000e+00> : vector<32x32xf32>
    %93 = tpu.matmul %8, %92, %cst_46 {dimension_numbers = #tpu.dot_dimension_numbers<[1], [0], [0], [1], [0, 0, 1, 1], [], []>} : vector<32x32xbf16>, vector<32x32xbf16>, vector<32x32xf32> -> vector<32x32xf32>
    %cst_47 = arith.constant dense<0.000000e+00> : vector<32x32xf32>
    %94 = tpu.matmul %17, %92, %cst_47 {dimension_numbers = #tpu.dot_dimension_numbers<[1], [0], [0], [1], [0, 0, 1, 1], [], []>} : vector<32x32xbf16>, vector<32x32xbf16>, vector<32x32xf32> -> vector<32x32xf32>
    %95 = tpu.concatenate %93, %94, %91 in 1 : vector<32x32xf32>, vector<32x32xf32>, vector<32x32xf32> -> vector<32x96xf32>
    %96 = arith.truncf %95 : vector<32x96xf32> to vector<32x96xbf16>
    %c0_48 = arith.constant 0 : index
    %c0_49 = arith.constant 0 : index
    %97 = vector.load %arg15[%c0_48, %c0_49] : memref<96x128xbf16, #tpu.memory_space<vmem>>, vector<96x128xbf16>
    %cst_50 = arith.constant dense<0.000000e+00> : vector<32x128xf32>
    %98 = tpu.matmul %96, %97, %cst_50 {dimension_numbers = #tpu.dot_dimension_numbers<[1], [0], [0], [1], [0, 0, 1, 1], [], []>} : vector<32x96xbf16>, vector<96x128xbf16>, vector<32x128xf32> -> vector<32x128xf32>
    %c0_51 = arith.constant 0 : index
    %c0_52 = arith.constant 0 : index
    %99 = vector.load %arg16[%c0_51, %c0_52] : memref<1x128xf32, #tpu.memory_space<vmem>>, vector<1x128xf32>
    %100 = vector.broadcast %99 : vector<1x128xf32> to vector<32x128xf32>
    %101 = arith.addf %98, %100 : vector<32x128xf32>
    %102 = arith.negf %101 : vector<32x128xf32>
    %103 = math.exp %102 : vector<32x128xf32>
    %cst_53 = arith.constant 1.000000e+00 : f32
    %104 = vector.broadcast %cst_53 : f32 to vector<32x128xf32>
    %105 = arith.addf %104, %103 : vector<32x128xf32>
    %106 = arith.divf %104, %105 : vector<32x128xf32>
    %107 = vector.extract_strided_slice %106 {offsets = [0, 0], sizes = [32, 1], strides = [1, 1]} : vector<32x128xf32> to vector<32x1xf32>
    %108 = vector.broadcast %107 : vector<32x1xf32> to vector<32x32xf32>
    %109 = arith.mulf %108, %93 : vector<32x32xf32>
    %110 = vector.extract_strided_slice %106 {offsets = [0, 1], sizes = [32, 1], strides = [1, 1]} : vector<32x128xf32> to vector<32x1xf32>
    %111 = vector.broadcast %110 : vector<32x1xf32> to vector<32x32xf32>
    %112 = arith.mulf %111, %94 : vector<32x32xf32>
    %113 = arith.addf %109, %112 : vector<32x32xf32>
    %114 = tpu.concatenate %113, %91 in 1 : vector<32x32xf32>, vector<32x32xf32> -> vector<32x64xf32>
    %115 = arith.truncf %114 : vector<32x64xf32> to vector<32x64xbf16>
    %c0_54 = arith.constant 0 : index
    %c0_55 = arith.constant 0 : index
    %116 = vector.load %arg13[%c0_54, %c0_55] : memref<64x128xbf16, #tpu.memory_space<vmem>>, vector<64x128xbf16>
    %cst_56 = arith.constant dense<0.000000e+00> : vector<32x128xf32>
    %117 = tpu.matmul %115, %116, %cst_56 {dimension_numbers = #tpu.dot_dimension_numbers<[1], [0], [0], [1], [0, 0, 1, 1], [], []>} : vector<32x64xbf16>, vector<64x128xbf16>, vector<32x128xf32> -> vector<32x128xf32>
    %c0_57 = arith.constant 0 : index
    %c0_58 = arith.constant 0 : index
    %118 = vector.load %arg14[%c0_57, %c0_58] : memref<1x128xf32, #tpu.memory_space<vmem>>, vector<1x128xf32>
    %119 = vector.broadcast %118 : vector<1x128xf32> to vector<32x128xf32>
    %120 = arith.addf %117, %119 : vector<32x128xf32>
    %121 = vector.extract_strided_slice %120 {offsets = [0, 0], sizes = [32, 32], strides = [1, 1]} : vector<32x128xf32> to vector<32x32xf32>
    %122 = arith.negf %121 : vector<32x32xf32>
    %123 = math.exp %122 : vector<32x32xf32>
    %cst_59 = arith.constant 1.000000e+00 : f32
    %124 = vector.broadcast %cst_59 : f32 to vector<32x32xf32>
    %125 = arith.addf %124, %123 : vector<32x32xf32>
    %126 = arith.divf %124, %125 : vector<32x32xf32>
    %127 = vector.extract_strided_slice %120 {offsets = [0, 32], sizes = [32, 32], strides = [1, 1]} : vector<32x128xf32> to vector<32x32xf32>
    %128 = arith.negf %127 : vector<32x32xf32>
    %129 = math.exp %128 : vector<32x32xf32>
    %cst_60 = arith.constant 1.000000e+00 : f32
    %130 = vector.broadcast %cst_60 : f32 to vector<32x32xf32>
    %131 = arith.addf %130, %129 : vector<32x32xf32>
    %132 = arith.divf %130, %131 : vector<32x32xf32>
    %133 = vector.extract_strided_slice %120 {offsets = [0, 64], sizes = [32, 32], strides = [1, 1]} : vector<32x128xf32> to vector<32x32xf32>
    %134 = vector.extract_strided_slice %120 {offsets = [0, 96], sizes = [32, 32], strides = [1, 1]} : vector<32x128xf32> to vector<32x32xf32>
    %135 = arith.mulf %126, %134 : vector<32x32xf32>
    %136 = arith.addf %133, %135 : vector<32x32xf32>
    %137 = math.tanh %136 : vector<32x32xf32>
    %cst_61 = arith.constant 1.000000e+00 : f32
    %138 = vector.broadcast %cst_61 : f32 to vector<32x32xf32>
    %139 = arith.subf %138, %132 : vector<32x32xf32>
    %140 = arith.mulf %139, %137 : vector<32x32xf32>
    %141 = arith.mulf %132, %91 : vector<32x32xf32>
    %142 = arith.addf %140, %141 : vector<32x32xf32>
    %143 = vector.extract_strided_slice %106 {offsets = [0, 2], sizes = [32, 1], strides = [1, 1]} : vector<32x128xf32> to vector<32x1xf32>
    %144 = vector.broadcast %143 : vector<32x1xf32> to vector<32x32xf32>
    %145 = arith.mulf %144, %91 : vector<32x32xf32>
    %146 = arith.truncf %145 : vector<32x32xf32> to vector<32x32xbf16>
    %147 = vector.extract_strided_slice %106 {offsets = [0, 3], sizes = [32, 1], strides = [1, 1]} : vector<32x128xf32> to vector<32x1xf32>
    %148 = vector.broadcast %147 : vector<32x1xf32> to vector<32x32xf32>
    %149 = arith.mulf %148, %91 : vector<32x32xf32>
    %150 = arith.truncf %149 : vector<32x32xf32> to vector<32x32xbf16>
    %cst_62 = arith.constant dense<0.000000e+00> : vector<32x32xf32>
    %151 = tpu.matmul %8, %146, %cst_62 {dimension_numbers = #tpu.dot_dimension_numbers<[0], [0], [1], [1], [0, 1, 1, 1], [], []>} : vector<32x32xbf16>, vector<32x32xbf16>, vector<32x32xf32> -> vector<32x32xf32>
    %cst_63 = arith.constant dense<0.000000e+00> : vector<32x32xf32>
    %152 = tpu.matmul %17, %150, %cst_63 {dimension_numbers = #tpu.dot_dimension_numbers<[0], [0], [1], [1], [0, 1, 1, 1], [], []>} : vector<32x32xbf16>, vector<32x32xbf16>, vector<32x32xf32> -> vector<32x32xf32>
    %153 = arith.addf %151, %152 : vector<32x32xf32>
    %154 = tpu.concatenate %153, %65 in 1 : vector<32x32xf32>, vector<32x32xf32> -> vector<32x64xf32>
    %155 = arith.truncf %154 : vector<32x64xf32> to vector<32x64xbf16>
    %c0_64 = arith.constant 0 : index
    %c0_65 = arith.constant 0 : index
    %156 = vector.load %arg11[%c0_64, %c0_65] : memref<64x128xbf16, #tpu.memory_space<vmem>>, vector<64x128xbf16>
    %cst_66 = arith.constant dense<0.000000e+00> : vector<32x128xf32>
    %157 = tpu.matmul %155, %156, %cst_66 {dimension_numbers = #tpu.dot_dimension_numbers<[1], [0], [0], [1], [0, 0, 1, 1], [], []>} : vector<32x64xbf16>, vector<64x128xbf16>, vector<32x128xf32> -> vector<32x128xf32>
    %c0_67 = arith.constant 0 : index
    %c0_68 = arith.constant 0 : index
    %158 = vector.load %arg12[%c0_67, %c0_68] : memref<1x128xf32, #tpu.memory_space<vmem>>, vector<1x128xf32>
    %159 = vector.broadcast %158 : vector<1x128xf32> to vector<32x128xf32>
    %160 = arith.addf %157, %159 : vector<32x128xf32>
    %161 = vector.extract_strided_slice %160 {offsets = [0, 0], sizes = [32, 32], strides = [1, 1]} : vector<32x128xf32> to vector<32x32xf32>
    %162 = arith.negf %161 : vector<32x32xf32>
    %163 = math.exp %162 : vector<32x32xf32>
    %cst_69 = arith.constant 1.000000e+00 : f32
    %164 = vector.broadcast %cst_69 : f32 to vector<32x32xf32>
    %165 = arith.addf %164, %163 : vector<32x32xf32>
    %166 = arith.divf %164, %165 : vector<32x32xf32>
    %167 = vector.extract_strided_slice %160 {offsets = [0, 32], sizes = [32, 32], strides = [1, 1]} : vector<32x128xf32> to vector<32x32xf32>
    %168 = arith.negf %167 : vector<32x32xf32>
    %169 = math.exp %168 : vector<32x32xf32>
    %cst_70 = arith.constant 1.000000e+00 : f32
    %170 = vector.broadcast %cst_70 : f32 to vector<32x32xf32>
    %171 = arith.addf %170, %169 : vector<32x32xf32>
    %172 = arith.divf %170, %171 : vector<32x32xf32>
    %173 = vector.extract_strided_slice %160 {offsets = [0, 64], sizes = [32, 32], strides = [1, 1]} : vector<32x128xf32> to vector<32x32xf32>
    %174 = vector.extract_strided_slice %160 {offsets = [0, 96], sizes = [32, 32], strides = [1, 1]} : vector<32x128xf32> to vector<32x32xf32>
    %175 = arith.mulf %166, %174 : vector<32x32xf32>
    %176 = arith.addf %173, %175 : vector<32x32xf32>
    %177 = math.tanh %176 : vector<32x32xf32>
    %cst_71 = arith.constant 1.000000e+00 : f32
    %178 = vector.broadcast %cst_71 : f32 to vector<32x32xf32>
    %179 = arith.subf %178, %172 : vector<32x32xf32>
    %180 = arith.mulf %179, %177 : vector<32x32xf32>
    %181 = arith.mulf %172, %65 : vector<32x32xf32>
    %182 = arith.addf %180, %181 : vector<32x32xf32>
    %183 = arith.truncf %182 : vector<32x32xf32> to vector<32x32xbf16>
    %cst_72 = arith.constant dense<0.000000e+00> : vector<32x32xf32>
    %184 = tpu.matmul %8, %183, %cst_72 {dimension_numbers = #tpu.dot_dimension_numbers<[1], [0], [0], [1], [0, 0, 1, 1], [], []>} : vector<32x32xbf16>, vector<32x32xbf16>, vector<32x32xf32> -> vector<32x32xf32>
    %cst_73 = arith.constant dense<0.000000e+00> : vector<32x32xf32>
    %185 = tpu.matmul %17, %183, %cst_73 {dimension_numbers = #tpu.dot_dimension_numbers<[1], [0], [0], [1], [0, 0, 1, 1], [], []>} : vector<32x32xbf16>, vector<32x32xbf16>, vector<32x32xf32> -> vector<32x32xf32>
    %186 = tpu.concatenate %184, %185, %142 in 1 : vector<32x32xf32>, vector<32x32xf32>, vector<32x32xf32> -> vector<32x96xf32>
    %187 = arith.truncf %186 : vector<32x96xf32> to vector<32x96xbf16>
    %c0_74 = arith.constant 0 : index
    %c0_75 = arith.constant 0 : index
    %188 = vector.load %arg15[%c0_74, %c0_75] : memref<96x128xbf16, #tpu.memory_space<vmem>>, vector<96x128xbf16>
    %cst_76 = arith.constant dense<0.000000e+00> : vector<32x128xf32>
    %189 = tpu.matmul %187, %188, %cst_76 {dimension_numbers = #tpu.dot_dimension_numbers<[1], [0], [0], [1], [0, 0, 1, 1], [], []>} : vector<32x96xbf16>, vector<96x128xbf16>, vector<32x128xf32> -> vector<32x128xf32>
    %c0_77 = arith.constant 0 : index
    %c0_78 = arith.constant 0 : index
    %190 = vector.load %arg16[%c0_77, %c0_78] : memref<1x128xf32, #tpu.memory_space<vmem>>, vector<1x128xf32>
    %191 = vector.broadcast %190 : vector<1x128xf32> to vector<32x128xf32>
    %192 = arith.addf %189, %191 : vector<32x128xf32>
    %193 = arith.negf %192 : vector<32x128xf32>
    %194 = math.exp %193 : vector<32x128xf32>
    %cst_79 = arith.constant 1.000000e+00 : f32
    %195 = vector.broadcast %cst_79 : f32 to vector<32x128xf32>
    %196 = arith.addf %195, %194 : vector<32x128xf32>
    %197 = arith.divf %195, %196 : vector<32x128xf32>
    %198 = vector.extract_strided_slice %197 {offsets = [0, 0], sizes = [32, 1], strides = [1, 1]} : vector<32x128xf32> to vector<32x1xf32>
    %199 = vector.broadcast %198 : vector<32x1xf32> to vector<32x32xf32>
    %200 = arith.mulf %199, %184 : vector<32x32xf32>
    %201 = vector.extract_strided_slice %197 {offsets = [0, 1], sizes = [32, 1], strides = [1, 1]} : vector<32x128xf32> to vector<32x1xf32>
    %202 = vector.broadcast %201 : vector<32x1xf32> to vector<32x32xf32>
    %203 = arith.mulf %202, %185 : vector<32x32xf32>
    %204 = arith.addf %200, %203 : vector<32x32xf32>
    %205 = tpu.concatenate %204, %142 in 1 : vector<32x32xf32>, vector<32x32xf32> -> vector<32x64xf32>
    %206 = arith.truncf %205 : vector<32x64xf32> to vector<32x64xbf16>
    %c0_80 = arith.constant 0 : index
    %c0_81 = arith.constant 0 : index
    %207 = vector.load %arg13[%c0_80, %c0_81] : memref<64x128xbf16, #tpu.memory_space<vmem>>, vector<64x128xbf16>
    %cst_82 = arith.constant dense<0.000000e+00> : vector<32x128xf32>
    %208 = tpu.matmul %206, %207, %cst_82 {dimension_numbers = #tpu.dot_dimension_numbers<[1], [0], [0], [1], [0, 0, 1, 1], [], []>} : vector<32x64xbf16>, vector<64x128xbf16>, vector<32x128xf32> -> vector<32x128xf32>
    %c0_83 = arith.constant 0 : index
    %c0_84 = arith.constant 0 : index
    %209 = vector.load %arg14[%c0_83, %c0_84] : memref<1x128xf32, #tpu.memory_space<vmem>>, vector<1x128xf32>
    %210 = vector.broadcast %209 : vector<1x128xf32> to vector<32x128xf32>
    %211 = arith.addf %208, %210 : vector<32x128xf32>
    %212 = vector.extract_strided_slice %211 {offsets = [0, 0], sizes = [32, 32], strides = [1, 1]} : vector<32x128xf32> to vector<32x32xf32>
    %213 = arith.negf %212 : vector<32x32xf32>
    %214 = math.exp %213 : vector<32x32xf32>
    %cst_85 = arith.constant 1.000000e+00 : f32
    %215 = vector.broadcast %cst_85 : f32 to vector<32x32xf32>
    %216 = arith.addf %215, %214 : vector<32x32xf32>
    %217 = arith.divf %215, %216 : vector<32x32xf32>
    %218 = vector.extract_strided_slice %211 {offsets = [0, 32], sizes = [32, 32], strides = [1, 1]} : vector<32x128xf32> to vector<32x32xf32>
    %219 = arith.negf %218 : vector<32x32xf32>
    %220 = math.exp %219 : vector<32x32xf32>
    %cst_86 = arith.constant 1.000000e+00 : f32
    %221 = vector.broadcast %cst_86 : f32 to vector<32x32xf32>
    %222 = arith.addf %221, %220 : vector<32x32xf32>
    %223 = arith.divf %221, %222 : vector<32x32xf32>
    %224 = vector.extract_strided_slice %211 {offsets = [0, 64], sizes = [32, 32], strides = [1, 1]} : vector<32x128xf32> to vector<32x32xf32>
    %225 = vector.extract_strided_slice %211 {offsets = [0, 96], sizes = [32, 32], strides = [1, 1]} : vector<32x128xf32> to vector<32x32xf32>
    %226 = arith.mulf %217, %225 : vector<32x32xf32>
    %227 = arith.addf %224, %226 : vector<32x32xf32>
    %228 = math.tanh %227 : vector<32x32xf32>
    %cst_87 = arith.constant 1.000000e+00 : f32
    %229 = vector.broadcast %cst_87 : f32 to vector<32x32xf32>
    %230 = arith.subf %229, %223 : vector<32x32xf32>
    %231 = arith.mulf %230, %228 : vector<32x32xf32>
    %232 = arith.mulf %223, %142 : vector<32x32xf32>
    %233 = arith.addf %231, %232 : vector<32x32xf32>
    %234 = vector.extract_strided_slice %197 {offsets = [0, 2], sizes = [32, 1], strides = [1, 1]} : vector<32x128xf32> to vector<32x1xf32>
    %235 = vector.broadcast %234 : vector<32x1xf32> to vector<32x32xf32>
    %236 = arith.mulf %235, %142 : vector<32x32xf32>
    %237 = arith.truncf %236 : vector<32x32xf32> to vector<32x32xbf16>
    %238 = vector.extract_strided_slice %197 {offsets = [0, 3], sizes = [32, 1], strides = [1, 1]} : vector<32x128xf32> to vector<32x1xf32>
    %239 = vector.broadcast %238 : vector<32x1xf32> to vector<32x32xf32>
    %240 = arith.mulf %239, %142 : vector<32x32xf32>
    %241 = arith.truncf %240 : vector<32x32xf32> to vector<32x32xbf16>
    %cst_88 = arith.constant dense<0.000000e+00> : vector<32x32xf32>
    %242 = tpu.matmul %8, %237, %cst_88 {dimension_numbers = #tpu.dot_dimension_numbers<[0], [0], [1], [1], [0, 1, 1, 1], [], []>} : vector<32x32xbf16>, vector<32x32xbf16>, vector<32x32xf32> -> vector<32x32xf32>
    %cst_89 = arith.constant dense<0.000000e+00> : vector<32x32xf32>
    %243 = tpu.matmul %17, %241, %cst_89 {dimension_numbers = #tpu.dot_dimension_numbers<[0], [0], [1], [1], [0, 1, 1, 1], [], []>} : vector<32x32xbf16>, vector<32x32xbf16>, vector<32x32xf32> -> vector<32x32xf32>
    %244 = arith.addf %242, %243 : vector<32x32xf32>
    %245 = tpu.concatenate %244, %182 in 1 : vector<32x32xf32>, vector<32x32xf32> -> vector<32x64xf32>
    %246 = arith.truncf %245 : vector<32x64xf32> to vector<32x64xbf16>
    %c0_90 = arith.constant 0 : index
    %c0_91 = arith.constant 0 : index
    %247 = vector.load %arg11[%c0_90, %c0_91] : memref<64x128xbf16, #tpu.memory_space<vmem>>, vector<64x128xbf16>
    %cst_92 = arith.constant dense<0.000000e+00> : vector<32x128xf32>
    %248 = tpu.matmul %246, %247, %cst_92 {dimension_numbers = #tpu.dot_dimension_numbers<[1], [0], [0], [1], [0, 0, 1, 1], [], []>} : vector<32x64xbf16>, vector<64x128xbf16>, vector<32x128xf32> -> vector<32x128xf32>
    %c0_93 = arith.constant 0 : index
    %c0_94 = arith.constant 0 : index
    %249 = vector.load %arg12[%c0_93, %c0_94] : memref<1x128xf32, #tpu.memory_space<vmem>>, vector<1x128xf32>
    %250 = vector.broadcast %249 : vector<1x128xf32> to vector<32x128xf32>
    %251 = arith.addf %248, %250 : vector<32x128xf32>
    %252 = vector.extract_strided_slice %251 {offsets = [0, 0], sizes = [32, 32], strides = [1, 1]} : vector<32x128xf32> to vector<32x32xf32>
    %253 = arith.negf %252 : vector<32x32xf32>
    %254 = math.exp %253 : vector<32x32xf32>
    %cst_95 = arith.constant 1.000000e+00 : f32
    %255 = vector.broadcast %cst_95 : f32 to vector<32x32xf32>
    %256 = arith.addf %255, %254 : vector<32x32xf32>
    %257 = arith.divf %255, %256 : vector<32x32xf32>
    %258 = vector.extract_strided_slice %251 {offsets = [0, 32], sizes = [32, 32], strides = [1, 1]} : vector<32x128xf32> to vector<32x32xf32>
    %259 = arith.negf %258 : vector<32x32xf32>
    %260 = math.exp %259 : vector<32x32xf32>
    %cst_96 = arith.constant 1.000000e+00 : f32
    %261 = vector.broadcast %cst_96 : f32 to vector<32x32xf32>
    %262 = arith.addf %261, %260 : vector<32x32xf32>
    %263 = arith.divf %261, %262 : vector<32x32xf32>
    %264 = vector.extract_strided_slice %251 {offsets = [0, 64], sizes = [32, 32], strides = [1, 1]} : vector<32x128xf32> to vector<32x32xf32>
    %265 = vector.extract_strided_slice %251 {offsets = [0, 96], sizes = [32, 32], strides = [1, 1]} : vector<32x128xf32> to vector<32x32xf32>
    %266 = arith.mulf %257, %265 : vector<32x32xf32>
    %267 = arith.addf %264, %266 : vector<32x32xf32>
    %268 = math.tanh %267 : vector<32x32xf32>
    %cst_97 = arith.constant 1.000000e+00 : f32
    %269 = vector.broadcast %cst_97 : f32 to vector<32x32xf32>
    %270 = arith.subf %269, %263 : vector<32x32xf32>
    %271 = arith.mulf %270, %268 : vector<32x32xf32>
    %272 = arith.mulf %263, %182 : vector<32x32xf32>
    %273 = arith.addf %271, %272 : vector<32x32xf32>
    %274 = arith.truncf %273 : vector<32x32xf32> to vector<32x32xbf16>
    %cst_98 = arith.constant dense<0.000000e+00> : vector<32x32xf32>
    %275 = tpu.matmul %8, %274, %cst_98 {dimension_numbers = #tpu.dot_dimension_numbers<[1], [0], [0], [1], [0, 0, 1, 1], [], []>} : vector<32x32xbf16>, vector<32x32xbf16>, vector<32x32xf32> -> vector<32x32xf32>
    %cst_99 = arith.constant dense<0.000000e+00> : vector<32x32xf32>
    %276 = tpu.matmul %17, %274, %cst_99 {dimension_numbers = #tpu.dot_dimension_numbers<[1], [0], [0], [1], [0, 0, 1, 1], [], []>} : vector<32x32xbf16>, vector<32x32xbf16>, vector<32x32xf32> -> vector<32x32xf32>
    %277 = tpu.concatenate %275, %276, %233 in 1 : vector<32x32xf32>, vector<32x32xf32>, vector<32x32xf32> -> vector<32x96xf32>
    %278 = arith.truncf %277 : vector<32x96xf32> to vector<32x96xbf16>
    %c0_100 = arith.constant 0 : index
    %c0_101 = arith.constant 0 : index
    %279 = vector.load %arg15[%c0_100, %c0_101] : memref<96x128xbf16, #tpu.memory_space<vmem>>, vector<96x128xbf16>
    %cst_102 = arith.constant dense<0.000000e+00> : vector<32x128xf32>
    %280 = tpu.matmul %278, %279, %cst_102 {dimension_numbers = #tpu.dot_dimension_numbers<[1], [0], [0], [1], [0, 0, 1, 1], [], []>} : vector<32x96xbf16>, vector<96x128xbf16>, vector<32x128xf32> -> vector<32x128xf32>
    %c0_103 = arith.constant 0 : index
    %c0_104 = arith.constant 0 : index
    %281 = vector.load %arg16[%c0_103, %c0_104] : memref<1x128xf32, #tpu.memory_space<vmem>>, vector<1x128xf32>
    %282 = vector.broadcast %281 : vector<1x128xf32> to vector<32x128xf32>
    %283 = arith.addf %280, %282 : vector<32x128xf32>
    %284 = arith.negf %283 : vector<32x128xf32>
    %285 = math.exp %284 : vector<32x128xf32>
    %cst_105 = arith.constant 1.000000e+00 : f32
    %286 = vector.broadcast %cst_105 : f32 to vector<32x128xf32>
    %287 = arith.addf %286, %285 : vector<32x128xf32>
    %288 = arith.divf %286, %287 : vector<32x128xf32>
    %289 = vector.extract_strided_slice %288 {offsets = [0, 0], sizes = [32, 1], strides = [1, 1]} : vector<32x128xf32> to vector<32x1xf32>
    %290 = vector.broadcast %289 : vector<32x1xf32> to vector<32x32xf32>
    %291 = arith.mulf %290, %275 : vector<32x32xf32>
    %292 = vector.extract_strided_slice %288 {offsets = [0, 1], sizes = [32, 1], strides = [1, 1]} : vector<32x128xf32> to vector<32x1xf32>
    %293 = vector.broadcast %292 : vector<32x1xf32> to vector<32x32xf32>
    %294 = arith.mulf %293, %276 : vector<32x32xf32>
    %295 = arith.addf %291, %294 : vector<32x32xf32>
    %296 = tpu.concatenate %295, %233 in 1 : vector<32x32xf32>, vector<32x32xf32> -> vector<32x64xf32>
    %297 = arith.truncf %296 : vector<32x64xf32> to vector<32x64xbf16>
    %c0_106 = arith.constant 0 : index
    %c0_107 = arith.constant 0 : index
    %298 = vector.load %arg13[%c0_106, %c0_107] : memref<64x128xbf16, #tpu.memory_space<vmem>>, vector<64x128xbf16>
    %cst_108 = arith.constant dense<0.000000e+00> : vector<32x128xf32>
    %299 = tpu.matmul %297, %298, %cst_108 {dimension_numbers = #tpu.dot_dimension_numbers<[1], [0], [0], [1], [0, 0, 1, 1], [], []>} : vector<32x64xbf16>, vector<64x128xbf16>, vector<32x128xf32> -> vector<32x128xf32>
    %c0_109 = arith.constant 0 : index
    %c0_110 = arith.constant 0 : index
    %300 = vector.load %arg14[%c0_109, %c0_110] : memref<1x128xf32, #tpu.memory_space<vmem>>, vector<1x128xf32>
    %301 = vector.broadcast %300 : vector<1x128xf32> to vector<32x128xf32>
    %302 = arith.addf %299, %301 : vector<32x128xf32>
    %303 = vector.extract_strided_slice %302 {offsets = [0, 0], sizes = [32, 32], strides = [1, 1]} : vector<32x128xf32> to vector<32x32xf32>
    %304 = arith.negf %303 : vector<32x32xf32>
    %305 = math.exp %304 : vector<32x32xf32>
    %cst_111 = arith.constant 1.000000e+00 : f32
    %306 = vector.broadcast %cst_111 : f32 to vector<32x32xf32>
    %307 = arith.addf %306, %305 : vector<32x32xf32>
    %308 = arith.divf %306, %307 : vector<32x32xf32>
    %309 = vector.extract_strided_slice %302 {offsets = [0, 32], sizes = [32, 32], strides = [1, 1]} : vector<32x128xf32> to vector<32x32xf32>
    %310 = arith.negf %309 : vector<32x32xf32>
    %311 = math.exp %310 : vector<32x32xf32>
    %cst_112 = arith.constant 1.000000e+00 : f32
    %312 = vector.broadcast %cst_112 : f32 to vector<32x32xf32>
    %313 = arith.addf %312, %311 : vector<32x32xf32>
    %314 = arith.divf %312, %313 : vector<32x32xf32>
    %315 = vector.extract_strided_slice %302 {offsets = [0, 64], sizes = [32, 32], strides = [1, 1]} : vector<32x128xf32> to vector<32x32xf32>
    %316 = vector.extract_strided_slice %302 {offsets = [0, 96], sizes = [32, 32], strides = [1, 1]} : vector<32x128xf32> to vector<32x32xf32>
    %317 = arith.mulf %308, %316 : vector<32x32xf32>
    %318 = arith.addf %315, %317 : vector<32x32xf32>
    %319 = math.tanh %318 : vector<32x32xf32>
    %cst_113 = arith.constant 1.000000e+00 : f32
    %320 = vector.broadcast %cst_113 : f32 to vector<32x32xf32>
    %321 = arith.subf %320, %314 : vector<32x32xf32>
    %322 = arith.mulf %321, %319 : vector<32x32xf32>
    %323 = arith.mulf %314, %233 : vector<32x32xf32>
    %324 = arith.addf %322, %323 : vector<32x32xf32>
    %325 = vector.extract_strided_slice %288 {offsets = [0, 2], sizes = [32, 1], strides = [1, 1]} : vector<32x128xf32> to vector<32x1xf32>
    %326 = vector.broadcast %325 : vector<32x1xf32> to vector<32x32xf32>
    %327 = arith.mulf %326, %233 : vector<32x32xf32>
    %328 = arith.truncf %327 : vector<32x32xf32> to vector<32x32xbf16>
    %329 = vector.extract_strided_slice %288 {offsets = [0, 3], sizes = [32, 1], strides = [1, 1]} : vector<32x128xf32> to vector<32x1xf32>
    %330 = vector.broadcast %329 : vector<32x1xf32> to vector<32x32xf32>
    %331 = arith.mulf %330, %233 : vector<32x32xf32>
    %332 = arith.truncf %331 : vector<32x32xf32> to vector<32x32xbf16>
    %cst_114 = arith.constant dense<0.000000e+00> : vector<32x32xf32>
    %333 = tpu.matmul %8, %328, %cst_114 {dimension_numbers = #tpu.dot_dimension_numbers<[0], [0], [1], [1], [0, 1, 1, 1], [], []>} : vector<32x32xbf16>, vector<32x32xbf16>, vector<32x32xf32> -> vector<32x32xf32>
    %cst_115 = arith.constant dense<0.000000e+00> : vector<32x32xf32>
    %334 = tpu.matmul %17, %332, %cst_115 {dimension_numbers = #tpu.dot_dimension_numbers<[0], [0], [1], [1], [0, 1, 1, 1], [], []>} : vector<32x32xbf16>, vector<32x32xbf16>, vector<32x32xf32> -> vector<32x32xf32>
    %335 = arith.addf %333, %334 : vector<32x32xf32>
    %336 = tpu.concatenate %335, %273 in 1 : vector<32x32xf32>, vector<32x32xf32> -> vector<32x64xf32>
    %337 = arith.truncf %336 : vector<32x64xf32> to vector<32x64xbf16>
    %c0_116 = arith.constant 0 : index
    %c0_117 = arith.constant 0 : index
    %338 = vector.load %arg11[%c0_116, %c0_117] : memref<64x128xbf16, #tpu.memory_space<vmem>>, vector<64x128xbf16>
    %cst_118 = arith.constant dense<0.000000e+00> : vector<32x128xf32>
    %339 = tpu.matmul %337, %338, %cst_118 {dimension_numbers = #tpu.dot_dimension_numbers<[1], [0], [0], [1], [0, 0, 1, 1], [], []>} : vector<32x64xbf16>, vector<64x128xbf16>, vector<32x128xf32> -> vector<32x128xf32>
    %c0_119 = arith.constant 0 : index
    %c0_120 = arith.constant 0 : index
    %340 = vector.load %arg12[%c0_119, %c0_120] : memref<1x128xf32, #tpu.memory_space<vmem>>, vector<1x128xf32>
    %341 = vector.broadcast %340 : vector<1x128xf32> to vector<32x128xf32>
    %342 = arith.addf %339, %341 : vector<32x128xf32>
    %343 = vector.extract_strided_slice %342 {offsets = [0, 0], sizes = [32, 32], strides = [1, 1]} : vector<32x128xf32> to vector<32x32xf32>
    %344 = arith.negf %343 : vector<32x32xf32>
    %345 = math.exp %344 : vector<32x32xf32>
    %cst_121 = arith.constant 1.000000e+00 : f32
    %346 = vector.broadcast %cst_121 : f32 to vector<32x32xf32>
    %347 = arith.addf %346, %345 : vector<32x32xf32>
    %348 = arith.divf %346, %347 : vector<32x32xf32>
    %349 = vector.extract_strided_slice %342 {offsets = [0, 32], sizes = [32, 32], strides = [1, 1]} : vector<32x128xf32> to vector<32x32xf32>
    %350 = arith.negf %349 : vector<32x32xf32>
    %351 = math.exp %350 : vector<32x32xf32>
    %cst_122 = arith.constant 1.000000e+00 : f32
    %352 = vector.broadcast %cst_122 : f32 to vector<32x32xf32>
    %353 = arith.addf %352, %351 : vector<32x32xf32>
    %354 = arith.divf %352, %353 : vector<32x32xf32>
    %355 = vector.extract_strided_slice %342 {offsets = [0, 64], sizes = [32, 32], strides = [1, 1]} : vector<32x128xf32> to vector<32x32xf32>
    %356 = vector.extract_strided_slice %342 {offsets = [0, 96], sizes = [32, 32], strides = [1, 1]} : vector<32x128xf32> to vector<32x32xf32>
    %357 = arith.mulf %348, %356 : vector<32x32xf32>
    %358 = arith.addf %355, %357 : vector<32x32xf32>
    %359 = math.tanh %358 : vector<32x32xf32>
    %cst_123 = arith.constant 1.000000e+00 : f32
    %360 = vector.broadcast %cst_123 : f32 to vector<32x32xf32>
    %361 = arith.subf %360, %354 : vector<32x32xf32>
    %362 = arith.mulf %361, %359 : vector<32x32xf32>
    %363 = arith.mulf %354, %273 : vector<32x32xf32>
    %364 = arith.addf %362, %363 : vector<32x32xf32>
    %365 = arith.truncf %364 : vector<32x32xf32> to vector<32x32xbf16>
    %c0_124 = arith.constant 0 : index
    %c0_125 = arith.constant 0 : index
    %366 = vector.load %arg17[%c0_124, %c0_125] : memref<32x128xbf16, #tpu.memory_space<vmem>>, vector<32x128xbf16>
    %cst_126 = arith.constant dense<0.000000e+00> : vector<32x128xf32>
    %367 = tpu.matmul %365, %366, %cst_126 {dimension_numbers = #tpu.dot_dimension_numbers<[1], [0], [0], [1], [0, 0, 1, 1], [], []>} : vector<32x32xbf16>, vector<32x128xbf16>, vector<32x128xf32> -> vector<32x128xf32>
    %c0_127 = arith.constant 0 : index
    %c0_128 = arith.constant 0 : index
    %368 = vector.load %arg18[%c0_127, %c0_128] : memref<1x128xf32, #tpu.memory_space<vmem>>, vector<1x128xf32>
    %369 = vector.broadcast %368 : vector<1x128xf32> to vector<32x128xf32>
    %370 = arith.addf %367, %369 : vector<32x128xf32>
    %c0_129 = arith.constant 0 : index
    %c0_130 = arith.constant 0 : index
    %c0_131 = arith.constant 0 : index
    %371 = vector.load %arg21[%c0_129, %c0_130, %c0_131] : memref<1x32x128xf32, #tpu.memory_space<vmem>>, vector<1x32x128xf32>
    %372 = vector.shape_cast %371 : vector<1x32x128xf32> to vector<32x128xf32>
    %373 = vector.shape_cast %370 : vector<32x128xf32> to vector<1x32x128xf32>
    tpu.vector_store %arg21[%c0_129, %c0_130, %c0_131], %373 {strides = array<i32>} : memref<1x32x128xf32, #tpu.memory_space<vmem>>, vector<1x32x128xf32>,
    %374 = arith.truncf %324 : vector<32x32xf32> to vector<32x32xbf16>
    %c0_132 = arith.constant 0 : index
    %c0_133 = arith.constant 0 : index
    %375 = vector.load %arg19[%c0_132, %c0_133] : memref<32x128xbf16, #tpu.memory_space<vmem>>, vector<32x128xbf16>
    %cst_134 = arith.constant dense<0.000000e+00> : vector<32x128xf32>
    %376 = tpu.matmul %374, %375, %cst_134 {dimension_numbers = #tpu.dot_dimension_numbers<[1], [0], [0], [1], [0, 0, 1, 1], [], []>} : vector<32x32xbf16>, vector<32x128xbf16>, vector<32x128xf32> -> vector<32x128xf32>
    %c0_135 = arith.constant 0 : index
    %c0_136 = arith.constant 0 : index
    %377 = vector.load %arg20[%c0_135, %c0_136] : memref<1x128xf32, #tpu.memory_space<vmem>>, vector<1x128xf32>
    %378 = vector.broadcast %377 : vector<1x128xf32> to vector<32x128xf32>
    %379 = arith.addf %376, %378 : vector<32x128xf32>
    %c0_137 = arith.constant 0 : index
    %c0_138 = arith.constant 0 : index
    %c0_139 = arith.constant 0 : index
    %380 = vector.load %arg22[%c0_137, %c0_138, %c0_139] : memref<1x32x128xf32, #tpu.memory_space<vmem>>, vector<1x32x128xf32>
    %381 = vector.shape_cast %380 : vector<1x32x128xf32> to vector<32x128xf32>
    %382 = vector.shape_cast %379 : vector<32x128xf32> to vector<1x32x128xf32>
    tpu.vector_store %arg22[%c0_137, %c0_138, %c0_139], %382 {strides = array<i32>} : memref<1x32x128xf32, #tpu.memory_space<vmem>>, vector<1x32x128xf32>,
    return
  }
  func.func @transform_0(%arg0: i32) -> (i32, i32, i32) {
    %c0_i32 = arith.constant 0 : i32
    %c0_i32_0 = arith.constant 0 : i32
    %c0_i32_1 = arith.constant 0 : i32
    return %arg0, %c0_i32, %c0_i32_0 : i32, i32, i32
  }
  func.func @transform_1(%arg0: i32) -> (i32, i32, i32) {
    %c0_i32 = arith.constant 0 : i32
    %c0_i32_0 = arith.constant 0 : i32
    %c0_i32_1 = arith.constant 0 : i32
    return %arg0, %c0_i32, %c0_i32_0 : i32, i32, i32
  }
  func.func @transform_2(%arg0: i32) -> (i32, i32, i32) {
    %c0_i32 = arith.constant 0 : i32
    %c0_i32_0 = arith.constant 0 : i32
    %c0_i32_1 = arith.constant 0 : i32
    return %arg0, %c0_i32, %c0_i32_0 : i32, i32, i32
  }
  func.func @transform_3(%arg0: i32) -> (i32, i32, i32) {
    %c0_i32 = arith.constant 0 : i32
    %c0_i32_0 = arith.constant 0 : i32
    %c0_i32_1 = arith.constant 0 : i32
    return %arg0, %c0_i32, %c0_i32_0 : i32, i32, i32
  }
  func.func @transform_4(%arg0: i32) -> (i32, i32) {
    %c0_i32 = arith.constant 0 : i32
    %c0_i32_0 = arith.constant 0 : i32
    %c0_i32_1 = arith.constant 0 : i32
    return %c0_i32, %c0_i32_0 : i32, i32
  }
  func.func @transform_5(%arg0: i32) -> (i32, i32) {
    %c0_i32 = arith.constant 0 : i32
    %c0_i32_0 = arith.constant 0 : i32
    %c0_i32_1 = arith.constant 0 : i32
    return %c0_i32, %c0_i32_0 : i32, i32
  }
  func.func @transform_6(%arg0: i32) -> (i32, i32) {
    %c0_i32 = arith.constant 0 : i32
    %c0_i32_0 = arith.constant 0 : i32
    %c0_i32_1 = arith.constant 0 : i32
    return %c0_i32, %c0_i32_0 : i32, i32
  }
  func.func @transform_7(%arg0: i32) -> (i32, i32) {
    %c0_i32 = arith.constant 0 : i32
    %c0_i32_0 = arith.constant 0 : i32
    %c0_i32_1 = arith.constant 0 : i32
    return %c0_i32, %c0_i32_0 : i32, i32
  }
  func.func @transform_8(%arg0: i32) -> (i32, i32) {
    %c0_i32 = arith.constant 0 : i32
    %c0_i32_0 = arith.constant 0 : i32
    %c0_i32_1 = arith.constant 0 : i32
    return %c0_i32, %c0_i32_0 : i32, i32
  }
  func.func @transform_9(%arg0: i32) -> (i32, i32) {
    %c0_i32 = arith.constant 0 : i32
    %c0_i32_0 = arith.constant 0 : i32
    %c0_i32_1 = arith.constant 0 : i32
    return %c0_i32, %c0_i32_0 : i32, i32
  }
  func.func @transform_10(%arg0: i32) -> (i32, i32) {
    %c0_i32 = arith.constant 0 : i32
    %c0_i32_0 = arith.constant 0 : i32
    %c0_i32_1 = arith.constant 0 : i32
    return %c0_i32, %c0_i32_0 : i32, i32
  }
  func.func @transform_11(%arg0: i32) -> (i32, i32) {
    %c0_i32 = arith.constant 0 : i32
    %c0_i32_0 = arith.constant 0 : i32
    %c0_i32_1 = arith.constant 0 : i32
    return %c0_i32, %c0_i32_0 : i32, i32
  }
  func.func @transform_12(%arg0: i32) -> (i32, i32) {
    %c0_i32 = arith.constant 0 : i32
    %c0_i32_0 = arith.constant 0 : i32
    %c0_i32_1 = arith.constant 0 : i32
    return %c0_i32, %c0_i32_0 : i32, i32
  }
  func.func @transform_13(%arg0: i32) -> (i32, i32) {
    %c0_i32 = arith.constant 0 : i32
    %c0_i32_0 = arith.constant 0 : i32
    %c0_i32_1 = arith.constant 0 : i32
    return %c0_i32, %c0_i32_0 : i32, i32
  }
  func.func @transform_14(%arg0: i32) -> (i32, i32) {
    %c0_i32 = arith.constant 0 : i32
    %c0_i32_0 = arith.constant 0 : i32
    %c0_i32_1 = arith.constant 0 : i32
    return %c0_i32, %c0_i32_0 : i32, i32
  }
  func.func @transform_15(%arg0: i32) -> (i32, i32) {
    %c0_i32 = arith.constant 0 : i32
    %c0_i32_0 = arith.constant 0 : i32
    %c0_i32_1 = arith.constant 0 : i32
    return %c0_i32, %c0_i32_0 : i32, i32
  }
  func.func @transform_16(%arg0: i32) -> (i32, i32) {
    %c0_i32 = arith.constant 0 : i32
    %c0_i32_0 = arith.constant 0 : i32
    %c0_i32_1 = arith.constant 0 : i32
    return %c0_i32, %c0_i32_0 : i32, i32
  }
  func.func @transform_17(%arg0: i32) -> (i32, i32) {
    %c0_i32 = arith.constant 0 : i32
    %c0_i32_0 = arith.constant 0 : i32
    %c0_i32_1 = arith.constant 0 : i32
    return %c0_i32, %c0_i32_0 : i32, i32
  }
  func.func @transform_18(%arg0: i32) -> (i32, i32) {
    %c0_i32 = arith.constant 0 : i32
    %c0_i32_0 = arith.constant 0 : i32
    %c0_i32_1 = arith.constant 0 : i32
    return %c0_i32, %c0_i32_0 : i32, i32
  }
  func.func @transform_19(%arg0: i32) -> (i32, i32) {
    %c0_i32 = arith.constant 0 : i32
    %c0_i32_0 = arith.constant 0 : i32
    %c0_i32_1 = arith.constant 0 : i32
    return %c0_i32, %c0_i32_0 : i32, i32
  }
  func.func @transform_20(%arg0: i32) -> (i32, i32, i32) {
    %c0_i32 = arith.constant 0 : i32
    %c0_i32_0 = arith.constant 0 : i32
    %c0_i32_1 = arith.constant 0 : i32
    return %arg0, %c0_i32, %c0_i32_0 : i32, i32, i32
  }
  func.func @transform_21(%arg0: i32) -> (i32, i32, i32) {
    %c0_i32 = arith.constant 0 : i32
    %c0_i32_0 = arith.constant 0 : i32
    %c0_i32_1 = arith.constant 0 : i32
    return %arg0, %c0_i32, %c0_i32_0 : i32, i32, i32
  }
}

</mosaic_0001>

<llo_original>
// kernel: tpu_custom_call.1
$region0: #{tpu_custom_call.1}
  #allocation0 [shape = 'u32[]', space=smem, size = 0x4, offset = 0x4, fixed_abs, tag = 'smem constant byte address 0x4 - core index']
  #allocation1 [shape = 'u32[144,128]{1,0:T(1,128)}', space=vmem, size = 0x12000, scoped, tag = 'internal scratch']
  %s0 = inlined_call_operand.vmem [shape: bf16[2,32,64], index: 0, kind: input, shape index: {}]
  %s1 = inlined_call_operand.vmem [shape: bf16[2,32,32], index: 1, kind: input, shape index: {}]
  %s2 = inlined_call_operand.vmem [shape: s32[2,32,1], index: 2, kind: input, shape index: {}]
  %s3 = inlined_call_operand.vmem [shape: s32[2,32,1], index: 3, kind: input, shape index: {}]
  %s4 = inlined_call_operand.vmem [shape: bf16[32,64], index: 4, kind: input, shape index: {}]
  %s5 = inlined_call_operand.vmem [shape: f32[1,64], index: 5, kind: input, shape index: {}]
  %s6 = inlined_call_operand.vmem [shape: bf16[64,32], index: 6, kind: input, shape index: {}]
  %s7 = inlined_call_operand.vmem [shape: f32[1,32], index: 7, kind: input, shape index: {}]
  %s8 = inlined_call_operand.vmem [shape: bf16[64,32], index: 8, kind: input, shape index: {}]
  %s9 = inlined_call_operand.hbm [shape: f32[1,32], index: 9, kind: input, shape index: {}]
  %s10 = inlined_call_operand.vmem [shape: bf16[64,128], index: 10, kind: input, shape index: {}]
  %s11 = inlined_call_operand.vmem [shape: f32[1,128], index: 11, kind: input, shape index: {}]
  %s12 = inlined_call_operand.vmem [shape: bf16[64,128], index: 12, kind: input, shape index: {}]
  %s13 = inlined_call_operand.vmem [shape: f32[1,128], index: 13, kind: input, shape index: {}]
  %s14 = inlined_call_operand.vmem [shape: bf16[96,128], index: 14, kind: input, shape index: {}]
  %s15 = inlined_call_operand.vmem [shape: f32[1,128], index: 15, kind: input, shape index: {}]
  %s16 = inlined_call_operand.vmem [shape: bf16[32,128], index: 16, kind: input, shape index: {}]
  %s17 = inlined_call_operand.vmem [shape: f32[1,128], index: 17, kind: input, shape index: {}]
  %s18 = inlined_call_operand.vmem [shape: bf16[32,128], index: 18, kind: input, shape index: {}]
  %s19 = inlined_call_operand.vmem [shape: f32[1,128], index: 19, kind: input, shape index: {}]
  %s20 = inlined_call_operand.hbm [shape: f32[2,32,128], index: 20, kind: output, shape index: {0}]
  %s21 = inlined_call_operand.hbm [shape: f32[2,32,128], index: 21, kind: output, shape index: {1}]
  %22 = xla_tuple %s20, %s21
  %s23 = sld [smem:[#allocation0]]
  $region125: #{tpu_custom_call.1} parent=0
    _
  %s25 = ssub.s32 1, %s23
  %s26 = scalar_select 0, %s25, %s23
  $region1: #{tpu_custom_call.1} parent=0
    #allocation2 [shape = 'u8[512]{0}', space=vmem, size = 0x400, scoped, tag = 'input window, operand 9, single buffered']
    #allocation3 [shape = 's32[2]{0}', space=sflag, size = 0x8, scoped, tag = 'scoped memory for tpu_custom_call.1']
    #allocation4 [shape = 's32[2]{0}', space=sflag, size = 0x8, scoped, tag = 'scoped memory for tpu_custom_call.1']
    #allocation5 [shape = 'u8[32768]{0}', space=vmem, size = 0x8000, scoped, tag = 'output window, operand 0']
    #allocation6 [shape = 'u8[32768]{0}', space=vmem, size = 0x8000, scoped, tag = 'output window, operand 1']
    #allocation7 [shape = 's32[2]{0}', space=sflag, size = 0x8, scoped, tag = 'scoped memory for tpu_custom_call.1']
    %27 = vsyncpa [#allocation3], 0
    %28 = vsyncpa [#allocation4], 0
    %s29 = scalar_lea.sflag [#allocation4], 1
    %30 = vsyncpa %s29, 0
    %31 = vsyncpa [#allocation7], 0
    %s32 = scalar_lea.sflag [#allocation7], 1
    %33 = vsyncpa %s32, 0
    loop: start=0, step=1, limit=4
    $region2: #{tpu_custom_call.1} parent=1 // loop_pre_header
      _
    $region3: #{tpu_custom_call.1} parent=1 // loop_header
      %s35 = sphi 0, %s39
      %p36 = scmp.ge.s32.totalorder %s35, 4
      %s45 = sphi 0, %s47
      %s48 = sphi 0, %s45
      %s49 = sphi 0, %s48
      %s65 = sphi 0, %s49
      %s71 = sphi 0, %s73
      %s74 = sphi 0, %s71
      %s75 = sphi 0, %s74
      %s91 = sphi 0, %s75
      %s97 = sphi 0, %s99
      %s100 = sphi 0, %s97
      %s101 = sphi 0, %s100
      %s117 = sphi 0, %s101
      %s123 = sphi 0, %s125
      %s126 = sphi 0, %s123
      %s127 = sphi 0, %s126
      %s143 = sphi 0, %s127
      %s147 = sphi 0, %s147
      %s149 = sphi 0, %s147
      %s150 = sphi 0, %s149
      %s164 = sphi 0, %s150
      %s168 = sphi 0, %s168
      %s170 = sphi 0, %s168
      %s171 = sphi 0, %s170
      %s185 = sphi 0, %s171
      %s189 = sphi 0, %s189
      %s191 = sphi 0, %s189
      %s192 = sphi 0, %s191
      %s206 = sphi 0, %s192
      %s210 = sphi 0, %s210
      %s212 = sphi 0, %s210
      %s213 = sphi 0, %s212
      %s227 = sphi 0, %s213
      %s231 = sphi 0, %s231
      %s233 = sphi 0, %s231
      %s234 = sphi 0, %s233
      %s248 = sphi 0, %s234
      %s252 = sphi 0, %s252
      %s254 = sphi 0, %s252
      %s255 = sphi 0, %s254
      %s269 = sphi 0, %s255
      %s273 = sphi 0, %s273
      %s275 = sphi 0, %s273
      %s276 = sphi 0, %s275
      %s290 = sphi 0, %s276
      %s294 = sphi 0, %s294
      %s296 = sphi 0, %s294
      %s297 = sphi 0, %s296
      %s311 = sphi 0, %s297
      %s315 = sphi 0, %s315
      %s317 = sphi 0, %s315
      %s318 = sphi 0, %s317
      %s332 = sphi 0, %s318
      %s336 = sphi 0, %s336
      %s338 = sphi 0, %s336
      %s339 = sphi 0, %s338
      %s353 = sphi 0, %s339
      %s357 = sphi 0, %s357
      %s359 = sphi 0, %s357
      %s360 = sphi 0, %s359
      %s374 = sphi 0, %s360
      %s378 = sphi 0, %s378
      %s380 = sphi 0, %s378
      %s381 = sphi 0, %s380
      %s395 = sphi 0, %s381
      %s399 = sphi 0, %s399
      %s401 = sphi 0, %s399
      %s402 = sphi 0, %s401
      %s416 = sphi 0, %s402
      %s420 = sphi 0, %s420
      %s422 = sphi 0, %s420
      %s423 = sphi 0, %s422
      %s437 = sphi 0, %s423
      %s441 = sphi 0, %s441
      %s443 = sphi 0, %s441
      %s444 = sphi 0, %s443
      %s458 = sphi 0, %s444
      %s462 = sphi 0, %s462
      %s464 = sphi 0, %s462
      %s465 = sphi 0, %s464
      %s479 = sphi 0, %s465
      %s485 = sphi 0, %s487
      %s488 = sphi 0, %s485
      %s489 = sphi 0, %s488
      %s505 = sphi 0, %s489
      %s511 = sphi 0, %s513
      %s514 = sphi 0, %s511
      %s515 = sphi 0, %s514
      %s531 = sphi 0, %s515
    $region4: #{tpu_custom_call.1} parent=1 // loop_header_branch
      %38 = sbr.rel (%p36) target = $region8
    $region5: #{tpu_custom_call.1} parent=1 // loop_body
      %s40 = ssub.s32 %s35, 1
      %s41 = ssub.s32 %s35, 2
      %s42 = sadd.s32 %s35, 1
      %s43 = ssub.s32 %s35, %s42
      %p44 = scmp.eq.s32.totalorder %s43, 0
      %s46 = sadd.s32 %s45, 1
      %s47 = scalar_select %p44, %s45, %s46
      %p50 = pneg %p44
      %p51 = scmp.eq.s32.totalorder %s35, 1
      %p52 = por %p50, %p51
      %p53 = scmp.ne.s32.totalorder %s45, %s48
      %p54 = scmp.eq.s32.totalorder %s35, 0
      %p55 = por %p53, %p54
      %p56 = scmp.ne.s32.totalorder %s45, %s48
      %p57 = scmp.eq.s32.totalorder %s40, 1
      %p58 = por %p56, %p57
      %p59 = scmp.ne.s32.totalorder %s48, %s49
      %p60 = scmp.eq.s32.totalorder %s40, 0
      %p61 = por %p59, %p60
      %p62 = scmp.ne.s32.totalorder %s48, %s49
      %p63 = scmp.eq.s32.totalorder %s41, 1
      %p64 = por %p62, %p63
      %p66 = scmp.ne.s32.totalorder %s49, %s65
      %p67 = scmp.eq.s32.totalorder %s41, 0
      %p68 = por %p66, %p67
      %s69 = ssub.s32 %s35, %s42
      %p70 = scmp.eq.s32.totalorder %s69, 0
      %s72 = sadd.s32 %s71, 1
      %s73 = scalar_select %p70, %s71, %s72
      %p76 = pneg %p70
      %p77 = scmp.eq.s32.totalorder %s35, 1
      %p78 = por %p76, %p77
      %p79 = scmp.ne.s32.totalorder %s71, %s74
      %p80 = scmp.eq.s32.totalorder %s35, 0
      %p81 = por %p79, %p80
      %p82 = scmp.ne.s32.totalorder %s71, %s74
      %p83 = scmp.eq.s32.totalorder %s40, 1
      %p84 = por %p82, %p83
      %p85 = scmp.ne.s32.totalorder %s74, %s75
      %p86 = scmp.eq.s32.totalorder %s40, 0
      %p87 = por %p85, %p86
      %p88 = scmp.ne.s32.totalorder %s74, %s75
      %p89 = scmp.eq.s32.totalorder %s41, 1
      %p90 = por %p88, %p89
      %p92 = scmp.ne.s32.totalorder %s75, %s91
      %p93 = scmp.eq.s32.totalorder %s41, 0
      %p94 = por %p92, %p93
      %s95 = ssub.s32 %s35, %s42
      %p96 = scmp.eq.s32.totalorder %s95, 0
      %s98 = sadd.s32 %s97, 1
      %s99 = scalar_select %p96, %s97, %s98
      %p102 = pneg %p96
      %p103 = scmp.eq.s32.totalorder %s35, 1
      %p104 = por %p102, %p103
      %p105 = scmp.ne.s32.totalorder %s97, %s100
      %p106 = scmp.eq.s32.totalorder %s35, 0
      %p107 = por %p105, %p106
      %p108 = scmp.ne.s32.totalorder %s97, %s100
      %p109 = scmp.eq.s32.totalorder %s40, 1
      %p110 = por %p108, %p109
      %p111 = scmp.ne.s32.totalorder %s100, %s101
      %p112 = scmp.eq.s32.totalorder %s40, 0
      %p113 = por %p111, %p112
      %p114 = scmp.ne.s32.totalorder %s100, %s101
      %p115 = scmp.eq.s32.totalorder %s41, 1
      %p116 = por %p114, %p115
      %p118 = scmp.ne.s32.totalorder %s101, %s117
      %p119 = scmp.eq.s32.totalorder %s41, 0
      %p120 = por %p118, %p119
      %s121 = ssub.s32 %s35, %s42
      %p122 = scmp.eq.s32.totalorder %s121, 0
      %s124 = sadd.s32 %s123, 1
      %s125 = scalar_select %p122, %s123, %s124
      %p128 = pneg %p122
      %p129 = scmp.eq.s32.totalorder %s35, 1
      %p130 = por %p128, %p129
      %p131 = scmp.ne.s32.totalorder %s123, %s126
      %p132 = scmp.eq.s32.totalorder %s35, 0
      %p133 = por %p131, %p132
      %p134 = scmp.ne.s32.totalorder %s123, %s126
      %p135 = scmp.eq.s32.totalorder %s40, 1
      %p136 = por %p134, %p135
      %p137 = scmp.ne.s32.totalorder %s126, %s127
      %p138 = scmp.eq.s32.totalorder %s40, 0
      %p139 = por %p137, %p138
      %p140 = scmp.ne.s32.totalorder %s126, %s127
      %p141 = scmp.eq.s32.totalorder %s41, 1
      %p142 = por %p140, %p141
      %p144 = scmp.ne.s32.totalorder %s127, %s143
      %p145 = scmp.eq.s32.totalorder %s41, 0
      %p146 = por %p144, %p145
      %s148 = sadd.s32 %s147, 1
      %p151 = scmp.eq.s32.totalorder %s35, 1
      %p152 = scmp.ne.s32.totalorder %s147, %s149
      %p153 = scmp.eq.s32.totalorder %s35, 0
      %p154 = por %p152, %p153
      %p155 = scmp.ne.s32.totalorder %s147, %s149
      %p156 = scmp.eq.s32.totalorder %s40, 1
      %p157 = por %p155, %p156
      %p158 = scmp.ne.s32.totalorder %s149, %s150
      %p159 = scmp.eq.s32.totalorder %s40, 0
      %p160 = por %p158, %p159
      %p161 = scmp.ne.s32.totalorder %s149, %s150
      %p162 = scmp.eq.s32.totalorder %s41, 1
      %p163 = por %p161, %p162
      %p165 = scmp.ne.s32.totalorder %s150, %s164
      %p166 = scmp.eq.s32.totalorder %s41, 0
      %p167 = por %p165, %p166
      %s169 = sadd.s32 %s168, 1
      %p172 = scmp.eq.s32.totalorder %s35, 1
      %p173 = scmp.ne.s32.totalorder %s168, %s170
      %p174 = scmp.eq.s32.totalorder %s35, 0
      %p175 = por %p173, %p174
      %p176 = scmp.ne.s32.totalorder %s168, %s170
      %p177 = scmp.eq.s32.totalorder %s40, 1
      %p178 = por %p176, %p177
      %p179 = scmp.ne.s32.totalorder %s170, %s171
      %p180 = scmp.eq.s32.totalorder %s40, 0
      %p181 = por %p179, %p180
      %p182 = scmp.ne.s32.totalorder %s170, %s171
      %p183 = scmp.eq.s32.totalorder %s41, 1
      %p184 = por %p182, %p183
      %p186 = scmp.ne.s32.totalorder %s171, %s185
      %p187 = scmp.eq.s32.totalorder %s41, 0
      %p188 = por %p186, %p187
      %s190 = sadd.s32 %s189, 1
      %p193 = scmp.eq.s32.totalorder %s35, 1
      %p194 = scmp.ne.s32.totalorder %s189, %s191
      %p195 = scmp.eq.s32.totalorder %s35, 0
      %p196 = por %p194, %p195
      %p197 = scmp.ne.s32.totalorder %s189, %s191
      %p198 = scmp.eq.s32.totalorder %s40, 1
      %p199 = por %p197, %p198
      %p200 = scmp.ne.s32.totalorder %s191, %s192
      %p201 = scmp.eq.s32.totalorder %s40, 0
      %p202 = por %p200, %p201
      %p203 = scmp.ne.s32.totalorder %s191, %s192
      %p204 = scmp.eq.s32.totalorder %s41, 1
      %p205 = por %p203, %p204
      %p207 = scmp.ne.s32.totalorder %s192, %s206
      %p208 = scmp.eq.s32.totalorder %s41, 0
      %p209 = por %p207, %p208
      %s211 = sadd.s32 %s210, 1
      %p214 = scmp.eq.s32.totalorder %s35, 1
      %p215 = scmp.ne.s32.totalorder %s210, %s212
      %p216 = scmp.eq.s32.totalorder %s35, 0
      %p217 = por %p215, %p216
      %p218 = scmp.ne.s32.totalorder %s210, %s212
      %p219 = scmp.eq.s32.totalorder %s40, 1
      %p220 = por %p218, %p219
      %p221 = scmp.ne.s32.totalorder %s212, %s213
      %p222 = scmp.eq.s32.totalorder %s40, 0
      %p223 = por %p221, %p222
      %p224 = scmp.ne.s32.totalorder %s212, %s213
      %p225 = scmp.eq.s32.totalorder %s41, 1
      %p226 = por %p224, %p225
      %p228 = scmp.ne.s32.totalorder %s213, %s227
      %p229 = scmp.eq.s32.totalorder %s41, 0
      %p230 = por %p228, %p229
      %s232 = sadd.s32 %s231, 1
      %p235 = scmp.eq.s32.totalorder %s35, 1
      %p236 = scmp.ne.s32.totalorder %s231, %s233
      %p237 = scmp.eq.s32.totalorder %s35, 0
      %p238 = por %p236, %p237
      %p239 = scmp.ne.s32.totalorder %s231, %s233
      %p240 = scmp.eq.s32.totalorder %s40, 1
      %p241 = por %p239, %p240
      %p242 = scmp.ne.s32.totalorder %s233, %s234
      %p243 = scmp.eq.s32.totalorder %s40, 0
      %p244 = por %p242, %p243
      %p245 = scmp.ne.s32.totalorder %s233, %s234
      %p246 = scmp.eq.s32.totalorder %s41, 1
      %p247 = por %p245, %p246
      %p249 = scmp.ne.s32.totalorder %s234, %s248
      %p250 = scmp.eq.s32.totalorder %s41, 0
      %p251 = por %p249, %p250
      %s253 = sadd.s32 %s252, 1
      %p256 = scmp.eq.s32.totalorder %s35, 1
      %p257 = scmp.ne.s32.totalorder %s252, %s254
      %p258 = scmp.eq.s32.totalorder %s35, 0
      %p259 = por %p257, %p258
      %p260 = scmp.ne.s32.totalorder %s252, %s254
      %p261 = scmp.eq.s32.totalorder %s40, 1
      %p262 = por %p260, %p261
      %p263 = scmp.ne.s32.totalorder %s254, %s255
      %p264 = scmp.eq.s32.totalorder %s40, 0
      %p265 = por %p263, %p264
      %p266 = scmp.ne.s32.totalorder %s254, %s255
      %p267 = scmp.eq.s32.totalorder %s41, 1
      %p268 = por %p266, %p267
      %p270 = scmp.ne.s32.totalorder %s255, %s269
      %p271 = scmp.eq.s32.totalorder %s41, 0
      %p272 = por %p270, %p271
      %s274 = sadd.s32 %s273, 1
      %p277 = scmp.eq.s32.totalorder %s35, 1
      %p278 = scmp.ne.s32.totalorder %s273, %s275
      %p279 = scmp.eq.s32.totalorder %s35, 0
      %p280 = por %p278, %p279
      %p281 = scmp.ne.s32.totalorder %s273, %s275
      %p282 = scmp.eq.s32.totalorder %s40, 1
      %p283 = por %p281, %p282
      %p284 = scmp.ne.s32.totalorder %s275, %s276
      %p285 = scmp.eq.s32.totalorder %s40, 0
      %p286 = por %p284, %p285
      %p287 = scmp.ne.s32.totalorder %s275, %s276
      %p288 = scmp.eq.s32.totalorder %s41, 1
      %p289 = por %p287, %p288
      %p291 = scmp.ne.s32.totalorder %s276, %s290
      %p292 = scmp.eq.s32.totalorder %s41, 0
      %p293 = por %p291, %p292
      %s295 = sadd.s32 %s294, 1
      %p298 = scmp.eq.s32.totalorder %s35, 1
      %p299 = scmp.ne.s32.totalorder %s294, %s296
      %p300 = scmp.eq.s32.totalorder %s35, 0
      %p301 = por %p299, %p300
      %p302 = scmp.ne.s32.totalorder %s294, %s296
      %p303 = scmp.eq.s32.totalorder %s40, 1
      %p304 = por %p302, %p303
      %p305 = scmp.ne.s32.totalorder %s296, %s297
      %p306 = scmp.eq.s32.totalorder %s40, 0
      %p307 = por %p305, %p306
      %p308 = scmp.ne.s32.totalorder %s296, %s297
      %p309 = scmp.eq.s32.totalorder %s41, 1
      %p310 = por %p308, %p309
      %p312 = scmp.ne.s32.totalorder %s297, %s311
      %p313 = scmp.eq.s32.totalorder %s41, 0
      %p314 = por %p312, %p313
      %s316 = sadd.s32 %s315, 1
      %p319 = scmp.eq.s32.totalorder %s35, 1
      %p320 = scmp.ne.s32.totalorder %s315, %s317
      %p321 = scmp.eq.s32.totalorder %s35, 0
      %p322 = por %p320, %p321
      %p323 = scmp.ne.s32.totalorder %s315, %s317
      %p324 = scmp.eq.s32.totalorder %s40, 1
      %p325 = por %p323, %p324
      %p326 = scmp.ne.s32.totalorder %s317, %s318
      %p327 = scmp.eq.s32.totalorder %s40, 0
      %p328 = por %p326, %p327
      %p329 = scmp.ne.s32.totalorder %s317, %s318
      %p330 = scmp.eq.s32.totalorder %s41, 1
      %p331 = por %p329, %p330
      %p333 = scmp.ne.s32.totalorder %s318, %s332
      %p334 = scmp.eq.s32.totalorder %s41, 0
      %p335 = por %p333, %p334
      %s337 = sadd.s32 %s336, 1
      %p340 = scmp.eq.s32.totalorder %s35, 1
      %p341 = scmp.ne.s32.totalorder %s336, %s338
      %p342 = scmp.eq.s32.totalorder %s35, 0
      %p343 = por %p341, %p342
      %p344 = scmp.ne.s32.totalorder %s336, %s338
      %p345 = scmp.eq.s32.totalorder %s40, 1
      %p346 = por %p344, %p345
      %p347 = scmp.ne.s32.totalorder %s338, %s339
      %p348 = scmp.eq.s32.totalorder %s40, 0
      %p349 = por %p347, %p348
      %p350 = scmp.ne.s32.totalorder %s338, %s339
      %p351 = scmp.eq.s32.totalorder %s41, 1
      %p352 = por %p350, %p351
      %p354 = scmp.ne.s32.totalorder %s339, %s353
      %p355 = scmp.eq.s32.totalorder %s41, 0
      %p356 = por %p354, %p355
      %s358 = sadd.s32 %s357, 1
      %p361 = scmp.eq.s32.totalorder %s35, 1
      %p362 = scmp.ne.s32.totalorder %s357, %s359
      %p363 = scmp.eq.s32.totalorder %s35, 0
      %p364 = por %p362, %p363
      %p365 = scmp.ne.s32.totalorder %s357, %s359
      %p366 = scmp.eq.s32.totalorder %s40, 1
      %p367 = por %p365, %p366
      %p368 = scmp.ne.s32.totalorder %s359, %s360
      %p369 = scmp.eq.s32.totalorder %s40, 0
      %p370 = por %p368, %p369
      %p371 = scmp.ne.s32.totalorder %s359, %s360
      %p372 = scmp.eq.s32.totalorder %s41, 1
      %p373 = por %p371, %p372
      %p375 = scmp.ne.s32.totalorder %s360, %s374
      %p376 = scmp.eq.s32.totalorder %s41, 0
      %p377 = por %p375, %p376
      %s379 = sadd.s32 %s378, 1
      %p382 = scmp.eq.s32.totalorder %s35, 1
      %p383 = scmp.ne.s32.totalorder %s378, %s380
      %p384 = scmp.eq.s32.totalorder %s35, 0
      %p385 = por %p383, %p384
      %p386 = scmp.ne.s32.totalorder %s378, %s380
      %p387 = scmp.eq.s32.totalorder %s40, 1
      %p388 = por %p386, %p387
      %p389 = scmp.ne.s32.totalorder %s380, %s381
      %p390 = scmp.eq.s32.totalorder %s40, 0
      %p391 = por %p389, %p390
      %p392 = scmp.ne.s32.totalorder %s380, %s381
      %p393 = scmp.eq.s32.totalorder %s41, 1
      %p394 = por %p392, %p393
      %p396 = scmp.ne.s32.totalorder %s381, %s395
      %p397 = scmp.eq.s32.totalorder %s41, 0
      %p398 = por %p396, %p397
      %s400 = sadd.s32 %s399, 1
      %p403 = scmp.eq.s32.totalorder %s35, 1
      %p404 = scmp.ne.s32.totalorder %s399, %s401
      %p405 = scmp.eq.s32.totalorder %s35, 0
      %p406 = por %p404, %p405
      %p407 = scmp.ne.s32.totalorder %s399, %s401
      %p408 = scmp.eq.s32.totalorder %s40, 1
      %p409 = por %p407, %p408
      %p410 = scmp.ne.s32.totalorder %s401, %s402
      %p411 = scmp.eq.s32.totalorder %s40, 0
      %p412 = por %p410, %p411
      %p413 = scmp.ne.s32.totalorder %s401, %s402
      %p414 = scmp.eq.s32.totalorder %s41, 1
      %p415 = por %p413, %p414
      %p417 = scmp.ne.s32.totalorder %s402, %s416
      %p418 = scmp.eq.s32.totalorder %s41, 0
      %p419 = por %p417, %p418
      %s421 = sadd.s32 %s420, 1
      %p424 = scmp.eq.s32.totalorder %s35, 1
      %p425 = scmp.ne.s32.totalorder %s420, %s422
      %p426 = scmp.eq.s32.totalorder %s35, 0
      %p427 = por %p425, %p426
      %p428 = scmp.ne.s32.totalorder %s420, %s422
      %p429 = scmp.eq.s32.totalorder %s40, 1
      %p430 = por %p428, %p429
      %p431 = scmp.ne.s32.totalorder %s422, %s423
      %p432 = scmp.eq.s32.totalorder %s40, 0
      %p433 = por %p431, %p432
      %p434 = scmp.ne.s32.totalorder %s422, %s423
      %p435 = scmp.eq.s32.totalorder %s41, 1
      %p436 = por %p434, %p435
      %p438 = scmp.ne.s32.totalorder %s423, %s437
      %p439 = scmp.eq.s32.totalorder %s41, 0
      %p440 = por %p438, %p439
      %s442 = sadd.s32 %s441, 1
      %p445 = scmp.eq.s32.totalorder %s35, 1
      %p446 = scmp.ne.s32.totalorder %s441, %s443
      %p447 = scmp.eq.s32.totalorder %s35, 0
      %p448 = por %p446, %p447
      %p449 = scmp.ne.s32.totalorder %s441, %s443
      %p450 = scmp.eq.s32.totalorder %s40, 1
      %p451 = por %p449, %p450
      %p452 = scmp.ne.s32.totalorder %s443, %s444
      %p453 = scmp.eq.s32.totalorder %s40, 0
      %p454 = por %p452, %p453
      %p455 = scmp.ne.s32.totalorder %s443, %s444
      %p456 = scmp.eq.s32.totalorder %s41, 1
      %p457 = por %p455, %p456
      %p459 = scmp.ne.s32.totalorder %s444, %s458
      %p460 = scmp.eq.s32.totalorder %s41, 0
      %p461 = por %p459, %p460
      %s463 = sadd.s32 %s462, 1
      %p466 = scmp.eq.s32.totalorder %s35, 1
      %p467 = scmp.ne.s32.totalorder %s462, %s464
      %p468 = scmp.eq.s32.totalorder %s35, 0
      %p469 = por %p467, %p468
      %p470 = scmp.ne.s32.totalorder %s462, %s464
      %p471 = scmp.eq.s32.totalorder %s40, 1
      %p472 = por %p470, %p471
      %p473 = scmp.ne.s32.totalorder %s464, %s465
      %p474 = scmp.eq.s32.totalorder %s40, 0
      %p475 = por %p473, %p474
      %p476 = scmp.ne.s32.totalorder %s464, %s465
      %p477 = scmp.eq.s32.totalorder %s41, 1
      %p478 = por %p476, %p477
      %p480 = scmp.ne.s32.totalorder %s465, %s479
      %p481 = scmp.eq.s32.totalorder %s41, 0
      %p482 = por %p480, %p481
      %s483 = ssub.s32 %s35, %s42
      %p484 = scmp.eq.s32.totalorder %s483, 0
      %s486 = sadd.s32 %s485, 1
      %s487 = scalar_select %p484, %s485, %s486
      %p490 = pneg %p484
      %p491 = scmp.eq.s32.totalorder %s35, 1
      %p492 = por %p490, %p491
      %p493 = scmp.ne.s32.totalorder %s485, %s488
      %p494 = scmp.eq.s32.totalorder %s35, 0
      %p495 = por %p493, %p494
      %p496 = scmp.ne.s32.totalorder %s485, %s488
      %p497 = scmp.eq.s32.totalorder %s40, 1
      %p498 = por %p496, %p497
      %p499 = scmp.ne.s32.totalorder %s488, %s489
      %p500 = scmp.eq.s32.totalorder %s40, 0
      %p501 = por %p499, %p500
      %p502 = scmp.ne.s32.totalorder %s488, %s489
      %p503 = scmp.eq.s32.totalorder %s41, 1
      %p504 = por %p502, %p503
      %p506 = scmp.ne.s32.totalorder %s489, %s505
      %p507 = scmp.eq.s32.totalorder %s41, 0
      %p508 = por %p506, %p507
      %s509 = ssub.s32 %s35, %s42
      %p510 = scmp.eq.s32.totalorder %s509, 0
      %s512 = sadd.s32 %s511, 1
      %s513 = scalar_select %p510, %s511, %s512
      %p516 = pneg %p510
      %p517 = scmp.eq.s32.totalorder %s35, 1
      %p518 = por %p516, %p517
      %p519 = scmp.ne.s32.totalorder %s511, %s514
      %p520 = scmp.eq.s32.totalorder %s35, 0
      %p521 = por %p519, %p520
      %p522 = scmp.ne.s32.totalorder %s511, %s514
      %p523 = scmp.eq.s32.totalorder %s40, 1
      %p524 = por %p522, %p523
      %p525 = scmp.ne.s32.totalorder %s514, %s515
      %p526 = scmp.eq.s32.totalorder %s40, 0
      %p527 = por %p525, %p526
      %p528 = scmp.ne.s32.totalorder %s514, %s515
      %p529 = scmp.eq.s32.totalorder %s41, 1
      %p530 = por %p528, %p529
      %p532 = scmp.ne.s32.totalorder %s515, %s531
      %p533 = scmp.eq.s32.totalorder %s41, 0
      %p534 = por %p532, %p533
      %p535 = scmp.le.s32.totalorder 1, %s35
      %p536 = scmp.lt.s32.totalorder %s35, 3
      %p537 = pnand %p535, %p536
      %p538 = pneg %p537
      // Predicated region
      $region9: #{tpu_custom_call.1} parent=5 // pred_check
        _
      $region10: #{tpu_custom_call.1} parent=5 // pred_check_branch
        %540 = sbr.rel (%p537) target = $region12
      $region11: #{tpu_custom_call.1} parent=5 // pred_region
        %s541 = ssub.s32 %s35, 1
        // Predicated region
        $region13: #{tpu_custom_call.1} parent=11 // pred_check
          %p542 = pneg %p160
        $region14: #{tpu_custom_call.1} parent=11 // pred_check_branch
          %544 = sbr.rel (%p542) target = $region16
        $region15: #{tpu_custom_call.1} parent=11 // pred_region
          _
        $region16: #{tpu_custom_call.1} parent=11 // pred_fallthru
          _
        // Predicated region
        $region17: #{tpu_custom_call.1} parent=11 // pred_check
          %p545 = pneg %p181
        $region18: #{tpu_custom_call.1} parent=11 // pred_check_branch
          %547 = sbr.rel (%p545) target = $region20
        $region19: #{tpu_custom_call.1} parent=11 // pred_region
          _
        $region20: #{tpu_custom_call.1} parent=11 // pred_fallthru
          _
        // Predicated region
        $region21: #{tpu_custom_call.1} parent=11 // pred_check
          %p548 = pneg %p202
        $region22: #{tpu_custom_call.1} parent=11 // pred_check_branch
          %550 = sbr.rel (%p548) target = $region24
        $region23: #{tpu_custom_call.1} parent=11 // pred_region
          _
        $region24: #{tpu_custom_call.1} parent=11 // pred_fallthru
          _
        // Predicated region
        $region25: #{tpu_custom_call.1} parent=11 // pred_check
          %p551 = pneg %p223
        $region26: #{tpu_custom_call.1} parent=11 // pred_check_branch
          %553 = sbr.rel (%p551) target = $region28
        $region27: #{tpu_custom_call.1} parent=11 // pred_region
          _
        $region28: #{tpu_custom_call.1} parent=11 // pred_fallthru
          _
        // Predicated region
        $region29: #{tpu_custom_call.1} parent=11 // pred_check
          %p554 = pneg %p244
        $region30: #{tpu_custom_call.1} parent=11 // pred_check_branch
          %556 = sbr.rel (%p554) target = $region32
        $region31: #{tpu_custom_call.1} parent=11 // pred_region
          _
        $region32: #{tpu_custom_call.1} parent=11 // pred_fallthru
          _
        // Predicated region
        $region33: #{tpu_custom_call.1} parent=11 // pred_check
          %p557 = pneg %p265
        $region34: #{tpu_custom_call.1} parent=11 // pred_check_branch
          %559 = sbr.rel (%p557) target = $region36
        $region35: #{tpu_custom_call.1} parent=11 // pred_region
          %s561 = ssub.s32 16, 16
          %562 = vsyncadd [#allocation3], %s561
          %s564 = sshll.u32 [#allocation2], 4
          %s565 = int_to_ptr.vmem [resolvable:$true] %s564
          %567 = dma.hbm_to_vmem [thread:$0]  %s9, 16, %s565, [#allocation3]
        $region36: #{tpu_custom_call.1} parent=11 // pred_fallthru
          _
        // Predicated region
        $region37: #{tpu_custom_call.1} parent=11 // pred_check
          %p568 = pneg %p286
        $region38: #{tpu_custom_call.1} parent=11 // pred_check_branch
          %570 = sbr.rel (%p568) target = $region40
        $region39: #{tpu_custom_call.1} parent=11 // pred_region
          _
        $region40: #{tpu_custom_call.1} parent=11 // pred_fallthru
          _
        // Predicated region
        $region41: #{tpu_custom_call.1} parent=11 // pred_check
          %p571 = pneg %p307
        $region42: #{tpu_custom_call.1} parent=11 // pred_check_branch
          %573 = sbr.rel (%p571) target = $region44
        $region43: #{tpu_custom_call.1} parent=11 // pred_region
          _
        $region44: #{tpu_custom_call.1} parent=11 // pred_fallthru
          _
        // Predicated region
        $region45: #{tpu_custom_call.1} parent=11 // pred_check
          %p574 = pneg %p328
        $region46: #{tpu_custom_call.1} parent=11 // pred_check_branch
          %576 = sbr.rel (%p574) target = $region48
        $region47: #{tpu_custom_call.1} parent=11 // pred_region
          _
        $region48: #{tpu_custom_call.1} parent=11 // pred_fallthru
          _
        // Predicated region
        $region49: #{tpu_custom_call.1} parent=11 // pred_check
          %p577 = pneg %p349
        $region50: #{tpu_custom_call.1} parent=11 // pred_check_branch
          %579 = sbr.rel (%p577) target = $region52
        $region51: #{tpu_custom_call.1} parent=11 // pred_region
          _
        $region52: #{tpu_custom_call.1} parent=11 // pred_fallthru
          _
        // Predicated region
        $region53: #{tpu_custom_call.1} parent=11 // pred_check
          %p580 = pneg %p370
        $region54: #{tpu_custom_call.1} parent=11 // pred_check_branch
          %582 = sbr.rel (%p580) target = $region56
        $region55: #{tpu_custom_call.1} parent=11 // pred_region
          _
        $region56: #{tpu_custom_call.1} parent=11 // pred_fallthru
          _
        // Predicated region
        $region57: #{tpu_custom_call.1} parent=11 // pred_check
          %p583 = pneg %p391
        $region58: #{tpu_custom_call.1} parent=11 // pred_check_branch
          %585 = sbr.rel (%p583) target = $region60
        $region59: #{tpu_custom_call.1} parent=11 // pred_region
          _
        $region60: #{tpu_custom_call.1} parent=11 // pred_fallthru
          _
        // Predicated region
        $region61: #{tpu_custom_call.1} parent=11 // pred_check
          %p586 = pneg %p412
        $region62: #{tpu_custom_call.1} parent=11 // pred_check_branch
          %588 = sbr.rel (%p586) target = $region64
        $region63: #{tpu_custom_call.1} parent=11 // pred_region
          _
        $region64: #{tpu_custom_call.1} parent=11 // pred_fallthru
          _
        // Predicated region
        $region65: #{tpu_custom_call.1} parent=11 // pred_check
          %p589 = pneg %p433
        $region66: #{tpu_custom_call.1} parent=11 // pred_check_branch
          %591 = sbr.rel (%p589) target = $region68
        $region67: #{tpu_custom_call.1} parent=11 // pred_region
          _
        $region68: #{tpu_custom_call.1} parent=11 // pred_fallthru
          _
        // Predicated region
        $region69: #{tpu_custom_call.1} parent=11 // pred_check
          %p592 = pneg %p454
        $region70: #{tpu_custom_call.1} parent=11 // pred_check_branch
          %594 = sbr.rel (%p592) target = $region72
        $region71: #{tpu_custom_call.1} parent=11 // pred_region
          _
        $region72: #{tpu_custom_call.1} parent=11 // pred_fallthru
          _
        // Predicated region
        $region73: #{tpu_custom_call.1} parent=11 // pred_check
          %p595 = pneg %p475
        $region74: #{tpu_custom_call.1} parent=11 // pred_check_branch
          %597 = sbr.rel (%p595) target = $region76
        $region75: #{tpu_custom_call.1} parent=11 // pred_region
          _
        $region76: #{tpu_custom_call.1} parent=11 // pred_fallthru
          _
      $region12: #{tpu_custom_call.1} parent=5 // pred_fallthru
        _
      %p598 = scmp.lt.s32.totalorder %s35, 2
      // Predicated region
      $region77: #{tpu_custom_call.1} parent=5 // pred_check
        %p599 = pneg %p598
      $region78: #{tpu_custom_call.1} parent=5 // pred_check_branch
        %601 = sbr.rel (%p599) target = $region80
      $region79: #{tpu_custom_call.1} parent=5 // pred_region
        // Predicated region
        $region81: #{tpu_custom_call.1} parent=79 // pred_check
          %p602 = pneg %p55
        $region82: #{tpu_custom_call.1} parent=79 // pred_check_branch
          %604 = sbr.rel (%p602) target = $region84
        $region83: #{tpu_custom_call.1} parent=79 // pred_region
          %p605 = scmp.lt.s32.totalorder %s35, 1
          %s606 = scalar_select %p605, %s35, 1
          %s607 = smul.addr %s606, 4
          %s608 = smul.addr %s607, 4
          %s609 = scalar_lea.vmem %s0, %s608
        $region84: #{tpu_custom_call.1} parent=79 // pred_fallthru
          _
        // Predicated region
        $region85: #{tpu_custom_call.1} parent=79 // pred_check
          %p610 = pneg %p81
        $region86: #{tpu_custom_call.1} parent=79 // pred_check_branch
          %612 = sbr.rel (%p610) target = $region88
        $region87: #{tpu_custom_call.1} parent=79 // pred_region
          %p613 = scmp.lt.s32.totalorder %s35, 1
          %s614 = scalar_select %p613, %s35, 1
          %s615 = smul.addr %s614, 4
          %s616 = smul.addr %s615, 4
          %s617 = scalar_lea.vmem %s1, %s616
        $region88: #{tpu_custom_call.1} parent=79 // pred_fallthru
          _
        // Predicated region
        $region89: #{tpu_custom_call.1} parent=79 // pred_check
          %p618 = pneg %p107
        $region90: #{tpu_custom_call.1} parent=79 // pred_check_branch
          %620 = sbr.rel (%p618) target = $region92
        $region91: #{tpu_custom_call.1} parent=79 // pred_region
          %p621 = scmp.lt.s32.totalorder %s35, 1
          %s622 = scalar_select %p621, %s35, 1
          %s623 = smul.addr %s622, 4
          %s624 = smul.addr %s623, 8
          %s625 = scalar_lea.vmem %s2, %s624
        $region92: #{tpu_custom_call.1} parent=79 // pred_fallthru
          _
        // Predicated region
        $region93: #{tpu_custom_call.1} parent=79 // pred_check
          %p626 = pneg %p133
        $region94: #{tpu_custom_call.1} parent=79 // pred_check_branch
          %628 = sbr.rel (%p626) target = $region96
        $region95: #{tpu_custom_call.1} parent=79 // pred_region
          %p629 = scmp.lt.s32.totalorder %s35, 1
          %s630 = scalar_select %p629, %s35, 1
          %s631 = smul.addr %s630, 4
          %s632 = smul.addr %s631, 8
          %s633 = scalar_lea.vmem %s3, %s632
        $region96: #{tpu_custom_call.1} parent=79 // pred_fallthru
          _
      $region80: #{tpu_custom_call.1} parent=5 // pred_fallthru
        _
      %p634 = scmp.le.s32.totalorder 1, %s35
      %p635 = scmp.lt.s32.totalorder %s35, 3
      %p636 = pnand %p634, %p635
      %p637 = pneg %p636
      // Predicated region
      $region97: #{tpu_custom_call.1} parent=5 // pred_check
        _
      $region98: #{tpu_custom_call.1} parent=5 // pred_check_branch
        %639 = sbr.rel (%p636) target = $region100
      $region99: #{tpu_custom_call.1} parent=5 // pred_region
        %s640 = ssub.s32 %s35, 1
        // Predicated region
        $region101: #{tpu_custom_call.1} parent=99 // pred_check
          %p641 = pneg %p265
        $region102: #{tpu_custom_call.1} parent=99 // pred_check_branch
          %643 = sbr.rel (%p641) target = $region104
        $region103: #{tpu_custom_call.1} parent=99 // pred_region
          %644 = dma.done [#allocation3], 16
        $region104: #{tpu_custom_call.1} parent=99 // pred_fallthru
          _
        %p645 = scmp.lt.s32.totalorder %s40, 1
        %s646 = scalar_select %p645, %s40, 1
        %s647 = smul.addr %s646, 4
        %s648 = smul.addr %s647, 4
        %s649 = scalar_lea.vmem %s0, %s648
        %p650 = pneg %p61
        %p651 = pneg %p58
        %p652 = scmp.lt.s32.totalorder %s40, 1
        %s653 = scalar_select %p652, %s40, 1
        %s654 = smul.addr %s653, 4
        %s655 = smul.addr %s654, 4
        %s656 = scalar_lea.vmem %s1, %s655
        %p657 = pneg %p87
        %p658 = pneg %p84
        %p659 = scmp.lt.s32.totalorder %s40, 1
        %s660 = scalar_select %p659, %s40, 1
        %s661 = smul.addr %s660, 4
        %s662 = smul.addr %s661, 8
        %s663 = scalar_lea.vmem %s2, %s662
        %p664 = pneg %p113
        %p665 = pneg %p110
        %p666 = scmp.lt.s32.totalorder %s40, 1
        %s667 = scalar_select %p666, %s40, 1
        %s668 = smul.addr %s667, 4
        %s669 = smul.addr %s668, 8
        %s670 = scalar_lea.vmem %s3, %s669
        %p671 = pneg %p139
        %p672 = pneg %p136
        %p673 = pneg %p160
        %p674 = pneg %p157
        %p675 = pneg %p181
        %p676 = pneg %p178
        %p677 = pneg %p202
        %p678 = pneg %p199
        %p679 = pneg %p223
        %p680 = pneg %p220
        %p681 = pneg %p244
        %p682 = pneg %p241
        %p683 = pneg %p265
        %p684 = pneg %p262
        %p685 = pneg %p286
        %p686 = pneg %p283
        %p687 = pneg %p307
        %p688 = pneg %p304
        %p689 = pneg %p328
        %p690 = pneg %p325
        %p691 = pneg %p349
        %p692 = pneg %p346
        %p693 = pneg %p370
        %p694 = pneg %p367
        %p695 = pneg %p391
        %p696 = pneg %p388
        %p697 = pneg %p412
        %p698 = pneg %p409
        %p699 = pneg %p433
        %p700 = pneg %p430
        %p701 = pneg %p454
        %p702 = pneg %p451
        %p703 = pneg %p475
        %p704 = pneg %p472
        %p705 = pneg %p501
        %p706 = pneg %p498
        %s707 = sand.u32 %s488, 1
        %s708 = scalar_lea.sflag [#allocation4], %s707
        %s709 = sand.u32 %s488, 1
        %s710 = smul.addr %s709, 32
        %s711 = scalar_lea.vmem [#allocation5], %s710
        %p712 = pneg %p527
        %p713 = pneg %p524
        %s714 = sand.u32 %s514, 1
        %s715 = scalar_lea.sflag [#allocation7], %s714
        %s716 = sand.u32 %s514, 1
        %s717 = smul.addr %s716, 32
        %s718 = scalar_lea.vmem [#allocation6], %s717
        %p719 = scmp.lt.s32.totalorder %s40, 1
        %s720 = scalar_select %p719, %s40, 1
        %s721 = smul.addr %s720, 4
        %s722 = smul.addr %s721, 4
        %s723 = scalar_lea.vmem %s0, %s722
        %p724 = scmp.lt.s32.totalorder %s40, 1
        %s725 = scalar_select %p724, %s40, 1
        %s726 = smul.addr %s725, 4
        %s727 = smul.addr %s726, 4
        %s728 = scalar_lea.vmem %s1, %s727
        %p729 = scmp.lt.s32.totalorder %s40, 1
        %s730 = scalar_select %p729, %s40, 1
        %s731 = smul.addr %s730, 4
        %s732 = smul.addr %s731, 8
        %s733 = scalar_lea.vmem %s2, %s732
        %p734 = scmp.lt.s32.totalorder %s40, 1
        %s735 = scalar_select %p734, %s40, 1
        %s736 = smul.addr %s735, 4
        %s737 = smul.addr %s736, 8
        %s738 = scalar_lea.vmem %s3, %s737
        %v740 = vlaneseq
        %v741 = vand.u32 %v740, 127
        %v742 = vld [vmem:[%s733] sm:$0xff]
        %v743 = vld [vmem:[%s733 + $0x8] sm:$0xff]
        %v744 = vld [vmem:[%s733 + $0x10] sm:$0xff]
        %v745 = vld [vmem:[%s733 + $0x18] sm:$0xff]
        %746 = vset.pattern.permute.xlu0 0
        %747 = vperm.xlu0 %746, %v742
        %v748 = vpop.permute.xlu0 %747
        %749 = vset.pattern.permute.xlu0 0
        %750 = vperm.xlu0 %749, %v743
        %v751 = vpop.permute.xlu0 %750
        %752 = vset.pattern.permute.xlu0 0
        %753 = vperm.xlu0 %752, %v744
        %v754 = vpop.permute.xlu0 %753
        %755 = vset.pattern.permute.xlu0 0
        %756 = vperm.xlu0 %755, %v745
        %v757 = vpop.permute.xlu0 %756
        %vm758 = vcmp.eq.s32.totalorder %v741, %v748
        %vm759 = vcmp.eq.s32.totalorder %v741, %v751
        %vm760 = vcmp.eq.s32.totalorder %v741, %v754
        %vm761 = vcmp.eq.s32.totalorder %v741, %v757
        %v762 = vsel %vm758, 1.0, 0.0
        %v763 = vsel %vm759, 1.0, 0.0
        %v764 = vsel %vm760, 1.0, 0.0
        %v765 = vsel %vm761, 1.0, 0.0
        %v766 = vpack.c.bf16 %v763, %v762
        %v767 = vpack.c.bf16 %v765, %v764
        %v768 = vld [vmem:[%s738] sm:$0xff]
        %v769 = vld [vmem:[%s738 + $0x8] sm:$0xff]
        %v770 = vld [vmem:[%s738 + $0x10] sm:$0xff]
        %v771 = vld [vmem:[%s738 + $0x18] sm:$0xff]
        %772 = vset.pattern.permute.xlu0 0
        %773 = vperm.xlu0 %772, %v768
        %v774 = vpop.permute.xlu0 %773
        %775 = vset.pattern.permute.xlu0 0
        %776 = vperm.xlu0 %775, %v769
        %v777 = vpop.permute.xlu0 %776
        %778 = vset.pattern.permute.xlu0 0
        %779 = vperm.xlu0 %778, %v770
        %v780 = vpop.permute.xlu0 %779
        %781 = vset.pattern.permute.xlu0 0
        %782 = vperm.xlu0 %781, %v771
        %v783 = vpop.permute.xlu0 %782
        %vm784 = vcmp.eq.s32.totalorder %v741, %v774
        %vm785 = vcmp.eq.s32.totalorder %v741, %v777
        %vm786 = vcmp.eq.s32.totalorder %v741, %v780
        %vm787 = vcmp.eq.s32.totalorder %v741, %v783
        %v788 = vsel %vm784, 1.0, 0.0
        %v789 = vsel %vm785, 1.0, 0.0
        %v790 = vsel %vm786, 1.0, 0.0
        %v791 = vsel %vm787, 1.0, 0.0
        %v792 = vpack.c.bf16 %v789, %v788
        %v793 = vpack.c.bf16 %v791, %v790
        %v794 = vld [vmem:[%s728] sm:$0xf]
        %v795 = vld [vmem:[%s728 + $0x4] sm:$0xf]
        %v796 = vld [vmem:[%s728 + $0x8] sm:$0xf]
        %v797 = vld [vmem:[%s728 + $0xc] sm:$0xf]
        %v798 = vld [vmem:[%s4] sm:$0xf]
        %v799 = vld [vmem:[%s4 + $0x4] sm:$0xf]
        %v800 = vld [vmem:[%s4 + $0x8] sm:$0xf]
        %v801 = vld [vmem:[%s4 + $0xc] sm:$0xf]
        %v802 = vld [vmem:[%s5] sm:$0x1]
        %v804 = vlaneseq
        %v805 = vshrl.u32 %v804, 7
        %v806 = vsub.s32 0, %v805
        %v807 = vrot.slane %v802, %v806
        %v813 = vunpack.c.l.b16 %v794
        %v814 = vunpack.c.l.b16 %v795
        %v815 = vunpack.c.l.b16 %v796
        %v816 = vunpack.c.l.b16 %v797
        %v817 = vpack.c.b16 %v814, %v813
        %v818 = vpack.c.b16 %v816, %v815
        %v823 = vunpack.c.l.b16 %v798
        %v824 = vunpack.c.l.b16 %v799
        %v825 = vunpack.c.l.b16 %v800
        %v826 = vunpack.c.l.b16 %v801
        %v827 = vpack.c.b16 %v824, %v823
        %v828 = vpack.c.b16 %v826, %v825
        %vm831 = vcmask 261120
        %v833 = vsel %vm831, %v817, 0
        %v836 = vsel %vm831, %v818, 0
        %838 = vmatprep.subr.bf16.mxu0 0
        %839 = vmatpush1.bf16.msra.mxu0 %v827
        %840 = vmatprep.subr.bf16.mxu0 0
        %841 = vmatpush1.bf16.msra.mxu0 %v828
        %842 = vmatprep.subr.bf16.mxu0 0
        %843 = vmatpush1.bf16.msra.mxu0 0
        %844 = vmatprep.subr.bf16.mxu0 0
        %845 = vmatpush1.bf16.msra.mxu0 0
        %846 = vmatprep.subr.bf16.mxu0 0
        %847 = vmatpush1.bf16.msra.mxu0 0
        %848 = vmatprep.subr.bf16.mxu0 0
        %849 = vmatpush1.bf16.msra.mxu0 0
        %850 = vmatprep.subr.bf16.mxu0 0
        %851 = vmatpush1.bf16.msra.mxu0 0
        %852 = vmatprep.subr.bf16.mxu0 0
        %853 = vmatpush1.bf16.msra.mxu0 0
        %854 = vmatprep.subr.bf16.mxu0 0
        %855 = vmatpush1.bf16.msra.mxu0 0
        %856 = vmatprep.subr.bf16.mxu0 0
        %857 = vmatpush1.bf16.msra.mxu0 0
        %858 = vmatprep.subr.bf16.mxu0 0
        %859 = vmatpush1.bf16.msra.mxu0 0
        %860 = vmatprep.subr.bf16.mxu0 0
        %861 = vmatpush1.bf16.msra.mxu0 0
        %862 = vmatprep.subr.bf16.mxu0 0
        %863 = vmatpush1.bf16.msra.mxu0 0
        %864 = vmatprep.subr.bf16.mxu0 0
        %865 = vmatpush1.bf16.msra.mxu0 0
        %866 = vmatprep.subr.bf16.mxu0 0
        %867 = vmatpush1.bf16.msra.mxu0 0
        %868 = vmatprep.subr.bf16.mxu0 0
        %869 = vmatpush1.bf16.msra.mxu0 0
        %870 = vmatprep.mubr.bf16.mxu0 0
        %871 = vmatmul.mubr.bf16.gmra.mrb[0].mxu0 %v833
        %v872 = vpop.f32.mrb[0].mxu0
        %v873 = vadd.f32 %v807, %v872
        %v874 = vpop.f32.mrb[0].mxu0
        %v875 = vpop.f32.mrb[0].mxu0
        %v876 = vadd.f32 %v807, %v875
        %v877 = vpop.f32.mrb[0].mxu0
        %878 = vmatprep.mubr.bf16.mxu0 0
        %879 = vmatmul.mubr.bf16.gmra.mrb[0].mxu0 %v836
        %v880 = vpop.f32.mrb[0].mxu0
        %v881 = vadd.f32 %v807, %v880
        %v882 = vpop.f32.mrb[0].mxu0
        %v883 = vpop.f32.mrb[0].mxu0
        %v884 = vadd.f32 %v807, %v883
        %v885 = vpop.f32.mrb[0].mxu0
        %886 = vdwg.mxu0
        %v887 = vld [vmem:[%s723] sm:$0xf]
        %v888 = vld [vmem:[%s723 + $0x4] sm:$0xf]
        %v889 = vld [vmem:[%s723 + $0x8] sm:$0xf]
        %v890 = vld [vmem:[%s723 + $0xc] sm:$0xf]
        %v891 = vld [vmem:[%s6] sm:$0xf]
        %v892 = vld [vmem:[%s6 + $0x4] sm:$0xf]
        %v893 = vld [vmem:[%s6 + $0x8] sm:$0xf]
        %v894 = vld [vmem:[%s6 + $0xc] sm:$0xf]
        %v895 = vld [vmem:[%s6 + $0x10] sm:$0xf]
        %v896 = vld [vmem:[%s6 + $0x14] sm:$0xf]
        %v897 = vld [vmem:[%s6 + $0x18] sm:$0xf]
        %v898 = vld [vmem:[%s6 + $0x1c] sm:$0xf]
        %v899 = vld [vmem:[%s7] sm:$0x1]
        %v901 = vlaneseq
        %v902 = vshrl.u32 %v901, 7
        %v903 = vsub.s32 0, %v902
        %v904 = vrot.slane %v899, %v903
        %v910 = vunpack.c.l.b16 %v887
        %v911 = vunpack.c.l.b16 %v888
        %v912 = vunpack.c.l.b16 %v889
        %v913 = vunpack.c.l.b16 %v890
        %v914 = vpack.c.b16 %v911, %v910
        %v915 = vpack.c.b16 %v913, %v912
        %v924 = vunpack.c.l.b16 %v891
        %v925 = vunpack.c.l.b16 %v892
        %v926 = vunpack.c.l.b16 %v893
        %v927 = vunpack.c.l.b16 %v894
        %v928 = vunpack.c.l.b16 %v895
        %v929 = vunpack.c.l.b16 %v896
        %v930 = vunpack.c.l.b16 %v897
        %v931 = vunpack.c.l.b16 %v898
        %v932 = vpack.c.b16 %v925, %v924
        %v933 = vpack.c.b16 %v927, %v926
        %v934 = vpack.c.b16 %v929, %v928
        %v935 = vpack.c.b16 %v931, %v930
        %vm940 = vcmask 523264
        %v942 = vsel %vm940, %v914, 0
        %v945 = vsel %vm940, %v915, 0
        %947 = vmatprep.subr.bf16.mxu0 0
        %948 = vmatpush1.bf16.msra.mxu0 %v932
        %949 = vmatprep.subr.bf16.mxu0 0
        %950 = vmatpush1.bf16.msra.mxu0 %v933
        %951 = vmatprep.subr.bf16.mxu0 0
        %952 = vmatpush1.bf16.msra.mxu0 %v934
        %953 = vmatprep.subr.bf16.mxu0 0
        %954 = vmatpush1.bf16.msra.mxu0 %v935
        %955 = vmatprep.subr.bf16.mxu0 0
        %956 = vmatpush1.bf16.msra.mxu0 0
        %957 = vmatprep.subr.bf16.mxu0 0
        %958 = vmatpush1.bf16.msra.mxu0 0
        %959 = vmatprep.subr.bf16.mxu0 0
        %960 = vmatpush1.bf16.msra.mxu0 0
        %961 = vmatprep.subr.bf16.mxu0 0
        %962 = vmatpush1.bf16.msra.mxu0 0
        %963 = vmatprep.subr.bf16.mxu0 0
        %964 = vmatpush1.bf16.msra.mxu0 0
        %965 = vmatprep.subr.bf16.mxu0 0
        %966 = vmatpush1.bf16.msra.mxu0 0
        %967 = vmatprep.subr.bf16.mxu0 0
        %968 = vmatpush1.bf16.msra.mxu0 0
        %969 = vmatprep.subr.bf16.mxu0 0
        %970 = vmatpush1.bf16.msra.mxu0 0
        %971 = vmatprep.subr.bf16.mxu0 0
        %972 = vmatpush1.bf16.msra.mxu0 0
        %973 = vmatprep.subr.bf16.mxu0 0
        %974 = vmatpush1.bf16.msra.mxu0 0
        %975 = vmatprep.subr.bf16.mxu0 0
        %976 = vmatpush1.bf16.msra.mxu0 0
        %977 = vmatprep.subr.bf16.mxu0 0
        %978 = vmatpush1.bf16.msra.mxu0 0
        %979 = vmatprep.mubr.bf16.mxu0 0
        %980 = vmatmul.mubr.bf16.gmra.mrb[0].mxu0 %v942
        %v981 = vpop.f32.mrb[0].mxu0
        %v982 = vadd.f32 %v904, %v981
        %v983 = vpop.f32.mrb[0].mxu0
        %v984 = vpop.f32.mrb[0].mxu0
        %v985 = vadd.f32 %v904, %v984
        %v986 = vpop.f32.mrb[0].mxu0
        %987 = vmatprep.mubr.bf16.mxu0 0
        %988 = vmatmul.mubr.bf16.gmra.mrb[0].mxu0 %v945
        %v989 = vpop.f32.mrb[0].mxu0
        %v990 = vadd.f32 %v904, %v989
        %v991 = vpop.f32.mrb[0].mxu0
        %v992 = vpop.f32.mrb[0].mxu0
        %v993 = vadd.f32 %v904, %v992
        %v994 = vpop.f32.mrb[0].mxu0
        %995 = vdwg.mxu0
        %v996 = vpack.c.bf16 %v876, %v873
        %v997 = vpack.c.bf16 %v884, %v881
        %v998 = vld [vmem:[%s8] sm:$0xf]
        %v999 = vld [vmem:[%s8 + $0x4] sm:$0xf]
        %v1000 = vld [vmem:[%s8 + $0x8] sm:$0xf]
        %v1001 = vld [vmem:[%s8 + $0xc] sm:$0xf]
        %v1002 = vld [vmem:[%s8 + $0x10] sm:$0xf]
        %v1003 = vld [vmem:[%s8 + $0x14] sm:$0xf]
        %v1004 = vld [vmem:[%s8 + $0x18] sm:$0xf]
        %v1005 = vld [vmem:[%s8 + $0x1c] sm:$0xf]
        %v1006 = vld [vmem:[#allocation2] sm:$0x1]
        %v1008 = vlaneseq
        %v1009 = vshrl.u32 %v1008, 7
        %v1010 = vsub.s32 0, %v1009
        %v1011 = vrot.slane %v1006, %v1010
        %v1021 = vunpack.c.l.b16 %v998
        %v1022 = vunpack.c.l.b16 %v999
        %v1023 = vunpack.c.l.b16 %v1000
        %v1024 = vunpack.c.l.b16 %v1001
        %v1025 = vunpack.c.l.b16 %v1002
        %v1026 = vunpack.c.l.b16 %v1003
        %v1027 = vunpack.c.l.b16 %v1004
        %v1028 = vunpack.c.l.b16 %v1005
        %v1029 = vpack.c.b16 %v1022, %v1021
        %v1030 = vpack.c.b16 %v1024, %v1023
        %v1031 = vpack.c.b16 %v1026, %v1025
        %v1032 = vpack.c.b16 %v1028, %v1027
        %v1038 = vsel %vm940, %v996, 0
        %v1041 = vsel %vm940, %v997, 0
        %1043 = vmatprep.subr.bf16.mxu0 0
        %1044 = vmatpush1.bf16.msra.mxu0 %v1029
        %1045 = vmatprep.subr.bf16.mxu0 0
        %1046 = vmatpush1.bf16.msra.mxu0 %v1030
        %1047 = vmatprep.subr.bf16.mxu0 0
        %1048 = vmatpush1.bf16.msra.mxu0 %v1031
        %1049 = vmatprep.subr.bf16.mxu0 0
        %1050 = vmatpush1.bf16.msra.mxu0 %v1032
        %1051 = vmatprep.subr.bf16.mxu0 0
        %1052 = vmatpush1.bf16.msra.mxu0 0
        %1053 = vmatprep.subr.bf16.mxu0 0
        %1054 = vmatpush1.bf16.msra.mxu0 0
        %1055 = vmatprep.subr.bf16.mxu0 0
        %1056 = vmatpush1.bf16.msra.mxu0 0
        %1057 = vmatprep.subr.bf16.mxu0 0
        %1058 = vmatpush1.bf16.msra.mxu0 0
        %1059 = vmatprep.subr.bf16.mxu0 0
        %1060 = vmatpush1.bf16.msra.mxu0 0
        %1061 = vmatprep.subr.bf16.mxu0 0
        %1062 = vmatpush1.bf16.msra.mxu0 0
        %1063 = vmatprep.subr.bf16.mxu0 0
        %1064 = vmatpush1.bf16.msra.mxu0 0
        %1065 = vmatprep.subr.bf16.mxu0 0
        %1066 = vmatpush1.bf16.msra.mxu0 0
        %1067 = vmatprep.subr.bf16.mxu0 0
        %1068 = vmatpush1.bf16.msra.mxu0 0
        %1069 = vmatprep.subr.bf16.mxu0 0
        %1070 = vmatpush1.bf16.msra.mxu0 0
        %1071 = vmatprep.subr.bf16.mxu0 0
        %1072 = vmatpush1.bf16.msra.mxu0 0
        %1073 = vmatprep.subr.bf16.mxu0 0
        %1074 = vmatpush1.bf16.msra.mxu0 0
        %1075 = vmatprep.mubr.bf16.mxu0 0
        %1076 = vmatmul.mubr.bf16.gmra.mrb[0].mxu0 %v1038
        %v1077 = vpop.f32.mrb[0].mxu0
        %v1078 = vadd.f32 %v1011, %v1077
        %v1079 = vpop.f32.mrb[0].mxu0
        %v1080 = vpop.f32.mrb[0].mxu0
        %v1081 = vadd.f32 %v1011, %v1080
        %v1082 = vpop.f32.mrb[0].mxu0
        %1083 = vmatprep.mubr.bf16.mxu0 0
        %1084 = vmatmul.mubr.bf16.gmra.mrb[0].mxu0 %v1041
        %v1085 = vpop.f32.mrb[0].mxu0
        %v1086 = vadd.f32 %v1011, %v1085
        %v1087 = vpop.f32.mrb[0].mxu0
        %v1088 = vpop.f32.mrb[0].mxu0
        %v1089 = vadd.f32 %v1011, %v1088
        %v1090 = vpop.f32.mrb[0].mxu0
        %1091 = vdwg.mxu0
        %v1092 = vmax.f32 %v1078, 0.0
        %v1093 = vmax.f32 %v1081, 0.0
        %v1094 = vmax.f32 %v1086, 0.0
        %v1095 = vmax.f32 %v1089, 0.0
        %v1096 = vpack.c.bf16 %v985, %v982
        %v1097 = vpack.c.bf16 %v993, %v990
        %v1098 = vld [vmem:[%s10] sm:$0xf]
        %v1099 = vld [vmem:[%s10 + $0x4] sm:$0xf]
        %v1100 = vld [vmem:[%s10 + $0x8] sm:$0xf]
        %v1101 = vld [vmem:[%s10 + $0xc] sm:$0xf]
        %v1102 = vld [vmem:[%s11] sm:$0x1]
        %v1104 = vlaneseq
        %v1105 = vshrl.u32 %v1104, 7
        %v1106 = vsub.s32 0, %v1105
        %v1107 = vrot.slane %v1102, %v1106
        %v1113 = vunpack.c.l.b16 %v1098
        %v1114 = vunpack.c.l.b16 %v1099
        %v1115 = vunpack.c.l.b16 %v1100
        %v1116 = vunpack.c.l.b16 %v1101
        %v1117 = vpack.c.b16 %v1114, %v1113
        %v1118 = vpack.c.b16 %v1116, %v1115
        %v1122 = vsel %vm831, %v1096, 0
        %v1125 = vsel %vm831, %v1097, 0
        %1127 = vmatprep.subr.bf16.mxu0 0
        %1128 = vmatpush1.bf16.msra.mxu0 %v1117
        %1129 = vmatprep.subr.bf16.mxu0 0
        %1130 = vmatpush1.bf16.msra.mxu0 %v1118
        %1131 = vmatprep.subr.bf16.mxu0 0
        %1132 = vmatpush1.bf16.msra.mxu0 0
        %1133 = vmatprep.subr.bf16.mxu0 0
        %1134 = vmatpush1.bf16.msra.mxu0 0
        %1135 = vmatprep.subr.bf16.mxu0 0
        %1136 = vmatpush1.bf16.msra.mxu0 0
        %1137 = vmatprep.subr.bf16.mxu0 0
        %1138 = vmatpush1.bf16.msra.mxu0 0
        %1139 = vmatprep.subr.bf16.mxu0 0
        %1140 = vmatpush1.bf16.msra.mxu0 0
        %1141 = vmatprep.subr.bf16.mxu0 0
        %1142 = vmatpush1.bf16.msra.mxu0 0
        %1143 = vmatprep.subr.bf16.mxu0 0
        %1144 = vmatpush1.bf16.msra.mxu0 0
        %1145 = vmatprep.subr.bf16.mxu0 0
        %1146 = vmatpush1.bf16.msra.mxu0 0
        %1147 = vmatprep.subr.bf16.mxu0 0
        %1148 = vmatpush1.bf16.msra.mxu0 0
        %1149 = vmatprep.subr.bf16.mxu0 0
        %1150 = vmatpush1.bf16.msra.mxu0 0
        %1151 = vmatprep.subr.bf16.mxu0 0
        %1152 = vmatpush1.bf16.msra.mxu0 0
        %1153 = vmatprep.subr.bf16.mxu0 0
        %1154 = vmatpush1.bf16.msra.mxu0 0
        %1155 = vmatprep.subr.bf16.mxu0 0
        %1156 = vmatpush1.bf16.msra.mxu0 0
        %1157 = vmatprep.subr.bf16.mxu0 0
        %1158 = vmatpush1.bf16.msra.mxu0 0
        %1159 = vmatprep.mubr.bf16.mxu0 0
        %1160 = vmatmul.mubr.bf16.gmra.mrb[0].mxu0 %v1122
        %v1161 = vpop.f32.mrb[0].mxu0
        %v1162 = vadd.f32 %v1107, %v1161
        %v1163 = vpop.f32.mrb[0].mxu0
        %v1164 = vpop.f32.mrb[0].mxu0
        %v1165 = vadd.f32 %v1107, %v1164
        %v1166 = vpop.f32.mrb[0].mxu0
        %1167 = vmatprep.mubr.bf16.mxu0 0
        %1168 = vmatmul.mubr.bf16.gmra.mrb[0].mxu0 %v1125
        %v1169 = vpop.f32.mrb[0].mxu0
        %v1170 = vadd.f32 %v1107, %v1169
        %v1171 = vpop.f32.mrb[0].mxu0
        %v1172 = vpop.f32.mrb[0].mxu0
        %v1173 = vadd.f32 %v1107, %v1172
        %v1174 = vpop.f32.mrb[0].mxu0
        %1175 = vdwg.mxu0
        %v1176 = vxor.u32 %v1162, 2147483648
        %v1177 = vxor.u32 %v1165, 2147483648
        %v1178 = vxor.u32 %v1170, 2147483648
        %v1179 = vxor.u32 %v1173, 2147483648
        %v1180 = vmul.f32 %v1176, 1.442695
        %v1181 = vpow.pop %v1180
        %v1182 = vmul.f32 %v1177, 1.442695
        %v1183 = vpow.pop %v1182
        %v1184 = vmul.f32 %v1178, 1.442695
        %v1185 = vpow.pop %v1184
        %v1186 = vmul.f32 %v1179, 1.442695
        %v1187 = vpow.pop %v1186
        %v1188 = vadd.f32 %v1181, 1.0
        %v1189 = vadd.f32 %v1183, 1.0
        %v1190 = vadd.f32 %v1185, 1.0
        %v1191 = vadd.f32 %v1187, 1.0
        %v1192 = vrcp.pop %v1188
        %v1193 = vmul.f32 1.0, %v1192
        %v1194 = vrcp.pop %v1189
        %v1195 = vmul.f32 1.0, %v1194
        %v1196 = vrcp.pop %v1190
        %v1197 = vmul.f32 1.0, %v1196
        %v1198 = vrcp.pop %v1191
        %v1199 = vmul.f32 1.0, %v1198
        %1204 = vrot.lane.b32.xlu0 %v1162, 32
        %v1205 = vpop.permute.xlu0 %1204
        %1206 = vrot.lane.b32.xlu0 %v1165, 32
        %v1207 = vpop.permute.xlu0 %1206
        %1208 = vrot.lane.b32.xlu0 %v1170, 32
        %v1209 = vpop.permute.xlu0 %1208
        %1210 = vrot.lane.b32.xlu0 %v1173, 32
        %v1211 = vpop.permute.xlu0 %1210
        %v1216 = vmul.f32 %v1193, %v1205
        %v1217 = vmul.f32 %v1195, %v1207
        %v1218 = vmul.f32 %v1197, %v1209
        %v1219 = vmul.f32 %v1199, %v1211
        %1224 = vrot.lane.b32.xlu0 %v1216, 64
        %v1225 = vpop.permute.xlu0 %1224
        %1226 = vrot.lane.b32.xlu0 %v1217, 64
        %v1227 = vpop.permute.xlu0 %1226
        %1228 = vrot.lane.b32.xlu0 %v1218, 64
        %v1229 = vpop.permute.xlu0 %1228
        %1230 = vrot.lane.b32.xlu0 %v1219, 64
        %v1231 = vpop.permute.xlu0 %1230
        %v1236 = vadd.f32 %v1162, %v1225
        %v1237 = vadd.f32 %v1165, %v1227
        %v1238 = vadd.f32 %v1170, %v1229
        %v1239 = vadd.f32 %v1173, %v1231
        %v1240 = vtanh.pop %v1236
        %v1241 = vtanh.pop %v1237
        %v1242 = vtanh.pop %v1238
        %v1243 = vtanh.pop %v1239
        %v1244 = vsub.f32 1.0, %v1193
        %v1245 = vsub.f32 1.0, %v1195
        %v1246 = vsub.f32 1.0, %v1197
        %v1247 = vsub.f32 1.0, %v1199
        %1252 = vrot.lane.b32.xlu0 %v1240, 96
        %v1253 = vpop.permute.xlu0 %1252
        %1254 = vrot.lane.b32.xlu0 %v1241, 96
        %v1255 = vpop.permute.xlu0 %1254
        %1256 = vrot.lane.b32.xlu0 %v1242, 96
        %v1257 = vpop.permute.xlu0 %1256
        %1258 = vrot.lane.b32.xlu0 %v1243, 96
        %v1259 = vpop.permute.xlu0 %1258
        %v1264 = vmul.f32 %v1244, %v1253
        %v1265 = vmul.f32 %v1245, %v1255
        %v1266 = vmul.f32 %v1246, %v1257
        %v1267 = vmul.f32 %v1247, %v1259
        %v1268 = vpack.c.bf16 %v1093, %v1092
        %v1269 = vpack.c.bf16 %v1095, %v1094
        %v1270 = vld [vmem:[%s12] sm:$0xf]
        %v1271 = vld [vmem:[%s12 + $0x4] sm:$0xf]
        %v1272 = vld [vmem:[%s12 + $0x8] sm:$0xf]
        %v1273 = vld [vmem:[%s12 + $0xc] sm:$0xf]
        %v1274 = vld [vmem:[%s13] sm:$0x1]
        %v1276 = vlaneseq
        %v1277 = vshrl.u32 %v1276, 7
        %v1278 = vsub.s32 0, %v1277
        %v1279 = vrot.slane %v1274, %v1278
        %v1285 = vunpack.c.l.b16 %v1270
        %v1286 = vunpack.c.l.b16 %v1271
        %v1287 = vunpack.c.l.b16 %v1272
        %v1288 = vunpack.c.l.b16 %v1273
        %v1289 = vpack.c.b16 %v1286, %v1285
        %v1290 = vpack.c.b16 %v1288, %v1287
        %v1294 = vsel %vm831, %v1268, 0
        %v1297 = vsel %vm831, %v1269, 0
        %1299 = vmatprep.subr.bf16.mxu0 0
        %1300 = vmatpush1.bf16.msra.mxu0 %v1289
        %1301 = vmatprep.subr.bf16.mxu0 0
        %1302 = vmatpush1.bf16.msra.mxu0 %v1290
        %1303 = vmatprep.subr.bf16.mxu0 0
        %1304 = vmatpush1.bf16.msra.mxu0 0
        %1305 = vmatprep.subr.bf16.mxu0 0
        %1306 = vmatpush1.bf16.msra.mxu0 0
        %1307 = vmatprep.subr.bf16.mxu0 0
        %1308 = vmatpush1.bf16.msra.mxu0 0
        %1309 = vmatprep.subr.bf16.mxu0 0
        %1310 = vmatpush1.bf16.msra.mxu0 0
        %1311 = vmatprep.subr.bf16.mxu0 0
        %1312 = vmatpush1.bf16.msra.mxu0 0
        %1313 = vmatprep.subr.bf16.mxu0 0
        %1314 = vmatpush1.bf16.msra.mxu0 0
        %1315 = vmatprep.subr.bf16.mxu0 0
        %1316 = vmatpush1.bf16.msra.mxu0 0
        %1317 = vmatprep.subr.bf16.mxu0 0
        %1318 = vmatpush1.bf16.msra.mxu0 0
        %1319 = vmatprep.subr.bf16.mxu0 0
        %1320 = vmatpush1.bf16.msra.mxu0 0
        %1321 = vmatprep.subr.bf16.mxu0 0
        %1322 = vmatpush1.bf16.msra.mxu0 0
        %1323 = vmatprep.subr.bf16.mxu0 0
        %1324 = vmatpush1.bf16.msra.mxu0 0
        %1325 = vmatprep.subr.bf16.mxu0 0
        %1326 = vmatpush1.bf16.msra.mxu0 0
        %1327 = vmatprep.subr.bf16.mxu0 0
        %1328 = vmatpush1.bf16.msra.mxu0 0
        %1329 = vmatprep.subr.bf16.mxu0 0
        %1330 = vmatpush1.bf16.msra.mxu0 0
        %1331 = vmatprep.mubr.bf16.mxu0 0
        %1332 = vmatmul.mubr.bf16.gmra.mrb[0].mxu0 %v1294
        %v1333 = vpop.f32.mrb[0].mxu0
        %v1334 = vadd.f32 %v1279, %v1333
        %v1335 = vpop.f32.mrb[0].mxu0
        %v1336 = vpop.f32.mrb[0].mxu0
        %v1337 = vadd.f32 %v1279, %v1336
        %v1338 = vpop.f32.mrb[0].mxu0
        %1339 = vmatprep.mubr.bf16.mxu0 0
        %1340 = vmatmul.mubr.bf16.gmra.mrb[0].mxu0 %v1297
        %v1341 = vpop.f32.mrb[0].mxu0
        %v1342 = vadd.f32 %v1279, %v1341
        %v1343 = vpop.f32.mrb[0].mxu0
        %v1344 = vpop.f32.mrb[0].mxu0
        %v1345 = vadd.f32 %v1279, %v1344
        %v1346 = vpop.f32.mrb[0].mxu0
        %1347 = vdwg.mxu0
        %v1348 = vxor.u32 %v1334, 2147483648
        %v1349 = vxor.u32 %v1337, 2147483648
        %v1350 = vxor.u32 %v1342, 2147483648
        %v1351 = vxor.u32 %v1345, 2147483648
        %v1352 = vmul.f32 %v1348, 1.442695
        %v1353 = vpow.pop %v1352
        %v1354 = vmul.f32 %v1349, 1.442695
        %v1355 = vpow.pop %v1354
        %v1356 = vmul.f32 %v1350, 1.442695
        %v1357 = vpow.pop %v1356
        %v1358 = vmul.f32 %v1351, 1.442695
        %v1359 = vpow.pop %v1358
        %v1360 = vadd.f32 %v1353, 1.0
        %v1361 = vadd.f32 %v1355, 1.0
        %v1362 = vadd.f32 %v1357, 1.0
        %v1363 = vadd.f32 %v1359, 1.0
        %v1364 = vrcp.pop %v1360
        %v1365 = vmul.f32 1.0, %v1364
        %v1366 = vrcp.pop %v1361
        %v1367 = vmul.f32 1.0, %v1366
        %v1368 = vrcp.pop %v1362
        %v1369 = vmul.f32 1.0, %v1368
        %v1370 = vrcp.pop %v1363
        %v1371 = vmul.f32 1.0, %v1370
        %1376 = vrot.lane.b32.xlu0 %v1334, 32
        %v1377 = vpop.permute.xlu0 %1376
        %1378 = vrot.lane.b32.xlu0 %v1337, 32
        %v1379 = vpop.permute.xlu0 %1378
        %1380 = vrot.lane.b32.xlu0 %v1342, 32
        %v1381 = vpop.permute.xlu0 %1380
        %1382 = vrot.lane.b32.xlu0 %v1345, 32
        %v1383 = vpop.permute.xlu0 %1382
        %v1388 = vmul.f32 %v1365, %v1377
        %v1389 = vmul.f32 %v1367, %v1379
        %v1390 = vmul.f32 %v1369, %v1381
        %v1391 = vmul.f32 %v1371, %v1383
        %1396 = vrot.lane.b32.xlu0 %v1388, 64
        %v1397 = vpop.permute.xlu0 %1396
        %1398 = vrot.lane.b32.xlu0 %v1389, 64
        %v1399 = vpop.permute.xlu0 %1398
        %1400 = vrot.lane.b32.xlu0 %v1390, 64
        %v1401 = vpop.permute.xlu0 %1400
        %1402 = vrot.lane.b32.xlu0 %v1391, 64
        %v1403 = vpop.permute.xlu0 %1402
        %v1408 = vadd.f32 %v1334, %v1397
        %v1409 = vadd.f32 %v1337, %v1399
        %v1410 = vadd.f32 %v1342, %v1401
        %v1411 = vadd.f32 %v1345, %v1403
        %v1412 = vtanh.pop %v1408
        %v1413 = vtanh.pop %v1409
        %v1414 = vtanh.pop %v1410
        %v1415 = vtanh.pop %v1411
        %v1416 = vsub.f32 1.0, %v1365
        %v1417 = vsub.f32 1.0, %v1367
        %v1418 = vsub.f32 1.0, %v1369
        %v1419 = vsub.f32 1.0, %v1371
        %1424 = vrot.lane.b32.xlu0 %v1412, 96
        %v1425 = vpop.permute.xlu0 %1424
        %1426 = vrot.lane.b32.xlu0 %v1413, 96
        %v1427 = vpop.permute.xlu0 %1426
        %1428 = vrot.lane.b32.xlu0 %v1414, 96
        %v1429 = vpop.permute.xlu0 %1428
        %1430 = vrot.lane.b32.xlu0 %v1415, 96
        %v1431 = vpop.permute.xlu0 %1430
        %v1436 = vmul.f32 %v1416, %v1425
        %v1437 = vmul.f32 %v1417, %v1427
        %v1438 = vmul.f32 %v1418, %v1429
        %v1439 = vmul.f32 %v1419, %v1431
        %v1440 = vpack.c.bf16 %v1265, %v1264
        %v1441 = vpack.c.bf16 %v1267, %v1266
        %1444 = vrot.lane.b32.xlu0 %v1440, 96
        %v1445 = vpop.permute.xlu0 %1444
        %1446 = vrot.lane.b32.xlu0 %v1441, 96
        %v1447 = vpop.permute.xlu0 %1446
        %v1451 = vsel %vm831, %v766, 0
        %v1454 = vsel %vm831, %v767, 0
        %1456 = vmatprep.subr.bf16.mxu0 0
        %1457 = vmatpush1.bf16.msra.mxu0 %v1445
        %1458 = vmatprep.subr.bf16.mxu0 0
        %1459 = vmatpush1.bf16.msra.mxu0 %v1447
        %1460 = vmatprep.subr.bf16.mxu0 0
        %1461 = vmatpush1.bf16.msra.mxu0 0
        %1462 = vmatprep.subr.bf16.mxu0 0
        %1463 = vmatpush1.bf16.msra.mxu0 0
        %1464 = vmatprep.subr.bf16.mxu0 0
        %1465 = vmatpush1.bf16.msra.mxu0 0
        %1466 = vmatprep.subr.bf16.mxu0 0
        %1467 = vmatpush1.bf16.msra.mxu0 0
        %1468 = vmatprep.subr.bf16.mxu0 0
        %1469 = vmatpush1.bf16.msra.mxu0 0
        %1470 = vmatprep.subr.bf16.mxu0 0
        %1471 = vmatpush1.bf16.msra.mxu0 0
        %1472 = vmatprep.subr.bf16.mxu0 0
        %1473 = vmatpush1.bf16.msra.mxu0 0
        %1474 = vmatprep.subr.bf16.mxu0 0
        %1475 = vmatpush1.bf16.msra.mxu0 0
        %1476 = vmatprep.subr.bf16.mxu0 0
        %1477 = vmatpush1.bf16.msra.mxu0 0
        %1478 = vmatprep.subr.bf16.mxu0 0
        %1479 = vmatpush1.bf16.msra.mxu0 0
        %1480 = vmatprep.subr.bf16.mxu0 0
        %1481 = vmatpush1.bf16.msra.mxu0 0
        %1482 = vmatprep.subr.bf16.mxu0 0
        %1483 = vmatpush1.bf16.msra.mxu0 0
        %1484 = vmatprep.subr.bf16.mxu0 0
        %1485 = vmatpush1.bf16.msra.mxu0 0
        %1486 = vmatprep.subr.bf16.mxu0 0
        %1487 = vmatpush1.bf16.msra.mxu0 0
        %1488 = vmatprep.mubr.bf16.mxu0 0
        %1489 = vmatmul.mubr.bf16.gmra.mrb[0].mxu0 %v1451
        %v1490 = vpop.f32.mrb[0].mxu0
        %v1491 = vadd.f32 0.0, %v1490
        %v1492 = vpop.f32.mrb[0].mxu0
        %v1493 = vpop.f32.mrb[0].mxu0
        %v1494 = vadd.f32 0.0, %v1493
        %v1495 = vpop.f32.mrb[0].mxu0
        %1496 = vmatprep.mubr.bf16.mxu0 0
        %1497 = vmatmul.mubr.bf16.gmra.mrb[0].mxu0 %v1454
        %v1498 = vpop.f32.mrb[0].mxu0
        %v1499 = vadd.f32 0.0, %v1498
        %v1500 = vpop.f32.mrb[0].mxu0
        %v1501 = vpop.f32.mrb[0].mxu0
        %v1502 = vadd.f32 0.0, %v1501
        %v1503 = vpop.f32.mrb[0].mxu0
        %1504 = vdwg.mxu0
        %v1506 = vsel %vm831, %v792, 0
        %v1509 = vsel %vm831, %v793, 0
        %1511 = vmatprep.subr.bf16.mxu0 0
        %1512 = vmatpush1.bf16.msra.mxu0 %v1445
        %1513 = vmatprep.subr.bf16.mxu0 0
        %1514 = vmatpush1.bf16.msra.mxu0 %v1447
        %1515 = vmatprep.subr.bf16.mxu0 0
        %1516 = vmatpush1.bf16.msra.mxu0 0
        %1517 = vmatprep.subr.bf16.mxu0 0
        %1518 = vmatpush1.bf16.msra.mxu0 0
        %1519 = vmatprep.subr.bf16.mxu0 0
        %1520 = vmatpush1.bf16.msra.mxu0 0
        %1521 = vmatprep.subr.bf16.mxu0 0
        %1522 = vmatpush1.bf16.msra.mxu0 0
        %1523 = vmatprep.subr.bf16.mxu0 0
        %1524 = vmatpush1.bf16.msra.mxu0 0
        %1525 = vmatprep.subr.bf16.mxu0 0
        %1526 = vmatpush1.bf16.msra.mxu0 0
        %1527 = vmatprep.subr.bf16.mxu0 0
        %1528 = vmatpush1.bf16.msra.mxu0 0
        %1529 = vmatprep.subr.bf16.mxu0 0
        %1530 = vmatpush1.bf16.msra.mxu0 0
        %1531 = vmatprep.subr.bf16.mxu0 0
        %1532 = vmatpush1.bf16.msra.mxu0 0
        %1533 = vmatprep.subr.bf16.mxu0 0
        %1534 = vmatpush1.bf16.msra.mxu0 0
        %1535 = vmatprep.subr.bf16.mxu0 0
        %1536 = vmatpush1.bf16.msra.mxu0 0
        %1537 = vmatprep.subr.bf16.mxu0 0
        %1538 = vmatpush1.bf16.msra.mxu0 0
        %1539 = vmatprep.subr.bf16.mxu0 0
        %1540 = vmatpush1.bf16.msra.mxu0 0
        %1541 = vmatprep.subr.bf16.mxu0 0
        %1542 = vmatpush1.bf16.msra.mxu0 0
        %1543 = vmatprep.mubr.bf16.mxu0 0
        %1544 = vmatmul.mubr.bf16.gmra.mrb[0].mxu0 %v1506
        %v1545 = vpop.f32.mrb[0].mxu0
        %v1546 = vadd.f32 0.0, %v1545
        %v1547 = vpop.f32.mrb[0].mxu0
        %v1548 = vpop.f32.mrb[0].mxu0
        %v1549 = vadd.f32 0.0, %v1548
        %v1550 = vpop.f32.mrb[0].mxu0
        %1551 = vmatprep.mubr.bf16.mxu0 0
        %1552 = vmatmul.mubr.bf16.gmra.mrb[0].mxu0 %v1509
        %v1553 = vpop.f32.mrb[0].mxu0
        %v1554 = vadd.f32 0.0, %v1553
        %v1555 = vpop.f32.mrb[0].mxu0
        %v1556 = vpop.f32.mrb[0].mxu0
        %v1557 = vadd.f32 0.0, %v1556
        %v1558 = vpop.f32.mrb[0].mxu0
        %1559 = vdwg.mxu0
        %1564 = vrot.lane.b32.xlu0 %v1546, 32
        %v1565 = vpop.permute.xlu0 %1564
        %1566 = vrot.lane.b32.xlu0 %v1549, 32
        %v1567 = vpop.permute.xlu0 %1566
        %1568 = vrot.lane.b32.xlu0 %v1554, 32
        %v1569 = vpop.permute.xlu0 %1568
        %1570 = vrot.lane.b32.xlu0 %v1557, 32
        %v1571 = vpop.permute.xlu0 %1570
        %1580 = vrot.lane.b32.xlu0 %v1436, 32
        %v1581 = vpop.permute.xlu0 %1580
        %1582 = vrot.lane.b32.xlu0 %v1437, 32
        %v1583 = vpop.permute.xlu0 %1582
        %1584 = vrot.lane.b32.xlu0 %v1438, 32
        %v1585 = vpop.permute.xlu0 %1584
        %1586 = vrot.lane.b32.xlu0 %v1439, 32
        %v1587 = vpop.permute.xlu0 %1586
        %v1592 = vsel %vm831, %v1491, %v1565
        %v1593 = vsel %vm831, %v1494, %v1567
        %v1594 = vsel %vm831, %v1499, %v1569
        %v1595 = vsel %vm831, %v1502, %v1571
        %v1596 = vsel %vm940, %v1592, %v1581
        %v1597 = vsel %vm940, %v1593, %v1583
        %v1598 = vsel %vm940, %v1594, %v1585
        %v1599 = vsel %vm940, %v1595, %v1587
        %v1600 = vpack.c.bf16 %v1597, %v1596
        %v1601 = vpack.c.bf16 %v1599, %v1598
        %v1602 = vld [vmem:[%s14] sm:$0xf]
        %v1603 = vld [vmem:[%s14 + $0x4] sm:$0xf]
        %v1604 = vld [vmem:[%s14 + $0x8] sm:$0xf]
        %v1605 = vld [vmem:[%s14 + $0xc] sm:$0xf]
        %v1606 = vld [vmem:[%s14 + $0x10] sm:$0xf]
        %v1607 = vld [vmem:[%s14 + $0x14] sm:$0xf]
        %v1608 = vld [vmem:[%s14 + $0x18] sm:$0xf]
        %v1609 = vld [vmem:[%s14 + $0x1c] sm:$0xf]
        %v1610 = vld [vmem:[%s14 + $0x20] sm:$0xf]
        %v1611 = vld [vmem:[%s14 + $0x24] sm:$0xf]
        %v1612 = vld [vmem:[%s14 + $0x28] sm:$0xf]
        %v1613 = vld [vmem:[%s14 + $0x2c] sm:$0xf]
        %v1614 = vld [vmem:[%s15] sm:$0x1]
        %v1616 = vlaneseq
        %v1617 = vshrl.u32 %v1616, 7
        %v1618 = vsub.s32 0, %v1617
        %v1619 = vrot.slane %v1614, %v1618
        %v1633 = vunpack.c.l.b16 %v1602
        %v1634 = vunpack.c.l.b16 %v1603
        %v1635 = vunpack.c.l.b16 %v1604
        %v1636 = vunpack.c.l.b16 %v1605
        %v1637 = vunpack.c.l.b16 %v1606
        %v1638 = vunpack.c.l.b16 %v1607
        %v1639 = vunpack.c.l.b16 %v1608
        %v1640 = vunpack.c.l.b16 %v1609
        %v1641 = vunpack.c.l.b16 %v1610
        %v1642 = vunpack.c.l.b16 %v1611
        %v1643 = vunpack.c.l.b16 %v1612
        %v1644 = vunpack.c.l.b16 %v1613
        %v1645 = vpack.c.b16 %v1634, %v1633
        %v1646 = vpack.c.b16 %v1636, %v1635
        %v1647 = vpack.c.b16 %v1638, %v1637
        %v1648 = vpack.c.b16 %v1640, %v1639
        %v1649 = vpack.c.b16 %v1642, %v1641
        %v1650 = vpack.c.b16 %v1644, %v1643
        %vm1657 = vcmask 785408
        %v1659 = vsel %vm1657, %v1600, 0
        %v1662 = vsel %vm1657, %v1601, 0
        %1664 = vmatprep.subr.bf16.mxu0 0
        %1665 = vmatpush1.bf16.msra.mxu0 %v1645
        %1666 = vmatprep.subr.bf16.mxu0 0
        %1667 = vmatpush1.bf16.msra.mxu0 %v1646
        %1668 = vmatprep.subr.bf16.mxu0 0
        %1669 = vmatpush1.bf16.msra.mxu0 %v1647
        %1670 = vmatprep.subr.bf16.mxu0 0
        %1671 = vmatpush1.bf16.msra.mxu0 %v1648
        %1672 = vmatprep.subr.bf16.mxu0 0
        %1673 = vmatpush1.bf16.msra.mxu0 %v1649
        %1674 = vmatprep.subr.bf16.mxu0 0
        %1675 = vmatpush1.bf16.msra.mxu0 %v1650
        %1676 = vmatprep.subr.bf16.mxu0 0
        %1677 = vmatpush1.bf16.msra.mxu0 0
        %1678 = vmatprep.subr.bf16.mxu0 0
        %1679 = vmatpush1.bf16.msra.mxu0 0
        %1680 = vmatprep.subr.bf16.mxu0 0
        %1681 = vmatpush1.bf16.msra.mxu0 0
        %1682 = vmatprep.subr.bf16.mxu0 0
        %1683 = vmatpush1.bf16.msra.mxu0 0
        %1684 = vmatprep.subr.bf16.mxu0 0
        %1685 = vmatpush1.bf16.msra.mxu0 0
        %1686 = vmatprep.subr.bf16.mxu0 0
        %1687 = vmatpush1.bf16.msra.mxu0 0
        %1688 = vmatprep.subr.bf16.mxu0 0
        %1689 = vmatpush1.bf16.msra.mxu0 0
        %1690 = vmatprep.subr.bf16.mxu0 0
        %1691 = vmatpush1.bf16.msra.mxu0 0
        %1692 = vmatprep.subr.bf16.mxu0 0
        %1693 = vmatpush1.bf16.msra.mxu0 0
        %1694 = vmatprep.subr.bf16.mxu0 0
        %1695 = vmatpush1.bf16.msra.mxu0 0
        %1696 = vmatprep.mubr.bf16.mxu0 0
        %1697 = vmatmul.mubr.bf16.gmra.mrb[0].mxu0 %v1659
        %v1698 = vpop.f32.mrb[0].mxu0
        %v1699 = vadd.f32 %v1619, %v1698
        %v1700 = vpop.f32.mrb[0].mxu0
        %v1701 = vpop.f32.mrb[0].mxu0
        %v1702 = vadd.f32 %v1619, %v1701
        %v1703 = vpop.f32.mrb[0].mxu0
        %1704 = vmatprep.mubr.bf16.mxu0 0
        %1705 = vmatmul.mubr.bf16.gmra.mrb[0].mxu0 %v1662
        %v1706 = vpop.f32.mrb[0].mxu0
        %v1707 = vadd.f32 %v1619, %v1706
        %v1708 = vpop.f32.mrb[0].mxu0
        %v1709 = vpop.f32.mrb[0].mxu0
        %v1710 = vadd.f32 %v1619, %v1709
        %v1711 = vpop.f32.mrb[0].mxu0
        %1712 = vdwg.mxu0
        %v1713 = vxor.u32 %v1699, 2147483648
        %v1714 = vxor.u32 %v1702, 2147483648
        %v1715 = vxor.u32 %v1707, 2147483648
        %v1716 = vxor.u32 %v1710, 2147483648
        %v1717 = vmul.f32 %v1713, 1.442695
        %v1718 = vpow.pop %v1717
        %v1719 = vmul.f32 %v1714, 1.442695
        %v1720 = vpow.pop %v1719
        %v1721 = vmul.f32 %v1715, 1.442695
        %v1722 = vpow.pop %v1721
        %v1723 = vmul.f32 %v1716, 1.442695
        %v1724 = vpow.pop %v1723
        %v1725 = vadd.f32 %v1718, 1.0
        %v1726 = vadd.f32 %v1720, 1.0
        %v1727 = vadd.f32 %v1722, 1.0
        %v1728 = vadd.f32 %v1724, 1.0
        %v1729 = vrcp.pop %v1725
        %v1730 = vmul.f32 1.0, %v1729
        %v1731 = vrcp.pop %v1726
        %v1732 = vmul.f32 1.0, %v1731
        %v1733 = vrcp.pop %v1727
        %v1734 = vmul.f32 1.0, %v1733
        %v1735 = vrcp.pop %v1728
        %v1736 = vmul.f32 1.0, %v1735
        %1738 = vset.pattern.permute.xlu0 0
        %1739 = vperm.xlu0 %1738, %v1730
        %v1740 = vpop.permute.xlu0 %1739
        %1743 = vset.pattern.permute.xlu0 0
        %1744 = vperm.xlu0 %1743, %v1732
        %v1745 = vpop.permute.xlu0 %1744
        %1748 = vset.pattern.permute.xlu0 0
        %1749 = vperm.xlu0 %1748, %v1734
        %v1750 = vpop.permute.xlu0 %1749
        %1753 = vset.pattern.permute.xlu0 0
        %1754 = vperm.xlu0 %1753, %v1736
        %v1755 = vpop.permute.xlu0 %1754
        %v1757 = vmul.f32 %v1740, %v1491
        %v1758 = vmul.f32 %v1745, %v1494
        %v1759 = vmul.f32 %v1750, %v1499
        %v1760 = vmul.f32 %v1755, %v1502
        %1761 = vset.pattern.permute.xlu0 1
        %1762 = vperm.xlu0 %1761, %v1730
        %v1763 = vpop.permute.xlu0 %1762
        %1765 = vset.pattern.permute.xlu0 1
        %1766 = vperm.xlu0 %1765, %v1732
        %v1767 = vpop.permute.xlu0 %1766
        %1769 = vset.pattern.permute.xlu0 1
        %1770 = vperm.xlu0 %1769, %v1734
        %v1771 = vpop.permute.xlu0 %1770
        %1773 = vset.pattern.permute.xlu0 1
        %1774 = vperm.xlu0 %1773, %v1736
        %v1775 = vpop.permute.xlu0 %1774
        %v1777 = vmul.f32 %v1763, %v1546
        %v1778 = vmul.f32 %v1767, %v1549
        %v1779 = vmul.f32 %v1771, %v1554
        %v1780 = vmul.f32 %v1775, %v1557
        %v1781 = vadd.f32 %v1757, %v1777
        %v1782 = vadd.f32 %v1758, %v1778
        %v1783 = vadd.f32 %v1759, %v1779
        %v1784 = vadd.f32 %v1760, %v1780
        %v1785 = vsel %vm831, %v1781, %v1436
        %v1786 = vsel %vm831, %v1782, %v1437
        %v1787 = vsel %vm831, %v1783, %v1438
        %v1788 = vsel %vm831, %v1784, %v1439
        %v1789 = vpack.c.bf16 %v1786, %v1785
        %v1790 = vpack.c.bf16 %v1788, %v1787
        %v1791 = vld [vmem:[%s12] sm:$0xf]
        %v1792 = vld [vmem:[%s12 + $0x4] sm:$0xf]
        %v1793 = vld [vmem:[%s12 + $0x8] sm:$0xf]
        %v1794 = vld [vmem:[%s12 + $0xc] sm:$0xf]
        %v1795 = vld [vmem:[%s12 + $0x10] sm:$0xf]
        %v1796 = vld [vmem:[%s12 + $0x14] sm:$0xf]
        %v1797 = vld [vmem:[%s12 + $0x18] sm:$0xf]
        %v1798 = vld [vmem:[%s12 + $0x1c] sm:$0xf]
        %v1807 = vunpack.c.l.b16 %v1791
        %v1808 = vunpack.c.l.b16 %v1792
        %v1809 = vunpack.c.l.b16 %v1793
        %v1810 = vunpack.c.l.b16 %v1794
        %v1811 = vunpack.c.l.b16 %v1795
        %v1812 = vunpack.c.l.b16 %v1796
        %v1813 = vunpack.c.l.b16 %v1797
        %v1814 = vunpack.c.l.b16 %v1798
        %v1815 = vpack.c.b16 %v1808, %v1807
        %v1816 = vpack.c.b16 %v1810, %v1809
        %v1817 = vpack.c.b16 %v1812, %v1811
        %v1818 = vpack.c.b16 %v1814, %v1813
        %v1824 = vsel %vm940, %v1789, 0
        %v1827 = vsel %vm940, %v1790, 0
        %1829 = vmatprep.subr.bf16.mxu0 0
        %1830 = vmatpush1.bf16.msra.mxu0 %v1815
        %1831 = vmatprep.subr.bf16.mxu0 0
        %1832 = vmatpush1.bf16.msra.mxu0 %v1816
        %1833 = vmatprep.subr.bf16.mxu0 0
        %1834 = vmatpush1.bf16.msra.mxu0 %v1817
        %1835 = vmatprep.subr.bf16.mxu0 0
        %1836 = vmatpush1.bf16.msra.mxu0 %v1818
        %1837 = vmatprep.subr.bf16.mxu0 0
        %1838 = vmatpush1.bf16.msra.mxu0 0
        %1839 = vmatprep.subr.bf16.mxu0 0
        %1840 = vmatpush1.bf16.msra.mxu0 0
        %1841 = vmatprep.subr.bf16.mxu0 0
        %1842 = vmatpush1.bf16.msra.mxu0 0
        %1843 = vmatprep.subr.bf16.mxu0 0
        %1844 = vmatpush1.bf16.msra.mxu0 0
        %1845 = vmatprep.subr.bf16.mxu0 0
        %1846 = vmatpush1.bf16.msra.mxu0 0
        %1847 = vmatprep.subr.bf16.mxu0 0
        %1848 = vmatpush1.bf16.msra.mxu0 0
        %1849 = vmatprep.subr.bf16.mxu0 0
        %1850 = vmatpush1.bf16.msra.mxu0 0
        %1851 = vmatprep.subr.bf16.mxu0 0
        %1852 = vmatpush1.bf16.msra.mxu0 0
        %1853 = vmatprep.subr.bf16.mxu0 0
        %1854 = vmatpush1.bf16.msra.mxu0 0
        %1855 = vmatprep.subr.bf16.mxu0 0
        %1856 = vmatpush1.bf16.msra.mxu0 0
        %1857 = vmatprep.subr.bf16.mxu0 0
        %1858 = vmatpush1.bf16.msra.mxu0 0
        %1859 = vmatprep.subr.bf16.mxu0 0
        %1860 = vmatpush1.bf16.msra.mxu0 0
        %1861 = vmatprep.mubr.bf16.mxu0 0
        %1862 = vmatmul.mubr.bf16.gmra.mrb[0].mxu0 %v1824
        %v1863 = vpop.f32.mrb[0].mxu0
        %v1864 = vadd.f32 %v1279, %v1863
        %v1865 = vpop.f32.mrb[0].mxu0
        %v1866 = vpop.f32.mrb[0].mxu0
        %v1867 = vadd.f32 %v1279, %v1866
        %v1868 = vpop.f32.mrb[0].mxu0
        %1869 = vmatprep.mubr.bf16.mxu0 0
        %1870 = vmatmul.mubr.bf16.gmra.mrb[0].mxu0 %v1827
        %v1871 = vpop.f32.mrb[0].mxu0
        %v1872 = vadd.f32 %v1279, %v1871
        %v1873 = vpop.f32.mrb[0].mxu0
        %v1874 = vpop.f32.mrb[0].mxu0
        %v1875 = vadd.f32 %v1279, %v1874
        %v1876 = vpop.f32.mrb[0].mxu0
        %1877 = vdwg.mxu0
        %v1878 = vxor.u32 %v1864, 2147483648
        %v1879 = vxor.u32 %v1867, 2147483648
        %v1880 = vxor.u32 %v1872, 2147483648
        %v1881 = vxor.u32 %v1875, 2147483648
        %v1882 = vmul.f32 %v1878, 1.442695
        %v1883 = vpow.pop %v1882
        %v1884 = vmul.f32 %v1879, 1.442695
        %v1885 = vpow.pop %v1884
        %v1886 = vmul.f32 %v1880, 1.442695
        %v1887 = vpow.pop %v1886
        %v1888 = vmul.f32 %v1881, 1.442695
        %v1889 = vpow.pop %v1888
        %v1890 = vadd.f32 %v1883, 1.0
        %v1891 = vadd.f32 %v1885, 1.0
        %v1892 = vadd.f32 %v1887, 1.0
        %v1893 = vadd.f32 %v1889, 1.0
        %v1894 = vrcp.pop %v1890
        %v1895 = vmul.f32 1.0, %v1894
        %v1896 = vrcp.pop %v1891
        %v1897 = vmul.f32 1.0, %v1896
        %v1898 = vrcp.pop %v1892
        %v1899 = vmul.f32 1.0, %v1898
        %v1900 = vrcp.pop %v1893
        %v1901 = vmul.f32 1.0, %v1900
        %1906 = vrot.lane.b32.xlu0 %v1864, 32
        %v1907 = vpop.permute.xlu0 %1906
        %1908 = vrot.lane.b32.xlu0 %v1867, 32
        %v1909 = vpop.permute.xlu0 %1908
        %1910 = vrot.lane.b32.xlu0 %v1872, 32
        %v1911 = vpop.permute.xlu0 %1910
        %1912 = vrot.lane.b32.xlu0 %v1875, 32
        %v1913 = vpop.permute.xlu0 %1912
        %v1918 = vmul.f32 %v1895, %v1907
        %v1919 = vmul.f32 %v1897, %v1909
        %v1920 = vmul.f32 %v1899, %v1911
        %v1921 = vmul.f32 %v1901, %v1913
        %1926 = vrot.lane.b32.xlu0 %v1918, 64
        %v1927 = vpop.permute.xlu0 %1926
        %1928 = vrot.lane.b32.xlu0 %v1919, 64
        %v1929 = vpop.permute.xlu0 %1928
        %1930 = vrot.lane.b32.xlu0 %v1920, 64
        %v1931 = vpop.permute.xlu0 %1930
        %1932 = vrot.lane.b32.xlu0 %v1921, 64
        %v1933 = vpop.permute.xlu0 %1932
        %v1938 = vadd.f32 %v1864, %v1927
        %v1939 = vadd.f32 %v1867, %v1929
        %v1940 = vadd.f32 %v1872, %v1931
        %v1941 = vadd.f32 %v1875, %v1933
        %v1942 = vtanh.pop %v1938
        %v1943 = vtanh.pop %v1939
        %v1944 = vtanh.pop %v1940
        %v1945 = vtanh.pop %v1941
        %v1946 = vsub.f32 1.0, %v1895
        %v1947 = vsub.f32 1.0, %v1897
        %v1948 = vsub.f32 1.0, %v1899
        %v1949 = vsub.f32 1.0, %v1901
        %1954 = vrot.lane.b32.xlu0 %v1942, 96
        %v1955 = vpop.permute.xlu0 %1954
        %1956 = vrot.lane.b32.xlu0 %v1943, 96
        %v1957 = vpop.permute.xlu0 %1956
        %1958 = vrot.lane.b32.xlu0 %v1944, 96
        %v1959 = vpop.permute.xlu0 %1958
        %1960 = vrot.lane.b32.xlu0 %v1945, 96
        %v1961 = vpop.permute.xlu0 %1960
        %v1966 = vmul.f32 %v1946, %v1955
        %v1967 = vmul.f32 %v1947, %v1957
        %v1968 = vmul.f32 %v1948, %v1959
        %v1969 = vmul.f32 %v1949, %v1961
        %v1970 = vmul.f32 %v1895, %v1436
        %v1971 = vmul.f32 %v1897, %v1437
        %v1972 = vmul.f32 %v1899, %v1438
        %v1973 = vmul.f32 %v1901, %v1439
        %v1974 = vadd.f32 %v1966, %v1970
        %v1975 = vadd.f32 %v1967, %v1971
        %v1976 = vadd.f32 %v1968, %v1972
        %v1977 = vadd.f32 %v1969, %v1973
        %1978 = vset.pattern.permute.xlu0 2
        %1979 = vperm.xlu0 %1978, %v1730
        %v1980 = vpop.permute.xlu0 %1979
        %1982 = vset.pattern.permute.xlu0 2
        %1983 = vperm.xlu0 %1982, %v1732
        %v1984 = vpop.permute.xlu0 %1983
        %1986 = vset.pattern.permute.xlu0 2
        %1987 = vperm.xlu0 %1986, %v1734
        %v1988 = vpop.permute.xlu0 %1987
        %1990 = vset.pattern.permute.xlu0 2
        %1991 = vperm.xlu0 %1990, %v1736
        %v1992 = vpop.permute.xlu0 %1991
        %v1994 = vmul.f32 %v1980, %v1436
        %v1995 = vmul.f32 %v1984, %v1437
        %v1996 = vmul.f32 %v1988, %v1438
        %v1997 = vmul.f32 %v1992, %v1439
        %v1998 = vpack.c.bf16 %v1995, %v1994
        %v1999 = vpack.c.bf16 %v1997, %v1996
        %2000 = vset.pattern.permute.xlu0 3
        %2001 = vperm.xlu0 %2000, %v1730
        %v2002 = vpop.permute.xlu0 %2001
        %2004 = vset.pattern.permute.xlu0 3
        %2005 = vperm.xlu0 %2004, %v1732
        %v2006 = vpop.permute.xlu0 %2005
        %2008 = vset.pattern.permute.xlu0 3
        %2009 = vperm.xlu0 %2008, %v1734
        %v2010 = vpop.permute.xlu0 %2009
        %2012 = vset.pattern.permute.xlu0 3
        %2013 = vperm.xlu0 %2012, %v1736
        %v2014 = vpop.permute.xlu0 %2013
        %v2016 = vmul.f32 %v2002, %v1436
        %v2017 = vmul.f32 %v2006, %v1437
        %v2018 = vmul.f32 %v2010, %v1438
        %v2019 = vmul.f32 %v2014, %v1439
        %v2020 = vpack.c.bf16 %v2017, %v2016
        %v2021 = vpack.c.bf16 %v2019, %v2018
        %2022 = vxpose.xlu0.c.b16.start [1/8] %v792, 128
        %2023 = vxpose.xlu0.c.b16.cont [2/8] %v793, 128
        %2024 = vxpose.xlu0.c.b16.cont [3/8] 0, 128
        %2025 = vxpose.xlu0.c.b16.cont [4/8] 0, 128
        %2026 = vxpose.xlu0.c.b16.cont [5/8] 0, 128
        %2027 = vxpose.xlu0.c.b16.cont [6/8] 0, 128
        %2028 = vxpose.xlu0.c.b16.cont [7/8] 0, 128
        %2029 = vxpose.xlu0.c.b16.end [8/8] 0, 128
        %v2030 = vpop.trf.xlu0
        %v2031 = vpop.trf.xlu0
        %v2032 = vpop.trf.xlu0
        %v2033 = vpop.trf.xlu0
        %v2034 = vpop.trf.xlu0
        %v2035 = vpop.trf.xlu0
        %v2036 = vpop.trf.xlu0
        %v2037 = vpop.trf.xlu0
        %2040 = vrot.lane.b32.xlu0 %v2020, 96
        %v2041 = vpop.permute.xlu0 %2040
        %2042 = vrot.lane.b32.xlu0 %v2021, 96
        %v2043 = vpop.permute.xlu0 %2042
        %v2047 = vsel %vm831, %v2030, 0
        %v2050 = vsel %vm831, %v2031, 0
        %2052 = vmatprep.subr.bf16.mxu0 0
        %2053 = vmatpush1.bf16.msra.mxu0 %v2041
        %2054 = vmatprep.subr.bf16.mxu0 0
        %2055 = vmatpush1.bf16.msra.mxu0 %v2043
        %2056 = vmatprep.subr.bf16.mxu0 0
        %2057 = vmatpush1.bf16.msra.mxu0 0
        %2058 = vmatprep.subr.bf16.mxu0 0
        %2059 = vmatpush1.bf16.msra.mxu0 0
        %2060 = vmatprep.subr.bf16.mxu0 0
        %2061 = vmatpush1.bf16.msra.mxu0 0
        %2062 = vmatprep.subr.bf16.mxu0 0
        %2063 = vmatpush1.bf16.msra.mxu0 0
        %2064 = vmatprep.subr.bf16.mxu0 0
        %2065 = vmatpush1.bf16.msra.mxu0 0
        %2066 = vmatprep.subr.bf16.mxu0 0
        %2067 = vmatpush1.bf16.msra.mxu0 0
        %2068 = vmatprep.subr.bf16.mxu0 0
        %2069 = vmatpush1.bf16.msra.mxu0 0
        %2070 = vmatprep.subr.bf16.mxu0 0
        %2071 = vmatpush1.bf16.msra.mxu0 0
        %2072 = vmatprep.subr.bf16.mxu0 0
        %2073 = vmatpush1.bf16.msra.mxu0 0
        %2074 = vmatprep.subr.bf16.mxu0 0
        %2075 = vmatpush1.bf16.msra.mxu0 0
        %2076 = vmatprep.subr.bf16.mxu0 0
        %2077 = vmatpush1.bf16.msra.mxu0 0
        %2078 = vmatprep.subr.bf16.mxu0 0
        %2079 = vmatpush1.bf16.msra.mxu0 0
        %2080 = vmatprep.subr.bf16.mxu0 0
        %2081 = vmatpush1.bf16.msra.mxu0 0
        %2082 = vmatprep.subr.bf16.mxu0 0
        %2083 = vmatpush1.bf16.msra.mxu0 0
        %2084 = vmatprep.mubr.bf16.mxu0 0
        %2085 = vmatmul.mubr.bf16.gmra.mrb[0].mxu0 %v2047
        %v2086 = vpop.f32.mrb[0].mxu0
        %v2087 = vadd.f32 0.0, %v2086
        %v2088 = vpop.f32.mrb[0].mxu0
        %v2089 = vpop.f32.mrb[0].mxu0
        %v2090 = vadd.f32 0.0, %v2089
        %v2091 = vpop.f32.mrb[0].mxu0
        %2092 = vmatprep.mubr.bf16.mxu0 0
        %2093 = vmatmul.mubr.bf16.gmra.mrb[0].mxu0 %v2050
        %v2094 = vpop.f32.mrb[0].mxu0
        %v2095 = vadd.f32 0.0, %v2094
        %v2096 = vpop.f32.mrb[0].mxu0
        %v2097 = vpop.f32.mrb[0].mxu0
        %v2098 = vadd.f32 0.0, %v2097
        %v2099 = vpop.f32.mrb[0].mxu0
        %2100 = vdwg.mxu0
        %2101 = vxpose.xlu0.c.b16.start [1/8] %v766, 128
        %2102 = vxpose.xlu0.c.b16.cont [2/8] %v767, 128
        %2103 = vxpose.xlu0.c.b16.cont [3/8] 0, 128
        %2104 = vxpose.xlu0.c.b16.cont [4/8] 0, 128
        %2105 = vxpose.xlu0.c.b16.cont [5/8] 0, 128
        %2106 = vxpose.xlu0.c.b16.cont [6/8] 0, 128
        %2107 = vxpose.xlu0.c.b16.cont [7/8] 0, 128
        %2108 = vxpose.xlu0.c.b16.end [8/8] 0, 128
        %v2109 = vpop.trf.xlu0
        %v2110 = vpop.trf.xlu0
        %v2111 = vpop.trf.xlu0
        %v2112 = vpop.trf.xlu0
        %v2113 = vpop.trf.xlu0
        %v2114 = vpop.trf.xlu0
        %v2115 = vpop.trf.xlu0
        %v2116 = vpop.trf.xlu0
        %2119 = vrot.lane.b32.xlu0 %v1998, 96
        %v2120 = vpop.permute.xlu0 %2119
        %2121 = vrot.lane.b32.xlu0 %v1999, 96
        %v2122 = vpop.permute.xlu0 %2121
        %v2126 = vsel %vm831, %v2109, 0
        %v2129 = vsel %vm831, %v2110, 0
        %2131 = vmatprep.subr.bf16.mxu0 0
        %2132 = vmatpush1.bf16.msra.mxu0 %v2120
        %2133 = vmatprep.subr.bf16.mxu0 0
        %2134 = vmatpush1.bf16.msra.mxu0 %v2122
        %2135 = vmatprep.subr.bf16.mxu0 0
        %2136 = vmatpush1.bf16.msra.mxu0 0
        %2137 = vmatprep.subr.bf16.mxu0 0
        %2138 = vmatpush1.bf16.msra.mxu0 0
        %2139 = vmatprep.subr.bf16.mxu0 0
        %2140 = vmatpush1.bf16.msra.mxu0 0
        %2141 = vmatprep.subr.bf16.mxu0 0
        %2142 = vmatpush1.bf16.msra.mxu0 0
        %2143 = vmatprep.subr.bf16.mxu0 0
        %2144 = vmatpush1.bf16.msra.mxu0 0
        %2145 = vmatprep.subr.bf16.mxu0 0
        %2146 = vmatpush1.bf16.msra.mxu0 0
        %2147 = vmatprep.subr.bf16.mxu0 0
        %2148 = vmatpush1.bf16.msra.mxu0 0
        %2149 = vmatprep.subr.bf16.mxu0 0
        %2150 = vmatpush1.bf16.msra.mxu0 0
        %2151 = vmatprep.subr.bf16.mxu0 0
        %2152 = vmatpush1.bf16.msra.mxu0 0
        %2153 = vmatprep.subr.bf16.mxu0 0
        %2154 = vmatpush1.bf16.msra.mxu0 0
        %2155 = vmatprep.subr.bf16.mxu0 0
        %2156 = vmatpush1.bf16.msra.mxu0 0
        %2157 = vmatprep.subr.bf16.mxu0 0
        %2158 = vmatpush1.bf16.msra.mxu0 0
        %2159 = vmatprep.subr.bf16.mxu0 0
        %2160 = vmatpush1.bf16.msra.mxu0 0
        %2161 = vmatprep.subr.bf16.mxu0 0
        %2162 = vmatpush1.bf16.msra.mxu0 0
        %2163 = vmatprep.mubr.bf16.mxu0 0
        %2164 = vmatmul.mubr.bf16.gmra.mrb[0].mxu0 %v2126
        %v2165 = vpop.f32.mrb[0].mxu0
        %v2166 = vadd.f32 %v2087, %v2165
        %v2167 = vpop.f32.mrb[0].mxu0
        %v2168 = vpop.f32.mrb[0].mxu0
        %v2169 = vadd.f32 %v2090, %v2168
        %v2170 = vpop.f32.mrb[0].mxu0
        %2171 = vmatprep.mubr.bf16.mxu0 0
        %2172 = vmatmul.mubr.bf16.gmra.mrb[0].mxu0 %v2129
        %v2173 = vpop.f32.mrb[0].mxu0
        %v2174 = vadd.f32 %v2095, %v2173
        %v2175 = vpop.f32.mrb[0].mxu0
        %v2176 = vpop.f32.mrb[0].mxu0
        %v2177 = vadd.f32 %v2098, %v2176
        %v2178 = vpop.f32.mrb[0].mxu0
        %2179 = vdwg.mxu0
        %v2180 = vsel %vm831, %v2166, %v1264
        %v2181 = vsel %vm831, %v2169, %v1265
        %v2182 = vsel %vm831, %v2174, %v1266
        %v2183 = vsel %vm831, %v2177, %v1267
        %v2184 = vpack.c.bf16 %v2181, %v2180
        %v2185 = vpack.c.bf16 %v2183, %v2182
        %v2186 = vld [vmem:[%s10] sm:$0xf]
        %v2187 = vld [vmem:[%s10 + $0x4] sm:$0xf]
        %v2188 = vld [vmem:[%s10 + $0x8] sm:$0xf]
        %v2189 = vld [vmem:[%s10 + $0xc] sm:$0xf]
        %v2190 = vld [vmem:[%s10 + $0x10] sm:$0xf]
        %v2191 = vld [vmem:[%s10 + $0x14] sm:$0xf]
        %v2192 = vld [vmem:[%s10 + $0x18] sm:$0xf]
        %v2193 = vld [vmem:[%s10 + $0x1c] sm:$0xf]
        %v2202 = vunpack.c.l.b16 %v2186
        %v2203 = vunpack.c.l.b16 %v2187
        %v2204 = vunpack.c.l.b16 %v2188
        %v2205 = vunpack.c.l.b16 %v2189
        %v2206 = vunpack.c.l.b16 %v2190
        %v2207 = vunpack.c.l.b16 %v2191
        %v2208 = vunpack.c.l.b16 %v2192
        %v2209 = vunpack.c.l.b16 %v2193
        %v2210 = vpack.c.b16 %v2203, %v2202
        %v2211 = vpack.c.b16 %v2205, %v2204
        %v2212 = vpack.c.b16 %v2207, %v2206
        %v2213 = vpack.c.b16 %v2209, %v2208
        %v2219 = vsel %vm940, %v2184, 0
        %v2222 = vsel %vm940, %v2185, 0
        %2224 = vmatprep.subr.bf16.mxu0 0
        %2225 = vmatpush1.bf16.msra.mxu0 %v2210
        %2226 = vmatprep.subr.bf16.mxu0 0
        %2227 = vmatpush1.bf16.msra.mxu0 %v2211
        %2228 = vmatprep.subr.bf16.mxu0 0
        %2229 = vmatpush1.bf16.msra.mxu0 %v2212
        %2230 = vmatprep.subr.bf16.mxu0 0
        %2231 = vmatpush1.bf16.msra.mxu0 %v2213
        %2232 = vmatprep.subr.bf16.mxu0 0
        %2233 = vmatpush1.bf16.msra.mxu0 0
        %2234 = vmatprep.subr.bf16.mxu0 0
        %2235 = vmatpush1.bf16.msra.mxu0 0
        %2236 = vmatprep.subr.bf16.mxu0 0
        %2237 = vmatpush1.bf16.msra.mxu0 0
        %2238 = vmatprep.subr.bf16.mxu0 0
        %2239 = vmatpush1.bf16.msra.mxu0 0
        %2240 = vmatprep.subr.bf16.mxu0 0
        %2241 = vmatpush1.bf16.msra.mxu0 0
        %2242 = vmatprep.subr.bf16.mxu0 0
        %2243 = vmatpush1.bf16.msra.mxu0 0
        %2244 = vmatprep.subr.bf16.mxu0 0
        %2245 = vmatpush1.bf16.msra.mxu0 0
        %2246 = vmatprep.subr.bf16.mxu0 0
        %2247 = vmatpush1.bf16.msra.mxu0 0
        %2248 = vmatprep.subr.bf16.mxu0 0
        %2249 = vmatpush1.bf16.msra.mxu0 0
        %2250 = vmatprep.subr.bf16.mxu0 0
        %2251 = vmatpush1.bf16.msra.mxu0 0
        %2252 = vmatprep.subr.bf16.mxu0 0
        %2253 = vmatpush1.bf16.msra.mxu0 0
        %2254 = vmatprep.subr.bf16.mxu0 0
        %2255 = vmatpush1.bf16.msra.mxu0 0
        %2256 = vmatprep.mubr.bf16.mxu0 0
        %2257 = vmatmul.mubr.bf16.gmra.mrb[0].mxu0 %v2219
        %v2258 = vpop.f32.mrb[0].mxu0
        %v2259 = vadd.f32 %v1107, %v2258
        %v2260 = vpop.f32.mrb[0].mxu0
        %v2261 = vpop.f32.mrb[0].mxu0
        %v2262 = vadd.f32 %v1107, %v2261
        %v2263 = vpop.f32.mrb[0].mxu0
        %2264 = vmatprep.mubr.bf16.mxu0 0
        %2265 = vmatmul.mubr.bf16.gmra.mrb[0].mxu0 %v2222
        %v2266 = vpop.f32.mrb[0].mxu0
        %v2267 = vadd.f32 %v1107, %v2266
        %v2268 = vpop.f32.mrb[0].mxu0
        %v2269 = vpop.f32.mrb[0].mxu0
        %v2270 = vadd.f32 %v1107, %v2269
        %v2271 = vpop.f32.mrb[0].mxu0
        %2272 = vdwg.mxu0
        %v2273 = vxor.u32 %v2259, 2147483648
        %v2274 = vxor.u32 %v2262, 2147483648
        %v2275 = vxor.u32 %v2267, 2147483648
        %v2276 = vxor.u32 %v2270, 2147483648
        %v2277 = vmul.f32 %v2273, 1.442695
        %v2278 = vpow.pop %v2277
        %v2279 = vmul.f32 %v2274, 1.442695
        %v2280 = vpow.pop %v2279
        %v2281 = vmul.f32 %v2275, 1.442695
        %v2282 = vpow.pop %v2281
        %v2283 = vmul.f32 %v2276, 1.442695
        %v2284 = vpow.pop %v2283
        %v2285 = vadd.f32 %v2278, 1.0
        %v2286 = vadd.f32 %v2280, 1.0
        %v2287 = vadd.f32 %v2282, 1.0
        %v2288 = vadd.f32 %v2284, 1.0
        %v2289 = vrcp.pop %v2285
        %v2290 = vmul.f32 1.0, %v2289
        %v2291 = vrcp.pop %v2286
        %v2292 = vmul.f32 1.0, %v2291
        %v2293 = vrcp.pop %v2287
        %v2294 = vmul.f32 1.0, %v2293
        %v2295 = vrcp.pop %v2288
        %v2296 = vmul.f32 1.0, %v2295
        %2301 = vrot.lane.b32.xlu0 %v2259, 32
        %v2302 = vpop.permute.xlu0 %2301
        %2303 = vrot.lane.b32.xlu0 %v2262, 32
        %v2304 = vpop.permute.xlu0 %2303
        %2305 = vrot.lane.b32.xlu0 %v2267, 32
        %v2306 = vpop.permute.xlu0 %2305
        %2307 = vrot.lane.b32.xlu0 %v2270, 32
        %v2308 = vpop.permute.xlu0 %2307
        %v2313 = vmul.f32 %v2290, %v2302
        %v2314 = vmul.f32 %v2292, %v2304
        %v2315 = vmul.f32 %v2294, %v2306
        %v2316 = vmul.f32 %v2296, %v2308
        %2321 = vrot.lane.b32.xlu0 %v2313, 64
        %v2322 = vpop.permute.xlu0 %2321
        %2323 = vrot.lane.b32.xlu0 %v2314, 64
        %v2324 = vpop.permute.xlu0 %2323
        %2325 = vrot.lane.b32.xlu0 %v2315, 64
        %v2326 = vpop.permute.xlu0 %2325
        %2327 = vrot.lane.b32.xlu0 %v2316, 64
        %v2328 = vpop.permute.xlu0 %2327
        %v2333 = vadd.f32 %v2259, %v2322
        %v2334 = vadd.f32 %v2262, %v2324
        %v2335 = vadd.f32 %v2267, %v2326
        %v2336 = vadd.f32 %v2270, %v2328
        %v2337 = vtanh.pop %v2333
        %v2338 = vtanh.pop %v2334
        %v2339 = vtanh.pop %v2335
        %v2340 = vtanh.pop %v2336
        %v2341 = vsub.f32 1.0, %v2290
        %v2342 = vsub.f32 1.0, %v2292
        %v2343 = vsub.f32 1.0, %v2294
        %v2344 = vsub.f32 1.0, %v2296
        %2349 = vrot.lane.b32.xlu0 %v2337, 96
        %v2350 = vpop.permute.xlu0 %2349
        %2351 = vrot.lane.b32.xlu0 %v2338, 96
        %v2352 = vpop.permute.xlu0 %2351
        %2353 = vrot.lane.b32.xlu0 %v2339, 96
        %v2354 = vpop.permute.xlu0 %2353
        %2355 = vrot.lane.b32.xlu0 %v2340, 96
        %v2356 = vpop.permute.xlu0 %2355
        %v2361 = vmul.f32 %v2341, %v2350
        %v2362 = vmul.f32 %v2342, %v2352
        %v2363 = vmul.f32 %v2343, %v2354
        %v2364 = vmul.f32 %v2344, %v2356
        %v2365 = vmul.f32 %v2290, %v1264
        %v2366 = vmul.f32 %v2292, %v1265
        %v2367 = vmul.f32 %v2294, %v1266
        %v2368 = vmul.f32 %v2296, %v1267
        %v2369 = vadd.f32 %v2361, %v2365
        %v2370 = vadd.f32 %v2362, %v2366
        %v2371 = vadd.f32 %v2363, %v2367
        %v2372 = vadd.f32 %v2364, %v2368
        %v2373 = vpack.c.bf16 %v2370, %v2369
        %v2374 = vpack.c.bf16 %v2372, %v2371
        %2377 = vrot.lane.b32.xlu0 %v2373, 96
        %v2378 = vpop.permute.xlu0 %2377
        %2379 = vrot.lane.b32.xlu0 %v2374, 96
        %v2380 = vpop.permute.xlu0 %2379
        %2383 = vmatprep.subr.bf16.mxu0 0
        %2384 = vmatpush1.bf16.msra.mxu0 %v2378
        %2385 = vmatprep.subr.bf16.mxu0 0
        %2386 = vmatpush1.bf16.msra.mxu0 %v2380
        %2387 = vmatprep.subr.bf16.mxu0 0
        %2388 = vmatpush1.bf16.msra.mxu0 0
        %2389 = vmatprep.subr.bf16.mxu0 0
        %2390 = vmatpush1.bf16.msra.mxu0 0
        %2391 = vmatprep.subr.bf16.mxu0 0
        %2392 = vmatpush1.bf16.msra.mxu0 0
        %2393 = vmatprep.subr.bf16.mxu0 0
        %2394 = vmatpush1.bf16.msra.mxu0 0
        %2395 = vmatprep.subr.bf16.mxu0 0
        %2396 = vmatpush1.bf16.msra.mxu0 0
        %2397 = vmatprep.subr.bf16.mxu0 0
        %2398 = vmatpush1.bf16.msra.mxu0 0
        %2399 = vmatprep.subr.bf16.mxu0 0
        %2400 = vmatpush1.bf16.msra.mxu0 0
        %2401 = vmatprep.subr.bf16.mxu0 0
        %2402 = vmatpush1.bf16.msra.mxu0 0
        %2403 = vmatprep.subr.bf16.mxu0 0
        %2404 = vmatpush1.bf16.msra.mxu0 0
        %2405 = vmatprep.subr.bf16.mxu0 0
        %2406 = vmatpush1.bf16.msra.mxu0 0
        %2407 = vmatprep.subr.bf16.mxu0 0
        %2408 = vmatpush1.bf16.msra.mxu0 0
        %2409 = vmatprep.subr.bf16.mxu0 0
        %2410 = vmatpush1.bf16.msra.mxu0 0
        %2411 = vmatprep.subr.bf16.mxu0 0
        %2412 = vmatpush1.bf16.msra.mxu0 0
        %2413 = vmatprep.subr.bf16.mxu0 0
        %2414 = vmatpush1.bf16.msra.mxu0 0
        %2415 = vmatprep.mubr.bf16.mxu0 0
        %2416 = vmatmul.mubr.bf16.gmra.mrb[0].mxu0 %v1451
        %v2417 = vpop.f32.mrb[0].mxu0
        %v2418 = vadd.f32 0.0, %v2417
        %v2419 = vpop.f32.mrb[0].mxu0
        %v2420 = vpop.f32.mrb[0].mxu0
        %v2421 = vadd.f32 0.0, %v2420
        %v2422 = vpop.f32.mrb[0].mxu0
        %2423 = vmatprep.mubr.bf16.mxu0 0
        %2424 = vmatmul.mubr.bf16.gmra.mrb[0].mxu0 %v1454
        %v2425 = vpop.f32.mrb[0].mxu0
        %v2426 = vadd.f32 0.0, %v2425
        %v2427 = vpop.f32.mrb[0].mxu0
        %v2428 = vpop.f32.mrb[0].mxu0
        %v2429 = vadd.f32 0.0, %v2428
        %v2430 = vpop.f32.mrb[0].mxu0
        %2431 = vdwg.mxu0
        %2432 = vmatprep.subr.bf16.mxu0 0
        %2433 = vmatpush1.bf16.msra.mxu0 %v2378
        %2434 = vmatprep.subr.bf16.mxu0 0
        %2435 = vmatpush1.bf16.msra.mxu0 %v2380
        %2436 = vmatprep.subr.bf16.mxu0 0
        %2437 = vmatpush1.bf16.msra.mxu0 0
        %2438 = vmatprep.subr.bf16.mxu0 0
        %2439 = vmatpush1.bf16.msra.mxu0 0
        %2440 = vmatprep.subr.bf16.mxu0 0
        %2441 = vmatpush1.bf16.msra.mxu0 0
        %2442 = vmatprep.subr.bf16.mxu0 0
        %2443 = vmatpush1.bf16.msra.mxu0 0
        %2444 = vmatprep.subr.bf16.mxu0 0
        %2445 = vmatpush1.bf16.msra.mxu0 0
        %2446 = vmatprep.subr.bf16.mxu0 0
        %2447 = vmatpush1.bf16.msra.mxu0 0
        %2448 = vmatprep.subr.bf16.mxu0 0
        %2449 = vmatpush1.bf16.msra.mxu0 0
        %2450 = vmatprep.subr.bf16.mxu0 0
        %2451 = vmatpush1.bf16.msra.mxu0 0
        %2452 = vmatprep.subr.bf16.mxu0 0
        %2453 = vmatpush1.bf16.msra.mxu0 0
        %2454 = vmatprep.subr.bf16.mxu0 0
        %2455 = vmatpush1.bf16.msra.mxu0 0
        %2456 = vmatprep.subr.bf16.mxu0 0
        %2457 = vmatpush1.bf16.msra.mxu0 0
        %2458 = vmatprep.subr.bf16.mxu0 0
        %2459 = vmatpush1.bf16.msra.mxu0 0
        %2460 = vmatprep.subr.bf16.mxu0 0
        %2461 = vmatpush1.bf16.msra.mxu0 0
        %2462 = vmatprep.subr.bf16.mxu0 0
        %2463 = vmatpush1.bf16.msra.mxu0 0
        %2464 = vmatprep.mubr.bf16.mxu0 0
        %2465 = vmatmul.mubr.bf16.gmra.mrb[0].mxu0 %v1506
        %v2466 = vpop.f32.mrb[0].mxu0
        %v2467 = vadd.f32 0.0, %v2466
        %v2468 = vpop.f32.mrb[0].mxu0
        %v2469 = vpop.f32.mrb[0].mxu0
        %v2470 = vadd.f32 0.0, %v2469
        %v2471 = vpop.f32.mrb[0].mxu0
        %2472 = vmatprep.mubr.bf16.mxu0 0
        %2473 = vmatmul.mubr.bf16.gmra.mrb[0].mxu0 %v1509
        %v2474 = vpop.f32.mrb[0].mxu0
        %v2475 = vadd.f32 0.0, %v2474
        %v2476 = vpop.f32.mrb[0].mxu0
        %v2477 = vpop.f32.mrb[0].mxu0
        %v2478 = vadd.f32 0.0, %v2477
        %v2479 = vpop.f32.mrb[0].mxu0
        %2480 = vdwg.mxu0
        %2485 = vrot.lane.b32.xlu0 %v2467, 32
        %v2486 = vpop.permute.xlu0 %2485
        %2487 = vrot.lane.b32.xlu0 %v2470, 32
        %v2488 = vpop.permute.xlu0 %2487
        %2489 = vrot.lane.b32.xlu0 %v2475, 32
        %v2490 = vpop.permute.xlu0 %2489
        %2491 = vrot.lane.b32.xlu0 %v2478, 32
        %v2492 = vpop.permute.xlu0 %2491
        %2501 = vrot.lane.b32.xlu0 %v1974, 32
        %v2502 = vpop.permute.xlu0 %2501
        %2503 = vrot.lane.b32.xlu0 %v1975, 32
        %v2504 = vpop.permute.xlu0 %2503
        %2505 = vrot.lane.b32.xlu0 %v1976, 32
        %v2506 = vpop.permute.xlu0 %2505
        %2507 = vrot.lane.b32.xlu0 %v1977, 32
        %v2508 = vpop.permute.xlu0 %2507
        %v2513 = vsel %vm831, %v2418, %v2486
        %v2514 = vsel %vm831, %v2421, %v2488
        %v2515 = vsel %vm831, %v2426, %v2490
        %v2516 = vsel %vm831, %v2429, %v2492
        %v2517 = vsel %vm940, %v2513, %v2502
        %v2518 = vsel %vm940, %v2514, %v2504
        %v2519 = vsel %vm940, %v2515, %v2506
        %v2520 = vsel %vm940, %v2516, %v2508
        %v2521 = vpack.c.bf16 %v2518, %v2517
        %v2522 = vpack.c.bf16 %v2520, %v2519
        %v2524 = vsel %vm1657, %v2521, 0
        %v2527 = vsel %vm1657, %v2522, 0
        %2529 = vmatprep.subr.bf16.mxu0 0
        %2530 = vmatpush1.bf16.msra.mxu0 %v1645
        %2531 = vmatprep.subr.bf16.mxu0 0
        %2532 = vmatpush1.bf16.msra.mxu0 %v1646
        %2533 = vmatprep.subr.bf16.mxu0 0
        %2534 = vmatpush1.bf16.msra.mxu0 %v1647
        %2535 = vmatprep.subr.bf16.mxu0 0
        %2536 = vmatpush1.bf16.msra.mxu0 %v1648
        %2537 = vmatprep.subr.bf16.mxu0 0
        %2538 = vmatpush1.bf16.msra.mxu0 %v1649
        %2539 = vmatprep.subr.bf16.mxu0 0
        %2540 = vmatpush1.bf16.msra.mxu0 %v1650
        %2541 = vmatprep.subr.bf16.mxu0 0
        %2542 = vmatpush1.bf16.msra.mxu0 0
        %2543 = vmatprep.subr.bf16.mxu0 0
        %2544 = vmatpush1.bf16.msra.mxu0 0
        %2545 = vmatprep.subr.bf16.mxu0 0
        %2546 = vmatpush1.bf16.msra.mxu0 0
        %2547 = vmatprep.subr.bf16.mxu0 0
        %2548 = vmatpush1.bf16.msra.mxu0 0
        %2549 = vmatprep.subr.bf16.mxu0 0
        %2550 = vmatpush1.bf16.msra.mxu0 0
        %2551 = vmatprep.subr.bf16.mxu0 0
        %2552 = vmatpush1.bf16.msra.mxu0 0
        %2553 = vmatprep.subr.bf16.mxu0 0
        %2554 = vmatpush1.bf16.msra.mxu0 0
        %2555 = vmatprep.subr.bf16.mxu0 0
        %2556 = vmatpush1.bf16.msra.mxu0 0
        %2557 = vmatprep.subr.bf16.mxu0 0
        %2558 = vmatpush1.bf16.msra.mxu0 0
        %2559 = vmatprep.subr.bf16.mxu0 0
        %2560 = vmatpush1.bf16.msra.mxu0 0
        %2561 = vmatprep.mubr.bf16.mxu0 0
        %2562 = vmatmul.mubr.bf16.gmra.mrb[0].mxu0 %v2524
        %v2563 = vpop.f32.mrb[0].mxu0
        %v2564 = vadd.f32 %v1619, %v2563
        %v2565 = vpop.f32.mrb[0].mxu0
        %v2566 = vpop.f32.mrb[0].mxu0
        %v2567 = vadd.f32 %v1619, %v2566
        %v2568 = vpop.f32.mrb[0].mxu0
        %2569 = vmatprep.mubr.bf16.mxu0 0
        %2570 = vmatmul.mubr.bf16.gmra.mrb[0].mxu0 %v2527
        %v2571 = vpop.f32.mrb[0].mxu0
        %v2572 = vadd.f32 %v1619, %v2571
        %v2573 = vpop.f32.mrb[0].mxu0
        %v2574 = vpop.f32.mrb[0].mxu0
        %v2575 = vadd.f32 %v1619, %v2574
        %v2576 = vpop.f32.mrb[0].mxu0
        %2577 = vdwg.mxu0
        %v2578 = vxor.u32 %v2564, 2147483648
        %v2579 = vxor.u32 %v2567, 2147483648
        %v2580 = vxor.u32 %v2572, 2147483648
        %v2581 = vxor.u32 %v2575, 2147483648
        %v2582 = vmul.f32 %v2578, 1.442695
        %v2583 = vpow.pop %v2582
        %v2584 = vmul.f32 %v2579, 1.442695
        %v2585 = vpow.pop %v2584
        %v2586 = vmul.f32 %v2580, 1.442695
        %v2587 = vpow.pop %v2586
        %v2588 = vmul.f32 %v2581, 1.442695
        %v2589 = vpow.pop %v2588
        %v2590 = vadd.f32 %v2583, 1.0
        %v2591 = vadd.f32 %v2585, 1.0
        %v2592 = vadd.f32 %v2587, 1.0
        %v2593 = vadd.f32 %v2589, 1.0
        %v2594 = vrcp.pop %v2590
        %v2595 = vmul.f32 1.0, %v2594
        %v2596 = vrcp.pop %v2591
        %v2597 = vmul.f32 1.0, %v2596
        %v2598 = vrcp.pop %v2592
        %v2599 = vmul.f32 1.0, %v2598
        %v2600 = vrcp.pop %v2593
        %v2601 = vmul.f32 1.0, %v2600
        %2603 = vset.pattern.permute.xlu0 0
        %2604 = vperm.xlu0 %2603, %v2595
        %v2605 = vpop.permute.xlu0 %2604
        %2608 = vset.pattern.permute.xlu0 0
        %2609 = vperm.xlu0 %2608, %v2597
        %v2610 = vpop.permute.xlu0 %2609
        %2613 = vset.pattern.permute.xlu0 0
        %2614 = vperm.xlu0 %2613, %v2599
        %v2615 = vpop.permute.xlu0 %2614
        %2618 = vset.pattern.permute.xlu0 0
        %2619 = vperm.xlu0 %2618, %v2601
        %v2620 = vpop.permute.xlu0 %2619
        %v2622 = vmul.f32 %v2605, %v2418
        %v2623 = vmul.f32 %v2610, %v2421
        %v2624 = vmul.f32 %v2615, %v2426
        %v2625 = vmul.f32 %v2620, %v2429
        %2626 = vset.pattern.permute.xlu0 1
        %2627 = vperm.xlu0 %2626, %v2595
        %v2628 = vpop.permute.xlu0 %2627
        %2630 = vset.pattern.permute.xlu0 1
        %2631 = vperm.xlu0 %2630, %v2597
        %v2632 = vpop.permute.xlu0 %2631
        %2634 = vset.pattern.permute.xlu0 1
        %2635 = vperm.xlu0 %2634, %v2599
        %v2636 = vpop.permute.xlu0 %2635
        %2638 = vset.pattern.permute.xlu0 1
        %2639 = vperm.xlu0 %2638, %v2601
        %v2640 = vpop.permute.xlu0 %2639
        %v2642 = vmul.f32 %v2628, %v2467
        %v2643 = vmul.f32 %v2632, %v2470
        %v2644 = vmul.f32 %v2636, %v2475
        %v2645 = vmul.f32 %v2640, %v2478
        %v2646 = vadd.f32 %v2622, %v2642
        %v2647 = vadd.f32 %v2623, %v2643
        %v2648 = vadd.f32 %v2624, %v2644
        %v2649 = vadd.f32 %v2625, %v2645
        %v2650 = vsel %vm831, %v2646, %v1974
        %v2651 = vsel %vm831, %v2647, %v1975
        %v2652 = vsel %vm831, %v2648, %v1976
        %v2653 = vsel %vm831, %v2649, %v1977
        %v2654 = vpack.c.bf16 %v2651, %v2650
        %v2655 = vpack.c.bf16 %v2653, %v2652
        %v2657 = vsel %vm940, %v2654, 0
        %v2660 = vsel %vm940, %v2655, 0
        %2662 = vmatprep.subr.bf16.mxu0 0
        %2663 = vmatpush1.bf16.msra.mxu0 %v1815
        %2664 = vmatprep.subr.bf16.mxu0 0
        %2665 = vmatpush1.bf16.msra.mxu0 %v1816
        %2666 = vmatprep.subr.bf16.mxu0 0
        %2667 = vmatpush1.bf16.msra.mxu0 %v1817
        %2668 = vmatprep.subr.bf16.mxu0 0
        %2669 = vmatpush1.bf16.msra.mxu0 %v1818
        %2670 = vmatprep.subr.bf16.mxu0 0
        %2671 = vmatpush1.bf16.msra.mxu0 0
        %2672 = vmatprep.subr.bf16.mxu0 0
        %2673 = vmatpush1.bf16.msra.mxu0 0
        %2674 = vmatprep.subr.bf16.mxu0 0
        %2675 = vmatpush1.bf16.msra.mxu0 0
        %2676 = vmatprep.subr.bf16.mxu0 0
        %2677 = vmatpush1.bf16.msra.mxu0 0
        %2678 = vmatprep.subr.bf16.mxu0 0
        %2679 = vmatpush1.bf16.msra.mxu0 0
        %2680 = vmatprep.subr.bf16.mxu0 0
        %2681 = vmatpush1.bf16.msra.mxu0 0
        %2682 = vmatprep.subr.bf16.mxu0 0
        %2683 = vmatpush1.bf16.msra.mxu0 0
        %2684 = vmatprep.subr.bf16.mxu0 0
        %2685 = vmatpush1.bf16.msra.mxu0 0
        %2686 = vmatprep.subr.bf16.mxu0 0
        %2687 = vmatpush1.bf16.msra.mxu0 0
        %2688 = vmatprep.subr.bf16.mxu0 0
        %2689 = vmatpush1.bf16.msra.mxu0 0
        %2690 = vmatprep.subr.bf16.mxu0 0
        %2691 = vmatpush1.bf16.msra.mxu0 0
        %2692 = vmatprep.subr.bf16.mxu0 0
        %2693 = vmatpush1.bf16.msra.mxu0 0
        %2694 = vmatprep.mubr.bf16.mxu0 0
        %2695 = vmatmul.mubr.bf16.gmra.mrb[0].mxu0 %v2657
        %v2696 = vpop.f32.mrb[0].mxu0
        %v2697 = vadd.f32 %v1279, %v2696
        %v2698 = vpop.f32.mrb[0].mxu0
        %v2699 = vpop.f32.mrb[0].mxu0
        %v2700 = vadd.f32 %v1279, %v2699
        %v2701 = vpop.f32.mrb[0].mxu0
        %2702 = vmatprep.mubr.bf16.mxu0 0
        %2703 = vmatmul.mubr.bf16.gmra.mrb[0].mxu0 %v2660
        %v2704 = vpop.f32.mrb[0].mxu0
        %v2705 = vadd.f32 %v1279, %v2704
        %v2706 = vpop.f32.mrb[0].mxu0
        %v2707 = vpop.f32.mrb[0].mxu0
        %v2708 = vadd.f32 %v1279, %v2707
        %v2709 = vpop.f32.mrb[0].mxu0
        %2710 = vdwg.mxu0
        %v2711 = vxor.u32 %v2697, 2147483648
        %v2712 = vxor.u32 %v2700, 2147483648
        %v2713 = vxor.u32 %v2705, 2147483648
        %v2714 = vxor.u32 %v2708, 2147483648
        %v2715 = vmul.f32 %v2711, 1.442695
        %v2716 = vpow.pop %v2715
        %v2717 = vmul.f32 %v2712, 1.442695
        %v2718 = vpow.pop %v2717
        %v2719 = vmul.f32 %v2713, 1.442695
        %v2720 = vpow.pop %v2719
        %v2721 = vmul.f32 %v2714, 1.442695
        %v2722 = vpow.pop %v2721
        %v2723 = vadd.f32 %v2716, 1.0
        %v2724 = vadd.f32 %v2718, 1.0
        %v2725 = vadd.f32 %v2720, 1.0
        %v2726 = vadd.f32 %v2722, 1.0
        %v2727 = vrcp.pop %v2723
        %v2728 = vmul.f32 1.0, %v2727
        %v2729 = vrcp.pop %v2724
        %v2730 = vmul.f32 1.0, %v2729
        %v2731 = vrcp.pop %v2725
        %v2732 = vmul.f32 1.0, %v2731
        %v2733 = vrcp.pop %v2726
        %v2734 = vmul.f32 1.0, %v2733
        %2739 = vrot.lane.b32.xlu0 %v2697, 32
        %v2740 = vpop.permute.xlu0 %2739
        %2741 = vrot.lane.b32.xlu0 %v2700, 32
        %v2742 = vpop.permute.xlu0 %2741
        %2743 = vrot.lane.b32.xlu0 %v2705, 32
        %v2744 = vpop.permute.xlu0 %2743
        %2745 = vrot.lane.b32.xlu0 %v2708, 32
        %v2746 = vpop.permute.xlu0 %2745
        %v2751 = vmul.f32 %v2728, %v2740
        %v2752 = vmul.f32 %v2730, %v2742
        %v2753 = vmul.f32 %v2732, %v2744
        %v2754 = vmul.f32 %v2734, %v2746
        %2759 = vrot.lane.b32.xlu0 %v2751, 64
        %v2760 = vpop.permute.xlu0 %2759
        %2761 = vrot.lane.b32.xlu0 %v2752, 64
        %v2762 = vpop.permute.xlu0 %2761
        %2763 = vrot.lane.b32.xlu0 %v2753, 64
        %v2764 = vpop.permute.xlu0 %2763
        %2765 = vrot.lane.b32.xlu0 %v2754, 64
        %v2766 = vpop.permute.xlu0 %2765
        %v2771 = vadd.f32 %v2697, %v2760
        %v2772 = vadd.f32 %v2700, %v2762
        %v2773 = vadd.f32 %v2705, %v2764
        %v2774 = vadd.f32 %v2708, %v2766
        %v2775 = vtanh.pop %v2771
        %v2776 = vtanh.pop %v2772
        %v2777 = vtanh.pop %v2773
        %v2778 = vtanh.pop %v2774
        %v2779 = vsub.f32 1.0, %v2728
        %v2780 = vsub.f32 1.0, %v2730
        %v2781 = vsub.f32 1.0, %v2732
        %v2782 = vsub.f32 1.0, %v2734
        %2787 = vrot.lane.b32.xlu0 %v2775, 96
        %v2788 = vpop.permute.xlu0 %2787
        %2789 = vrot.lane.b32.xlu0 %v2776, 96
        %v2790 = vpop.permute.xlu0 %2789
        %2791 = vrot.lane.b32.xlu0 %v2777, 96
        %v2792 = vpop.permute.xlu0 %2791
        %2793 = vrot.lane.b32.xlu0 %v2778, 96
        %v2794 = vpop.permute.xlu0 %2793
        %v2799 = vmul.f32 %v2779, %v2788
        %v2800 = vmul.f32 %v2780, %v2790
        %v2801 = vmul.f32 %v2781, %v2792
        %v2802 = vmul.f32 %v2782, %v2794
        %v2803 = vmul.f32 %v2728, %v1974
        %v2804 = vmul.f32 %v2730, %v1975
        %v2805 = vmul.f32 %v2732, %v1976
        %v2806 = vmul.f32 %v2734, %v1977
        %v2807 = vadd.f32 %v2799, %v2803
        %v2808 = vadd.f32 %v2800, %v2804
        %v2809 = vadd.f32 %v2801, %v2805
        %v2810 = vadd.f32 %v2802, %v2806
        %2811 = vset.pattern.permute.xlu0 2
        %2812 = vperm.xlu0 %2811, %v2595
        %v2813 = vpop.permute.xlu0 %2812
        %2815 = vset.pattern.permute.xlu0 2
        %2816 = vperm.xlu0 %2815, %v2597
        %v2817 = vpop.permute.xlu0 %2816
        %2819 = vset.pattern.permute.xlu0 2
        %2820 = vperm.xlu0 %2819, %v2599
        %v2821 = vpop.permute.xlu0 %2820
        %2823 = vset.pattern.permute.xlu0 2
        %2824 = vperm.xlu0 %2823, %v2601
        %v2825 = vpop.permute.xlu0 %2824
        %v2827 = vmul.f32 %v2813, %v1974
        %v2828 = vmul.f32 %v2817, %v1975
        %v2829 = vmul.f32 %v2821, %v1976
        %v2830 = vmul.f32 %v2825, %v1977
        %v2831 = vpack.c.bf16 %v2828, %v2827
        %v2832 = vpack.c.bf16 %v2830, %v2829
        %2833 = vset.pattern.permute.xlu0 3
        %2834 = vperm.xlu0 %2833, %v2595
        %v2835 = vpop.permute.xlu0 %2834
        %2837 = vset.pattern.permute.xlu0 3
        %2838 = vperm.xlu0 %2837, %v2597
        %v2839 = vpop.permute.xlu0 %2838
        %2841 = vset.pattern.permute.xlu0 3
        %2842 = vperm.xlu0 %2841, %v2599
        %v2843 = vpop.permute.xlu0 %2842
        %2845 = vset.pattern.permute.xlu0 3
        %2846 = vperm.xlu0 %2845, %v2601
        %v2847 = vpop.permute.xlu0 %2846
        %v2849 = vmul.f32 %v2835, %v1974
        %v2850 = vmul.f32 %v2839, %v1975
        %v2851 = vmul.f32 %v2843, %v1976
        %v2852 = vmul.f32 %v2847, %v1977
        %v2853 = vpack.c.bf16 %v2850, %v2849
        %v2854 = vpack.c.bf16 %v2852, %v2851
        %2857 = vrot.lane.b32.xlu0 %v2853, 96
        %v2858 = vpop.permute.xlu0 %2857
        %2859 = vrot.lane.b32.xlu0 %v2854, 96
        %v2860 = vpop.permute.xlu0 %2859
        %2863 = vmatprep.subr.bf16.mxu0 0
        %2864 = vmatpush1.bf16.msra.mxu0 %v2858
        %2865 = vmatprep.subr.bf16.mxu0 0
        %2866 = vmatpush1.bf16.msra.mxu0 %v2860
        %2867 = vmatprep.subr.bf16.mxu0 0
        %2868 = vmatpush1.bf16.msra.mxu0 0
        %2869 = vmatprep.subr.bf16.mxu0 0
        %2870 = vmatpush1.bf16.msra.mxu0 0
        %2871 = vmatprep.subr.bf16.mxu0 0
        %2872 = vmatpush1.bf16.msra.mxu0 0
        %2873 = vmatprep.subr.bf16.mxu0 0
        %2874 = vmatpush1.bf16.msra.mxu0 0
        %2875 = vmatprep.subr.bf16.mxu0 0
        %2876 = vmatpush1.bf16.msra.mxu0 0
        %2877 = vmatprep.subr.bf16.mxu0 0
        %2878 = vmatpush1.bf16.msra.mxu0 0
        %2879 = vmatprep.subr.bf16.mxu0 0
        %2880 = vmatpush1.bf16.msra.mxu0 0
        %2881 = vmatprep.subr.bf16.mxu0 0
        %2882 = vmatpush1.bf16.msra.mxu0 0
        %2883 = vmatprep.subr.bf16.mxu0 0
        %2884 = vmatpush1.bf16.msra.mxu0 0
        %2885 = vmatprep.subr.bf16.mxu0 0
        %2886 = vmatpush1.bf16.msra.mxu0 0
        %2887 = vmatprep.subr.bf16.mxu0 0
        %2888 = vmatpush1.bf16.msra.mxu0 0
        %2889 = vmatprep.subr.bf16.mxu0 0
        %2890 = vmatpush1.bf16.msra.mxu0 0
        %2891 = vmatprep.subr.bf16.mxu0 0
        %2892 = vmatpush1.bf16.msra.mxu0 0
        %2893 = vmatprep.subr.bf16.mxu0 0
        %2894 = vmatpush1.bf16.msra.mxu0 0
        %2895 = vmatprep.mubr.bf16.mxu0 0
        %2896 = vmatmul.mubr.bf16.gmra.mrb[0].mxu0 %v2047
        %v2897 = vpop.f32.mrb[0].mxu0
        %v2898 = vadd.f32 0.0, %v2897
        %v2899 = vpop.f32.mrb[0].mxu0
        %v2900 = vpop.f32.mrb[0].mxu0
        %v2901 = vadd.f32 0.0, %v2900
        %v2902 = vpop.f32.mrb[0].mxu0
        %2903 = vmatprep.mubr.bf16.mxu0 0
        %2904 = vmatmul.mubr.bf16.gmra.mrb[0].mxu0 %v2050
        %v2905 = vpop.f32.mrb[0].mxu0
        %v2906 = vadd.f32 0.0, %v2905
        %v2907 = vpop.f32.mrb[0].mxu0
        %v2908 = vpop.f32.mrb[0].mxu0
        %v2909 = vadd.f32 0.0, %v2908
        %v2910 = vpop.f32.mrb[0].mxu0
        %2911 = vdwg.mxu0
        %2914 = vrot.lane.b32.xlu0 %v2831, 96
        %v2915 = vpop.permute.xlu0 %2914
        %2916 = vrot.lane.b32.xlu0 %v2832, 96
        %v2917 = vpop.permute.xlu0 %2916
        %2920 = vmatprep.subr.bf16.mxu0 0
        %2921 = vmatpush1.bf16.msra.mxu0 %v2915
        %2922 = vmatprep.subr.bf16.mxu0 0
        %2923 = vmatpush1.bf16.msra.mxu0 %v2917
        %2924 = vmatprep.subr.bf16.mxu0 0
        %2925 = vmatpush1.bf16.msra.mxu0 0
        %2926 = vmatprep.subr.bf16.mxu0 0
        %2927 = vmatpush1.bf16.msra.mxu0 0
        %2928 = vmatprep.subr.bf16.mxu0 0
        %2929 = vmatpush1.bf16.msra.mxu0 0
        %2930 = vmatprep.subr.bf16.mxu0 0
        %2931 = vmatpush1.bf16.msra.mxu0 0
        %2932 = vmatprep.subr.bf16.mxu0 0
        %2933 = vmatpush1.bf16.msra.mxu0 0
        %2934 = vmatprep.subr.bf16.mxu0 0
        %2935 = vmatpush1.bf16.msra.mxu0 0
        %2936 = vmatprep.subr.bf16.mxu0 0
        %2937 = vmatpush1.bf16.msra.mxu0 0
        %2938 = vmatprep.subr.bf16.mxu0 0
        %2939 = vmatpush1.bf16.msra.mxu0 0
        %2940 = vmatprep.subr.bf16.mxu0 0
        %2941 = vmatpush1.bf16.msra.mxu0 0
        %2942 = vmatprep.subr.bf16.mxu0 0
        %2943 = vmatpush1.bf16.msra.mxu0 0
        %2944 = vmatprep.subr.bf16.mxu0 0
        %2945 = vmatpush1.bf16.msra.mxu0 0
        %2946 = vmatprep.subr.bf16.mxu0 0
        %2947 = vmatpush1.bf16.msra.mxu0 0
        %2948 = vmatprep.subr.bf16.mxu0 0
        %2949 = vmatpush1.bf16.msra.mxu0 0
        %2950 = vmatprep.subr.bf16.mxu0 0
        %2951 = vmatpush1.bf16.msra.mxu0 0
        %2952 = vmatprep.mubr.bf16.mxu0 0
        %2953 = vmatmul.mubr.bf16.gmra.mrb[0].mxu0 %v2126
        %v2954 = vpop.f32.mrb[0].mxu0
        %v2955 = vadd.f32 %v2898, %v2954
        %v2956 = vpop.f32.mrb[0].mxu0
        %v2957 = vpop.f32.mrb[0].mxu0
        %v2958 = vadd.f32 %v2901, %v2957
        %v2959 = vpop.f32.mrb[0].mxu0
        %2960 = vmatprep.mubr.bf16.mxu0 0
        %2961 = vmatmul.mubr.bf16.gmra.mrb[0].mxu0 %v2129
        %v2962 = vpop.f32.mrb[0].mxu0
        %v2963 = vadd.f32 %v2906, %v2962
        %v2964 = vpop.f32.mrb[0].mxu0
        %v2965 = vpop.f32.mrb[0].mxu0
        %v2966 = vadd.f32 %v2909, %v2965
        %v2967 = vpop.f32.mrb[0].mxu0
        %2968 = vdwg.mxu0
        %v2969 = vsel %vm831, %v2955, %v2369
        %v2970 = vsel %vm831, %v2958, %v2370
        %v2971 = vsel %vm831, %v2963, %v2371
        %v2972 = vsel %vm831, %v2966, %v2372
        %v2973 = vpack.c.bf16 %v2970, %v2969
        %v2974 = vpack.c.bf16 %v2972, %v2971
        %v2976 = vsel %vm940, %v2973, 0
        %v2979 = vsel %vm940, %v2974, 0
        %2981 = vmatprep.subr.bf16.mxu0 0
        %2982 = vmatpush1.bf16.msra.mxu0 %v2210
        %2983 = vmatprep.subr.bf16.mxu0 0
        %2984 = vmatpush1.bf16.msra.mxu0 %v2211
        %2985 = vmatprep.subr.bf16.mxu0 0
        %2986 = vmatpush1.bf16.msra.mxu0 %v2212
        %2987 = vmatprep.subr.bf16.mxu0 0
        %2988 = vmatpush1.bf16.msra.mxu0 %v2213
        %2989 = vmatprep.subr.bf16.mxu0 0
        %2990 = vmatpush1.bf16.msra.mxu0 0
        %2991 = vmatprep.subr.bf16.mxu0 0
        %2992 = vmatpush1.bf16.msra.mxu0 0
        %2993 = vmatprep.subr.bf16.mxu0 0
        %2994 = vmatpush1.bf16.msra.mxu0 0
        %2995 = vmatprep.subr.bf16.mxu0 0
        %2996 = vmatpush1.bf16.msra.mxu0 0
        %2997 = vmatprep.subr.bf16.mxu0 0
        %2998 = vmatpush1.bf16.msra.mxu0 0
        %2999 = vmatprep.subr.bf16.mxu0 0
        %3000 = vmatpush1.bf16.msra.mxu0 0
        %3001 = vmatprep.subr.bf16.mxu0 0
        %3002 = vmatpush1.bf16.msra.mxu0 0
        %3003 = vmatprep.subr.bf16.mxu0 0
        %3004 = vmatpush1.bf16.msra.mxu0 0
        %3005 = vmatprep.subr.bf16.mxu0 0
        %3006 = vmatpush1.bf16.msra.mxu0 0
        %3007 = vmatprep.subr.bf16.mxu0 0
        %3008 = vmatpush1.bf16.msra.mxu0 0
        %3009 = vmatprep.subr.bf16.mxu0 0
        %3010 = vmatpush1.bf16.msra.mxu0 0
        %3011 = vmatprep.subr.bf16.mxu0 0
        %3012 = vmatpush1.bf16.msra.mxu0 0
        %3013 = vmatprep.mubr.bf16.mxu0 0
        %3014 = vmatmul.mubr.bf16.gmra.mrb[0].mxu0 %v2976
        %v3015 = vpop.f32.mrb[0].mxu0
        %v3016 = vadd.f32 %v1107, %v3015
        %v3017 = vpop.f32.mrb[0].mxu0
        %v3018 = vpop.f32.mrb[0].mxu0
        %v3019 = vadd.f32 %v1107, %v3018
        %v3020 = vpop.f32.mrb[0].mxu0
        %3021 = vmatprep.mubr.bf16.mxu0 0
        %3022 = vmatmul.mubr.bf16.gmra.mrb[0].mxu0 %v2979
        %v3023 = vpop.f32.mrb[0].mxu0
        %v3024 = vadd.f32 %v1107, %v3023
        %v3025 = vpop.f32.mrb[0].mxu0
        %v3026 = vpop.f32.mrb[0].mxu0
        %v3027 = vadd.f32 %v1107, %v3026
        %v3028 = vpop.f32.mrb[0].mxu0
        %3029 = vdwg.mxu0
        %v3030 = vxor.u32 %v3016, 2147483648
        %v3031 = vxor.u32 %v3019, 2147483648
        %v3032 = vxor.u32 %v3024, 2147483648
        %v3033 = vxor.u32 %v3027, 2147483648
        %v3034 = vmul.f32 %v3030, 1.442695
        %v3035 = vpow.pop %v3034
        %v3036 = vmul.f32 %v3031, 1.442695
        %v3037 = vpow.pop %v3036
        %v3038 = vmul.f32 %v3032, 1.442695
        %v3039 = vpow.pop %v3038
        %v3040 = vmul.f32 %v3033, 1.442695
        %v3041 = vpow.pop %v3040
        %v3042 = vadd.f32 %v3035, 1.0
        %v3043 = vadd.f32 %v3037, 1.0
        %v3044 = vadd.f32 %v3039, 1.0
        %v3045 = vadd.f32 %v3041, 1.0
        %v3046 = vrcp.pop %v3042
        %v3047 = vmul.f32 1.0, %v3046
        %v3048 = vrcp.pop %v3043
        %v3049 = vmul.f32 1.0, %v3048
        %v3050 = vrcp.pop %v3044
        %v3051 = vmul.f32 1.0, %v3050
        %v3052 = vrcp.pop %v3045
        %v3053 = vmul.f32 1.0, %v3052
        %3058 = vrot.lane.b32.xlu0 %v3016, 32
        %v3059 = vpop.permute.xlu0 %3058
        %3060 = vrot.lane.b32.xlu0 %v3019, 32
        %v3061 = vpop.permute.xlu0 %3060
        %3062 = vrot.lane.b32.xlu0 %v3024, 32
        %v3063 = vpop.permute.xlu0 %3062
        %3064 = vrot.lane.b32.xlu0 %v3027, 32
        %v3065 = vpop.permute.xlu0 %3064
        %v3070 = vmul.f32 %v3047, %v3059
        %v3071 = vmul.f32 %v3049, %v3061
        %v3072 = vmul.f32 %v3051, %v3063
        %v3073 = vmul.f32 %v3053, %v3065
        %3078 = vrot.lane.b32.xlu0 %v3070, 64
        %v3079 = vpop.permute.xlu0 %3078
        %3080 = vrot.lane.b32.xlu0 %v3071, 64
        %v3081 = vpop.permute.xlu0 %3080
        %3082 = vrot.lane.b32.xlu0 %v3072, 64
        %v3083 = vpop.permute.xlu0 %3082
        %3084 = vrot.lane.b32.xlu0 %v3073, 64
        %v3085 = vpop.permute.xlu0 %3084
        %v3090 = vadd.f32 %v3016, %v3079
        %v3091 = vadd.f32 %v3019, %v3081
        %v3092 = vadd.f32 %v3024, %v3083
        %v3093 = vadd.f32 %v3027, %v3085
        %v3094 = vtanh.pop %v3090
        %v3095 = vtanh.pop %v3091
        %v3096 = vtanh.pop %v3092
        %v3097 = vtanh.pop %v3093
        %v3098 = vsub.f32 1.0, %v3047
        %v3099 = vsub.f32 1.0, %v3049
        %v3100 = vsub.f32 1.0, %v3051
        %v3101 = vsub.f32 1.0, %v3053
        %3106 = vrot.lane.b32.xlu0 %v3094, 96
        %v3107 = vpop.permute.xlu0 %3106
        %3108 = vrot.lane.b32.xlu0 %v3095, 96
        %v3109 = vpop.permute.xlu0 %3108
        %3110 = vrot.lane.b32.xlu0 %v3096, 96
        %v3111 = vpop.permute.xlu0 %3110
        %3112 = vrot.lane.b32.xlu0 %v3097, 96
        %v3113 = vpop.permute.xlu0 %3112
        %v3118 = vmul.f32 %v3098, %v3107
        %v3119 = vmul.f32 %v3099, %v3109
        %v3120 = vmul.f32 %v3100, %v3111
        %v3121 = vmul.f32 %v3101, %v3113
        %v3122 = vmul.f32 %v3047, %v2369
        %v3123 = vmul.f32 %v3049, %v2370
        %v3124 = vmul.f32 %v3051, %v2371
        %v3125 = vmul.f32 %v3053, %v2372
        %v3126 = vadd.f32 %v3118, %v3122
        %v3127 = vadd.f32 %v3119, %v3123
        %v3128 = vadd.f32 %v3120, %v3124
        %v3129 = vadd.f32 %v3121, %v3125
        %v3130 = vpack.c.bf16 %v3127, %v3126
        %v3131 = vpack.c.bf16 %v3129, %v3128
        %3134 = vrot.lane.b32.xlu0 %v3130, 96
        %v3135 = vpop.permute.xlu0 %3134
        %3136 = vrot.lane.b32.xlu0 %v3131, 96
        %v3137 = vpop.permute.xlu0 %3136
        %3140 = vmatprep.subr.bf16.mxu0 0
        %3141 = vmatpush1.bf16.msra.mxu0 %v3135
        %3142 = vmatprep.subr.bf16.mxu0 0
        %3143 = vmatpush1.bf16.msra.mxu0 %v3137
        %3144 = vmatprep.subr.bf16.mxu0 0
        %3145 = vmatpush1.bf16.msra.mxu0 0
        %3146 = vmatprep.subr.bf16.mxu0 0
        %3147 = vmatpush1.bf16.msra.mxu0 0
        %3148 = vmatprep.subr.bf16.mxu0 0
        %3149 = vmatpush1.bf16.msra.mxu0 0
        %3150 = vmatprep.subr.bf16.mxu0 0
        %3151 = vmatpush1.bf16.msra.mxu0 0
        %3152 = vmatprep.subr.bf16.mxu0 0
        %3153 = vmatpush1.bf16.msra.mxu0 0
        %3154 = vmatprep.subr.bf16.mxu0 0
        %3155 = vmatpush1.bf16.msra.mxu0 0
        %3156 = vmatprep.subr.bf16.mxu0 0
        %3157 = vmatpush1.bf16.msra.mxu0 0
        %3158 = vmatprep.subr.bf16.mxu0 0
        %3159 = vmatpush1.bf16.msra.mxu0 0
        %3160 = vmatprep.subr.bf16.mxu0 0
        %3161 = vmatpush1.bf16.msra.mxu0 0
        %3162 = vmatprep.subr.bf16.mxu0 0
        %3163 = vmatpush1.bf16.msra.mxu0 0
        %3164 = vmatprep.subr.bf16.mxu0 0
        %3165 = vmatpush1.bf16.msra.mxu0 0
        %3166 = vmatprep.subr.bf16.mxu0 0
        %3167 = vmatpush1.bf16.msra.mxu0 0
        %3168 = vmatprep.subr.bf16.mxu0 0
        %3169 = vmatpush1.bf16.msra.mxu0 0
        %3170 = vmatprep.subr.bf16.mxu0 0
        %3171 = vmatpush1.bf16.msra.mxu0 0
        %3172 = vmatprep.mubr.bf16.mxu0 0
        %3173 = vmatmul.mubr.bf16.gmra.mrb[0].mxu0 %v1451
        %v3174 = vpop.f32.mrb[0].mxu0
        %v3175 = vadd.f32 0.0, %v3174
        %v3176 = vpop.f32.mrb[0].mxu0
        %v3177 = vpop.f32.mrb[0].mxu0
        %v3178 = vadd.f32 0.0, %v3177
        %v3179 = vpop.f32.mrb[0].mxu0
        %3180 = vmatprep.mubr.bf16.mxu0 0
        %3181 = vmatmul.mubr.bf16.gmra.mrb[0].mxu0 %v1454
        %v3182 = vpop.f32.mrb[0].mxu0
        %v3183 = vadd.f32 0.0, %v3182
        %v3184 = vpop.f32.mrb[0].mxu0
        %v3185 = vpop.f32.mrb[0].mxu0
        %v3186 = vadd.f32 0.0, %v3185
        %v3187 = vpop.f32.mrb[0].mxu0
        %3188 = vdwg.mxu0
        %3189 = vmatprep.subr.bf16.mxu0 0
        %3190 = vmatpush1.bf16.msra.mxu0 %v3135
        %3191 = vmatprep.subr.bf16.mxu0 0
        %3192 = vmatpush1.bf16.msra.mxu0 %v3137
        %3193 = vmatprep.subr.bf16.mxu0 0
        %3194 = vmatpush1.bf16.msra.mxu0 0
        %3195 = vmatprep.subr.bf16.mxu0 0
        %3196 = vmatpush1.bf16.msra.mxu0 0
        %3197 = vmatprep.subr.bf16.mxu0 0
        %3198 = vmatpush1.bf16.msra.mxu0 0
        %3199 = vmatprep.subr.bf16.mxu0 0
        %3200 = vmatpush1.bf16.msra.mxu0 0
        %3201 = vmatprep.subr.bf16.mxu0 0
        %3202 = vmatpush1.bf16.msra.mxu0 0
        %3203 = vmatprep.subr.bf16.mxu0 0
        %3204 = vmatpush1.bf16.msra.mxu0 0
        %3205 = vmatprep.subr.bf16.mxu0 0
        %3206 = vmatpush1.bf16.msra.mxu0 0
        %3207 = vmatprep.subr.bf16.mxu0 0
        %3208 = vmatpush1.bf16.msra.mxu0 0
        %3209 = vmatprep.subr.bf16.mxu0 0
        %3210 = vmatpush1.bf16.msra.mxu0 0
        %3211 = vmatprep.subr.bf16.mxu0 0
        %3212 = vmatpush1.bf16.msra.mxu0 0
        %3213 = vmatprep.subr.bf16.mxu0 0
        %3214 = vmatpush1.bf16.msra.mxu0 0
        %3215 = vmatprep.subr.bf16.mxu0 0
        %3216 = vmatpush1.bf16.msra.mxu0 0
        %3217 = vmatprep.subr.bf16.mxu0 0
        %3218 = vmatpush1.bf16.msra.mxu0 0
        %3219 = vmatprep.subr.bf16.mxu0 0
        %3220 = vmatpush1.bf16.msra.mxu0 0
        %3221 = vmatprep.mubr.bf16.mxu0 0
        %3222 = vmatmul.mubr.bf16.gmra.mrb[0].mxu0 %v1506
        %v3223 = vpop.f32.mrb[0].mxu0
        %v3224 = vadd.f32 0.0, %v3223
        %v3225 = vpop.f32.mrb[0].mxu0
        %v3226 = vpop.f32.mrb[0].mxu0
        %v3227 = vadd.f32 0.0, %v3226
        %v3228 = vpop.f32.mrb[0].mxu0
        %3229 = vmatprep.mubr.bf16.mxu0 0
        %3230 = vmatmul.mubr.bf16.gmra.mrb[0].mxu0 %v1509
        %v3231 = vpop.f32.mrb[0].mxu0
        %v3232 = vadd.f32 0.0, %v3231
        %v3233 = vpop.f32.mrb[0].mxu0
        %v3234 = vpop.f32.mrb[0].mxu0
        %v3235 = vadd.f32 0.0, %v3234
        %v3236 = vpop.f32.mrb[0].mxu0
        %3237 = vdwg.mxu0
        %3242 = vrot.lane.b32.xlu0 %v3224, 32
        %v3243 = vpop.permute.xlu0 %3242
        %3244 = vrot.lane.b32.xlu0 %v3227, 32
        %v3245 = vpop.permute.xlu0 %3244
        %3246 = vrot.lane.b32.xlu0 %v3232, 32
        %v3247 = vpop.permute.xlu0 %3246
        %3248 = vrot.lane.b32.xlu0 %v3235, 32
        %v3249 = vpop.permute.xlu0 %3248
        %3258 = vrot.lane.b32.xlu0 %v2807, 32
        %v3259 = vpop.permute.xlu0 %3258
        %3260 = vrot.lane.b32.xlu0 %v2808, 32
        %v3261 = vpop.permute.xlu0 %3260
        %3262 = vrot.lane.b32.xlu0 %v2809, 32
        %v3263 = vpop.permute.xlu0 %3262
        %3264 = vrot.lane.b32.xlu0 %v2810, 32
        %v3265 = vpop.permute.xlu0 %3264
        %v3270 = vsel %vm831, %v3175, %v3243
        %v3271 = vsel %vm831, %v3178, %v3245
        %v3272 = vsel %vm831, %v3183, %v3247
        %v3273 = vsel %vm831, %v3186, %v3249
        %v3274 = vsel %vm940, %v3270, %v3259
        %v3275 = vsel %vm940, %v3271, %v3261
        %v3276 = vsel %vm940, %v3272, %v3263
        %v3277 = vsel %vm940, %v3273, %v3265
        %v3278 = vpack.c.bf16 %v3275, %v3274
        %v3279 = vpack.c.bf16 %v3277, %v3276
        %v3281 = vsel %vm1657, %v3278, 0
        %v3284 = vsel %vm1657, %v3279, 0
        %3286 = vmatprep.subr.bf16.mxu0 0
        %3287 = vmatpush1.bf16.msra.mxu0 %v1645
        %3288 = vmatprep.subr.bf16.mxu0 0
        %3289 = vmatpush1.bf16.msra.mxu0 %v1646
        %3290 = vmatprep.subr.bf16.mxu0 0
        %3291 = vmatpush1.bf16.msra.mxu0 %v1647
        %3292 = vmatprep.subr.bf16.mxu0 0
        %3293 = vmatpush1.bf16.msra.mxu0 %v1648
        %3294 = vmatprep.subr.bf16.mxu0 0
        %3295 = vmatpush1.bf16.msra.mxu0 %v1649
        %3296 = vmatprep.subr.bf16.mxu0 0
        %3297 = vmatpush1.bf16.msra.mxu0 %v1650
        %3298 = vmatprep.subr.bf16.mxu0 0
        %3299 = vmatpush1.bf16.msra.mxu0 0
        %3300 = vmatprep.subr.bf16.mxu0 0
        %3301 = vmatpush1.bf16.msra.mxu0 0
        %3302 = vmatprep.subr.bf16.mxu0 0
        %3303 = vmatpush1.bf16.msra.mxu0 0
        %3304 = vmatprep.subr.bf16.mxu0 0
        %3305 = vmatpush1.bf16.msra.mxu0 0
        %3306 = vmatprep.subr.bf16.mxu0 0
        %3307 = vmatpush1.bf16.msra.mxu0 0
        %3308 = vmatprep.subr.bf16.mxu0 0
        %3309 = vmatpush1.bf16.msra.mxu0 0
        %3310 = vmatprep.subr.bf16.mxu0 0
        %3311 = vmatpush1.bf16.msra.mxu0 0
        %3312 = vmatprep.subr.bf16.mxu0 0
        %3313 = vmatpush1.bf16.msra.mxu0 0
        %3314 = vmatprep.subr.bf16.mxu0 0
        %3315 = vmatpush1.bf16.msra.mxu0 0
        %3316 = vmatprep.subr.bf16.mxu0 0
        %3317 = vmatpush1.bf16.msra.mxu0 0
        %3318 = vmatprep.mubr.bf16.mxu0 0
        %3319 = vmatmul.mubr.bf16.gmra.mrb[0].mxu0 %v3281
        %v3320 = vpop.f32.mrb[0].mxu0
        %v3321 = vadd.f32 %v1619, %v3320
        %v3322 = vpop.f32.mrb[0].mxu0
        %v3323 = vpop.f32.mrb[0].mxu0
        %v3324 = vadd.f32 %v1619, %v3323
        %v3325 = vpop.f32.mrb[0].mxu0
        %3326 = vmatprep.mubr.bf16.mxu0 0
        %3327 = vmatmul.mubr.bf16.gmra.mrb[0].mxu0 %v3284
        %v3328 = vpop.f32.mrb[0].mxu0
        %v3329 = vadd.f32 %v1619, %v3328
        %v3330 = vpop.f32.mrb[0].mxu0
        %v3331 = vpop.f32.mrb[0].mxu0
        %v3332 = vadd.f32 %v1619, %v3331
        %v3333 = vpop.f32.mrb[0].mxu0
        %3334 = vdwg.mxu0
        %v3335 = vxor.u32 %v3321, 2147483648
        %v3336 = vxor.u32 %v3324, 2147483648
        %v3337 = vxor.u32 %v3329, 2147483648
        %v3338 = vxor.u32 %v3332, 2147483648
        %v3339 = vmul.f32 %v3335, 1.442695
        %v3340 = vpow.pop %v3339
        %v3341 = vmul.f32 %v3336, 1.442695
        %v3342 = vpow.pop %v3341
        %v3343 = vmul.f32 %v3337, 1.442695
        %v3344 = vpow.pop %v3343
        %v3345 = vmul.f32 %v3338, 1.442695
        %v3346 = vpow.pop %v3345
        %v3347 = vadd.f32 %v3340, 1.0
        %v3348 = vadd.f32 %v3342, 1.0
        %v3349 = vadd.f32 %v3344, 1.0
        %v3350 = vadd.f32 %v3346, 1.0
        %v3351 = vrcp.pop %v3347
        %v3352 = vmul.f32 1.0, %v3351
        %v3353 = vrcp.pop %v3348
        %v3354 = vmul.f32 1.0, %v3353
        %v3355 = vrcp.pop %v3349
        %v3356 = vmul.f32 1.0, %v3355
        %v3357 = vrcp.pop %v3350
        %v3358 = vmul.f32 1.0, %v3357
        %3360 = vset.pattern.permute.xlu0 0
        %3361 = vperm.xlu0 %3360, %v3352
        %v3362 = vpop.permute.xlu0 %3361
        %3365 = vset.pattern.permute.xlu0 0
        %3366 = vperm.xlu0 %3365, %v3354
        %v3367 = vpop.permute.xlu0 %3366
        %3370 = vset.pattern.permute.xlu0 0
        %3371 = vperm.xlu0 %3370, %v3356
        %v3372 = vpop.permute.xlu0 %3371
        %3375 = vset.pattern.permute.xlu0 0
        %3376 = vperm.xlu0 %3375, %v3358
        %v3377 = vpop.permute.xlu0 %3376
        %v3379 = vmul.f32 %v3362, %v3175
        %v3380 = vmul.f32 %v3367, %v3178
        %v3381 = vmul.f32 %v3372, %v3183
        %v3382 = vmul.f32 %v3377, %v3186
        %3383 = vset.pattern.permute.xlu0 1
        %3384 = vperm.xlu0 %3383, %v3352
        %v3385 = vpop.permute.xlu0 %3384
        %3387 = vset.pattern.permute.xlu0 1
        %3388 = vperm.xlu0 %3387, %v3354
        %v3389 = vpop.permute.xlu0 %3388
        %3391 = vset.pattern.permute.xlu0 1
        %3392 = vperm.xlu0 %3391, %v3356
        %v3393 = vpop.permute.xlu0 %3392
        %3395 = vset.pattern.permute.xlu0 1
        %3396 = vperm.xlu0 %3395, %v3358
        %v3397 = vpop.permute.xlu0 %3396
        %v3399 = vmul.f32 %v3385, %v3224
        %v3400 = vmul.f32 %v3389, %v3227
        %v3401 = vmul.f32 %v3393, %v3232
        %v3402 = vmul.f32 %v3397, %v3235
        %v3403 = vadd.f32 %v3379, %v3399
        %v3404 = vadd.f32 %v3380, %v3400
        %v3405 = vadd.f32 %v3381, %v3401
        %v3406 = vadd.f32 %v3382, %v3402
        %v3407 = vsel %vm831, %v3403, %v2807
        %v3408 = vsel %vm831, %v3404, %v2808
        %v3409 = vsel %vm831, %v3405, %v2809
        %v3410 = vsel %vm831, %v3406, %v2810
        %v3411 = vpack.c.bf16 %v3408, %v3407
        %v3412 = vpack.c.bf16 %v3410, %v3409
        %v3414 = vsel %vm940, %v3411, 0
        %v3417 = vsel %vm940, %v3412, 0
        %3419 = vmatprep.subr.bf16.mxu0 0
        %3420 = vmatpush1.bf16.msra.mxu0 %v1815
        %3421 = vmatprep.subr.bf16.mxu0 0
        %3422 = vmatpush1.bf16.msra.mxu0 %v1816
        %3423 = vmatprep.subr.bf16.mxu0 0
        %3424 = vmatpush1.bf16.msra.mxu0 %v1817
        %3425 = vmatprep.subr.bf16.mxu0 0
        %3426 = vmatpush1.bf16.msra.mxu0 %v1818
        %3427 = vmatprep.subr.bf16.mxu0 0
        %3428 = vmatpush1.bf16.msra.mxu0 0
        %3429 = vmatprep.subr.bf16.mxu0 0
        %3430 = vmatpush1.bf16.msra.mxu0 0
        %3431 = vmatprep.subr.bf16.mxu0 0
        %3432 = vmatpush1.bf16.msra.mxu0 0
        %3433 = vmatprep.subr.bf16.mxu0 0
        %3434 = vmatpush1.bf16.msra.mxu0 0
        %3435 = vmatprep.subr.bf16.mxu0 0
        %3436 = vmatpush1.bf16.msra.mxu0 0
        %3437 = vmatprep.subr.bf16.mxu0 0
        %3438 = vmatpush1.bf16.msra.mxu0 0
        %3439 = vmatprep.subr.bf16.mxu0 0
        %3440 = vmatpush1.bf16.msra.mxu0 0
        %3441 = vmatprep.subr.bf16.mxu0 0
        %3442 = vmatpush1.bf16.msra.mxu0 0
        %3443 = vmatprep.subr.bf16.mxu0 0
        %3444 = vmatpush1.bf16.msra.mxu0 0
        %3445 = vmatprep.subr.bf16.mxu0 0
        %3446 = vmatpush1.bf16.msra.mxu0 0
        %3447 = vmatprep.subr.bf16.mxu0 0
        %3448 = vmatpush1.bf16.msra.mxu0 0
        %3449 = vmatprep.subr.bf16.mxu0 0
        %3450 = vmatpush1.bf16.msra.mxu0 0
        %3451 = vmatprep.mubr.bf16.mxu0 0
        %3452 = vmatmul.mubr.bf16.gmra.mrb[0].mxu0 %v3414
        %v3453 = vpop.f32.mrb[0].mxu0
        %v3454 = vadd.f32 %v1279, %v3453
        %v3455 = vpop.f32.mrb[0].mxu0
        %v3456 = vpop.f32.mrb[0].mxu0
        %v3457 = vadd.f32 %v1279, %v3456
        %v3458 = vpop.f32.mrb[0].mxu0
        %3459 = vmatprep.mubr.bf16.mxu0 0
        %3460 = vmatmul.mubr.bf16.gmra.mrb[0].mxu0 %v3417
        %v3461 = vpop.f32.mrb[0].mxu0
        %v3462 = vadd.f32 %v1279, %v3461
        %v3463 = vpop.f32.mrb[0].mxu0
        %v3464 = vpop.f32.mrb[0].mxu0
        %v3465 = vadd.f32 %v1279, %v3464
        %v3466 = vpop.f32.mrb[0].mxu0
        %3467 = vdwg.mxu0
        %v3468 = vxor.u32 %v3454, 2147483648
        %v3469 = vxor.u32 %v3457, 2147483648
        %v3470 = vxor.u32 %v3462, 2147483648
        %v3471 = vxor.u32 %v3465, 2147483648
        %v3472 = vmul.f32 %v3468, 1.442695
        %v3473 = vpow.pop %v3472
        %v3474 = vmul.f32 %v3469, 1.442695
        %v3475 = vpow.pop %v3474
        %v3476 = vmul.f32 %v3470, 1.442695
        %v3477 = vpow.pop %v3476
        %v3478 = vmul.f32 %v3471, 1.442695
        %v3479 = vpow.pop %v3478
        %v3480 = vadd.f32 %v3473, 1.0
        %v3481 = vadd.f32 %v3475, 1.0
        %v3482 = vadd.f32 %v3477, 1.0
        %v3483 = vadd.f32 %v3479, 1.0
        %v3484 = vrcp.pop %v3480
        %v3485 = vmul.f32 1.0, %v3484
        %v3486 = vrcp.pop %v3481
        %v3487 = vmul.f32 1.0, %v3486
        %v3488 = vrcp.pop %v3482
        %v3489 = vmul.f32 1.0, %v3488
        %v3490 = vrcp.pop %v3483
        %v3491 = vmul.f32 1.0, %v3490
        %3496 = vrot.lane.b32.xlu0 %v3454, 32
        %v3497 = vpop.permute.xlu0 %3496
        %3498 = vrot.lane.b32.xlu0 %v3457, 32
        %v3499 = vpop.permute.xlu0 %3498
        %3500 = vrot.lane.b32.xlu0 %v3462, 32
        %v3501 = vpop.permute.xlu0 %3500
        %3502 = vrot.lane.b32.xlu0 %v3465, 32
        %v3503 = vpop.permute.xlu0 %3502
        %v3508 = vmul.f32 %v3485, %v3497
        %v3509 = vmul.f32 %v3487, %v3499
        %v3510 = vmul.f32 %v3489, %v3501
        %v3511 = vmul.f32 %v3491, %v3503
        %3516 = vrot.lane.b32.xlu0 %v3508, 64
        %v3517 = vpop.permute.xlu0 %3516
        %3518 = vrot.lane.b32.xlu0 %v3509, 64
        %v3519 = vpop.permute.xlu0 %3518
        %3520 = vrot.lane.b32.xlu0 %v3510, 64
        %v3521 = vpop.permute.xlu0 %3520
        %3522 = vrot.lane.b32.xlu0 %v3511, 64
        %v3523 = vpop.permute.xlu0 %3522
        %v3528 = vadd.f32 %v3454, %v3517
        %v3529 = vadd.f32 %v3457, %v3519
        %v3530 = vadd.f32 %v3462, %v3521
        %v3531 = vadd.f32 %v3465, %v3523
        %v3532 = vtanh.pop %v3528
        %v3533 = vtanh.pop %v3529
        %v3534 = vtanh.pop %v3530
        %v3535 = vtanh.pop %v3531
        %v3536 = vsub.f32 1.0, %v3485
        %v3537 = vsub.f32 1.0, %v3487
        %v3538 = vsub.f32 1.0, %v3489
        %v3539 = vsub.f32 1.0, %v3491
        %3544 = vrot.lane.b32.xlu0 %v3532, 96
        %v3545 = vpop.permute.xlu0 %3544
        %3546 = vrot.lane.b32.xlu0 %v3533, 96
        %v3547 = vpop.permute.xlu0 %3546
        %3548 = vrot.lane.b32.xlu0 %v3534, 96
        %v3549 = vpop.permute.xlu0 %3548
        %3550 = vrot.lane.b32.xlu0 %v3535, 96
        %v3551 = vpop.permute.xlu0 %3550
        %v3556 = vmul.f32 %v3536, %v3545
        %v3557 = vmul.f32 %v3537, %v3547
        %v3558 = vmul.f32 %v3538, %v3549
        %v3559 = vmul.f32 %v3539, %v3551
        %v3560 = vmul.f32 %v3485, %v2807
        %v3561 = vmul.f32 %v3487, %v2808
        %v3562 = vmul.f32 %v3489, %v2809
        %v3563 = vmul.f32 %v3491, %v2810
        %v3564 = vadd.f32 %v3556, %v3560
        %v3565 = vadd.f32 %v3557, %v3561
        %v3566 = vadd.f32 %v3558, %v3562
        %v3567 = vadd.f32 %v3559, %v3563
        %3568 = vset.pattern.permute.xlu0 2
        %3569 = vperm.xlu0 %3568, %v3352
        %v3570 = vpop.permute.xlu0 %3569
        %3572 = vset.pattern.permute.xlu0 2
        %3573 = vperm.xlu0 %3572, %v3354
        %v3574 = vpop.permute.xlu0 %3573
        %3576 = vset.pattern.permute.xlu0 2
        %3577 = vperm.xlu0 %3576, %v3356
        %v3578 = vpop.permute.xlu0 %3577
        %3580 = vset.pattern.permute.xlu0 2
        %3581 = vperm.xlu0 %3580, %v3358
        %v3582 = vpop.permute.xlu0 %3581
        %v3584 = vmul.f32 %v3570, %v2807
        %v3585 = vmul.f32 %v3574, %v2808
        %v3586 = vmul.f32 %v3578, %v2809
        %v3587 = vmul.f32 %v3582, %v2810
        %v3588 = vpack.c.bf16 %v3585, %v3584
        %v3589 = vpack.c.bf16 %v3587, %v3586
        %3590 = vset.pattern.permute.xlu0 3
        %3591 = vperm.xlu0 %3590, %v3352
        %v3592 = vpop.permute.xlu0 %3591
        %3594 = vset.pattern.permute.xlu0 3
        %3595 = vperm.xlu0 %3594, %v3354
        %v3596 = vpop.permute.xlu0 %3595
        %3598 = vset.pattern.permute.xlu0 3
        %3599 = vperm.xlu0 %3598, %v3356
        %v3600 = vpop.permute.xlu0 %3599
        %3602 = vset.pattern.permute.xlu0 3
        %3603 = vperm.xlu0 %3602, %v3358
        %v3604 = vpop.permute.xlu0 %3603
        %v3606 = vmul.f32 %v3592, %v2807
        %v3607 = vmul.f32 %v3596, %v2808
        %v3608 = vmul.f32 %v3600, %v2809
        %v3609 = vmul.f32 %v3604, %v2810
        %v3610 = vpack.c.bf16 %v3607, %v3606
        %v3611 = vpack.c.bf16 %v3609, %v3608
        %3614 = vrot.lane.b32.xlu0 %v3610, 96
        %v3615 = vpop.permute.xlu0 %3614
        %3616 = vrot.lane.b32.xlu0 %v3611, 96
        %v3617 = vpop.permute.xlu0 %3616
        %3620 = vmatprep.subr.bf16.mxu0 0
        %3621 = vmatpush1.bf16.msra.mxu0 %v3615
        %3622 = vmatprep.subr.bf16.mxu0 0
        %3623 = vmatpush1.bf16.msra.mxu0 %v3617
        %3624 = vmatprep.subr.bf16.mxu0 0
        %3625 = vmatpush1.bf16.msra.mxu0 0
        %3626 = vmatprep.subr.bf16.mxu0 0
        %3627 = vmatpush1.bf16.msra.mxu0 0
        %3628 = vmatprep.subr.bf16.mxu0 0
        %3629 = vmatpush1.bf16.msra.mxu0 0
        %3630 = vmatprep.subr.bf16.mxu0 0
        %3631 = vmatpush1.bf16.msra.mxu0 0
        %3632 = vmatprep.subr.bf16.mxu0 0
        %3633 = vmatpush1.bf16.msra.mxu0 0
        %3634 = vmatprep.subr.bf16.mxu0 0
        %3635 = vmatpush1.bf16.msra.mxu0 0
        %3636 = vmatprep.subr.bf16.mxu0 0
        %3637 = vmatpush1.bf16.msra.mxu0 0
        %3638 = vmatprep.subr.bf16.mxu0 0
        %3639 = vmatpush1.bf16.msra.mxu0 0
        %3640 = vmatprep.subr.bf16.mxu0 0
        %3641 = vmatpush1.bf16.msra.mxu0 0
        %3642 = vmatprep.subr.bf16.mxu0 0
        %3643 = vmatpush1.bf16.msra.mxu0 0
        %3644 = vmatprep.subr.bf16.mxu0 0
        %3645 = vmatpush1.bf16.msra.mxu0 0
        %3646 = vmatprep.subr.bf16.mxu0 0
        %3647 = vmatpush1.bf16.msra.mxu0 0
        %3648 = vmatprep.subr.bf16.mxu0 0
        %3649 = vmatpush1.bf16.msra.mxu0 0
        %3650 = vmatprep.subr.bf16.mxu0 0
        %3651 = vmatpush1.bf16.msra.mxu0 0
        %3652 = vmatprep.mubr.bf16.mxu0 0
        %3653 = vmatmul.mubr.bf16.gmra.mrb[0].mxu0 %v2047
        %v3654 = vpop.f32.mrb[0].mxu0
        %v3655 = vadd.f32 0.0, %v3654
        %v3656 = vpop.f32.mrb[0].mxu0
        %v3657 = vpop.f32.mrb[0].mxu0
        %v3658 = vadd.f32 0.0, %v3657
        %v3659 = vpop.f32.mrb[0].mxu0
        %3660 = vmatprep.mubr.bf16.mxu0 0
        %3661 = vmatmul.mubr.bf16.gmra.mrb[0].mxu0 %v2050
        %v3662 = vpop.f32.mrb[0].mxu0
        %v3663 = vadd.f32 0.0, %v3662
        %v3664 = vpop.f32.mrb[0].mxu0
        %v3665 = vpop.f32.mrb[0].mxu0
        %v3666 = vadd.f32 0.0, %v3665
        %v3667 = vpop.f32.mrb[0].mxu0
        %3668 = vdwg.mxu0
        %3671 = vrot.lane.b32.xlu0 %v3588, 96
        %v3672 = vpop.permute.xlu0 %3671
        %3673 = vrot.lane.b32.xlu0 %v3589, 96
        %v3674 = vpop.permute.xlu0 %3673
        %3677 = vmatprep.subr.bf16.mxu0 0
        %3678 = vmatpush1.bf16.msra.mxu0 %v3672
        %3679 = vmatprep.subr.bf16.mxu0 0
        %3680 = vmatpush1.bf16.msra.mxu0 %v3674
        %3681 = vmatprep.subr.bf16.mxu0 0
        %3682 = vmatpush1.bf16.msra.mxu0 0
        %3683 = vmatprep.subr.bf16.mxu0 0
        %3684 = vmatpush1.bf16.msra.mxu0 0
        %3685 = vmatprep.subr.bf16.mxu0 0
        %3686 = vmatpush1.bf16.msra.mxu0 0
        %3687 = vmatprep.subr.bf16.mxu0 0
        %3688 = vmatpush1.bf16.msra.mxu0 0
        %3689 = vmatprep.subr.bf16.mxu0 0
        %3690 = vmatpush1.bf16.msra.mxu0 0
        %3691 = vmatprep.subr.bf16.mxu0 0
        %3692 = vmatpush1.bf16.msra.mxu0 0
        %3693 = vmatprep.subr.bf16.mxu0 0
        %3694 = vmatpush1.bf16.msra.mxu0 0
        %3695 = vmatprep.subr.bf16.mxu0 0
        %3696 = vmatpush1.bf16.msra.mxu0 0
        %3697 = vmatprep.subr.bf16.mxu0 0
        %3698 = vmatpush1.bf16.msra.mxu0 0
        %3699 = vmatprep.subr.bf16.mxu0 0
        %3700 = vmatpush1.bf16.msra.mxu0 0
        %3701 = vmatprep.subr.bf16.mxu0 0
        %3702 = vmatpush1.bf16.msra.mxu0 0
        %3703 = vmatprep.subr.bf16.mxu0 0
        %3704 = vmatpush1.bf16.msra.mxu0 0
        %3705 = vmatprep.subr.bf16.mxu0 0
        %3706 = vmatpush1.bf16.msra.mxu0 0
        %3707 = vmatprep.subr.bf16.mxu0 0
        %3708 = vmatpush1.bf16.msra.mxu0 0
        %3709 = vmatprep.mubr.bf16.mxu0 0
        %3710 = vmatmul.mubr.bf16.gmra.mrb[0].mxu0 %v2126
        %v3711 = vpop.f32.mrb[0].mxu0
        %v3712 = vadd.f32 %v3655, %v3711
        %v3713 = vpop.f32.mrb[0].mxu0
        %v3714 = vpop.f32.mrb[0].mxu0
        %v3715 = vadd.f32 %v3658, %v3714
        %v3716 = vpop.f32.mrb[0].mxu0
        %3717 = vmatprep.mubr.bf16.mxu0 0
        %3718 = vmatmul.mubr.bf16.gmra.mrb[0].mxu0 %v2129
        %v3719 = vpop.f32.mrb[0].mxu0
        %v3720 = vadd.f32 %v3663, %v3719
        %v3721 = vpop.f32.mrb[0].mxu0
        %v3722 = vpop.f32.mrb[0].mxu0
        %v3723 = vadd.f32 %v3666, %v3722
        %v3724 = vpop.f32.mrb[0].mxu0
        %3725 = vdwg.mxu0
        %v3726 = vsel %vm831, %v3712, %v3126
        %v3727 = vsel %vm831, %v3715, %v3127
        %v3728 = vsel %vm831, %v3720, %v3128
        %v3729 = vsel %vm831, %v3723, %v3129
        %v3730 = vpack.c.bf16 %v3727, %v3726
        %v3731 = vpack.c.bf16 %v3729, %v3728
        %v3733 = vsel %vm940, %v3730, 0
        %v3736 = vsel %vm940, %v3731, 0
        %3738 = vmatprep.subr.bf16.mxu0 0
        %3739 = vmatpush1.bf16.msra.mxu0 %v2210
        %3740 = vmatprep.subr.bf16.mxu0 0
        %3741 = vmatpush1.bf16.msra.mxu0 %v2211
        %3742 = vmatprep.subr.bf16.mxu0 0
        %3743 = vmatpush1.bf16.msra.mxu0 %v2212
        %3744 = vmatprep.subr.bf16.mxu0 0
        %3745 = vmatpush1.bf16.msra.mxu0 %v2213
        %3746 = vmatprep.subr.bf16.mxu0 0
        %3747 = vmatpush1.bf16.msra.mxu0 0
        %3748 = vmatprep.subr.bf16.mxu0 0
        %3749 = vmatpush1.bf16.msra.mxu0 0
        %3750 = vmatprep.subr.bf16.mxu0 0
        %3751 = vmatpush1.bf16.msra.mxu0 0
        %3752 = vmatprep.subr.bf16.mxu0 0
        %3753 = vmatpush1.bf16.msra.mxu0 0
        %3754 = vmatprep.subr.bf16.mxu0 0
        %3755 = vmatpush1.bf16.msra.mxu0 0
        %3756 = vmatprep.subr.bf16.mxu0 0
        %3757 = vmatpush1.bf16.msra.mxu0 0
        %3758 = vmatprep.subr.bf16.mxu0 0
        %3759 = vmatpush1.bf16.msra.mxu0 0
        %3760 = vmatprep.subr.bf16.mxu0 0
        %3761 = vmatpush1.bf16.msra.mxu0 0
        %3762 = vmatprep.subr.bf16.mxu0 0
        %3763 = vmatpush1.bf16.msra.mxu0 0
        %3764 = vmatprep.subr.bf16.mxu0 0
        %3765 = vmatpush1.bf16.msra.mxu0 0
        %3766 = vmatprep.subr.bf16.mxu0 0
        %3767 = vmatpush1.bf16.msra.mxu0 0
        %3768 = vmatprep.subr.bf16.mxu0 0
        %3769 = vmatpush1.bf16.msra.mxu0 0
        %3770 = vmatprep.mubr.bf16.mxu0 0
        %3771 = vmatmul.mubr.bf16.gmra.mrb[0].mxu0 %v3733
        %v3772 = vpop.f32.mrb[0].mxu0
        %v3773 = vadd.f32 %v1107, %v3772
        %v3774 = vpop.f32.mrb[0].mxu0
        %v3775 = vpop.f32.mrb[0].mxu0
        %v3776 = vadd.f32 %v1107, %v3775
        %v3777 = vpop.f32.mrb[0].mxu0
        %3778 = vmatprep.mubr.bf16.mxu0 0
        %3779 = vmatmul.mubr.bf16.gmra.mrb[0].mxu0 %v3736
        %v3780 = vpop.f32.mrb[0].mxu0
        %v3781 = vadd.f32 %v1107, %v3780
        %v3782 = vpop.f32.mrb[0].mxu0
        %v3783 = vpop.f32.mrb[0].mxu0
        %v3784 = vadd.f32 %v1107, %v3783
        %v3785 = vpop.f32.mrb[0].mxu0
        %3786 = vdwg.mxu0
        %v3787 = vxor.u32 %v3773, 2147483648
        %v3788 = vxor.u32 %v3776, 2147483648
        %v3789 = vxor.u32 %v3781, 2147483648
        %v3790 = vxor.u32 %v3784, 2147483648
        %v3791 = vmul.f32 %v3787, 1.442695
        %v3792 = vpow.pop %v3791
        %v3793 = vmul.f32 %v3788, 1.442695
        %v3794 = vpow.pop %v3793
        %v3795 = vmul.f32 %v3789, 1.442695
        %v3796 = vpow.pop %v3795
        %v3797 = vmul.f32 %v3790, 1.442695
        %v3798 = vpow.pop %v3797
        %v3799 = vadd.f32 %v3792, 1.0
        %v3800 = vadd.f32 %v3794, 1.0
        %v3801 = vadd.f32 %v3796, 1.0
        %v3802 = vadd.f32 %v3798, 1.0
        %v3803 = vrcp.pop %v3799
        %v3804 = vmul.f32 1.0, %v3803
        %v3805 = vrcp.pop %v3800
        %v3806 = vmul.f32 1.0, %v3805
        %v3807 = vrcp.pop %v3801
        %v3808 = vmul.f32 1.0, %v3807
        %v3809 = vrcp.pop %v3802
        %v3810 = vmul.f32 1.0, %v3809
        %3815 = vrot.lane.b32.xlu0 %v3773, 32
        %v3816 = vpop.permute.xlu0 %3815
        %3817 = vrot.lane.b32.xlu0 %v3776, 32
        %v3818 = vpop.permute.xlu0 %3817
        %3819 = vrot.lane.b32.xlu0 %v3781, 32
        %v3820 = vpop.permute.xlu0 %3819
        %3821 = vrot.lane.b32.xlu0 %v3784, 32
        %v3822 = vpop.permute.xlu0 %3821
        %v3827 = vmul.f32 %v3804, %v3816
        %v3828 = vmul.f32 %v3806, %v3818
        %v3829 = vmul.f32 %v3808, %v3820
        %v3830 = vmul.f32 %v3810, %v3822
        %3835 = vrot.lane.b32.xlu0 %v3827, 64
        %v3836 = vpop.permute.xlu0 %3835
        %3837 = vrot.lane.b32.xlu0 %v3828, 64
        %v3838 = vpop.permute.xlu0 %3837
        %3839 = vrot.lane.b32.xlu0 %v3829, 64
        %v3840 = vpop.permute.xlu0 %3839
        %3841 = vrot.lane.b32.xlu0 %v3830, 64
        %v3842 = vpop.permute.xlu0 %3841
        %v3847 = vadd.f32 %v3773, %v3836
        %v3848 = vadd.f32 %v3776, %v3838
        %v3849 = vadd.f32 %v3781, %v3840
        %v3850 = vadd.f32 %v3784, %v3842
        %v3851 = vtanh.pop %v3847
        %v3852 = vtanh.pop %v3848
        %v3853 = vtanh.pop %v3849
        %v3854 = vtanh.pop %v3850
        %v3855 = vsub.f32 1.0, %v3804
        %v3856 = vsub.f32 1.0, %v3806
        %v3857 = vsub.f32 1.0, %v3808
        %v3858 = vsub.f32 1.0, %v3810
        %3863 = vrot.lane.b32.xlu0 %v3851, 96
        %v3864 = vpop.permute.xlu0 %3863
        %3865 = vrot.lane.b32.xlu0 %v3852, 96
        %v3866 = vpop.permute.xlu0 %3865
        %3867 = vrot.lane.b32.xlu0 %v3853, 96
        %v3868 = vpop.permute.xlu0 %3867
        %3869 = vrot.lane.b32.xlu0 %v3854, 96
        %v3870 = vpop.permute.xlu0 %3869
        %v3875 = vmul.f32 %v3855, %v3864
        %v3876 = vmul.f32 %v3856, %v3866
        %v3877 = vmul.f32 %v3857, %v3868
        %v3878 = vmul.f32 %v3858, %v3870
        %v3879 = vmul.f32 %v3804, %v3126
        %v3880 = vmul.f32 %v3806, %v3127
        %v3881 = vmul.f32 %v3808, %v3128
        %v3882 = vmul.f32 %v3810, %v3129
        %v3883 = vadd.f32 %v3875, %v3879
        %v3884 = vadd.f32 %v3876, %v3880
        %v3885 = vadd.f32 %v3877, %v3881
        %v3886 = vadd.f32 %v3878, %v3882
        %v3887 = vpack.c.bf16 %v3884, %v3883
        %v3888 = vpack.c.bf16 %v3886, %v3885
        %v3889 = vld [vmem:[%s16] sm:$0xf]
        %v3890 = vld [vmem:[%s16 + $0x4] sm:$0xf]
        %v3891 = vld [vmem:[%s16 + $0x8] sm:$0xf]
        %v3892 = vld [vmem:[%s16 + $0xc] sm:$0xf]
        %v3893 = vld [vmem:[%s17] sm:$0x1]
        %v3895 = vlaneseq
        %v3896 = vshrl.u32 %v3895, 7
        %v3897 = vsub.s32 0, %v3896
        %v3898 = vrot.slane %v3893, %v3897
        %3902 = vrot.lane.b32.xlu0 %v3887, 96
        %v3903 = vpop.permute.xlu0 %3902
        %3904 = vrot.lane.b32.xlu0 %v3888, 96
        %v3905 = vpop.permute.xlu0 %3904
        %v3910 = vunpack.c.l.b16 %v3889
        %v3911 = vunpack.c.l.b16 %v3890
        %v3912 = vunpack.c.l.b16 %v3891
        %v3913 = vunpack.c.l.b16 %v3892
        %v3914 = vpack.c.b16 %v3911, %v3910
        %v3915 = vpack.c.b16 %v3913, %v3912
        %v3919 = vsel %vm831, %v3903, 0
        %v3922 = vsel %vm831, %v3905, 0
        %3924 = vmatprep.subr.bf16.mxu0 0
        %3925 = vmatpush1.bf16.msra.mxu0 %v3914
        %3926 = vmatprep.subr.bf16.mxu0 0
        %3927 = vmatpush1.bf16.msra.mxu0 %v3915
        %3928 = vmatprep.subr.bf16.mxu0 0
        %3929 = vmatpush1.bf16.msra.mxu0 0
        %3930 = vmatprep.subr.bf16.mxu0 0
        %3931 = vmatpush1.bf16.msra.mxu0 0
        %3932 = vmatprep.subr.bf16.mxu0 0
        %3933 = vmatpush1.bf16.msra.mxu0 0
        %3934 = vmatprep.subr.bf16.mxu0 0
        %3935 = vmatpush1.bf16.msra.mxu0 0
        %3936 = vmatprep.subr.bf16.mxu0 0
        %3937 = vmatpush1.bf16.msra.mxu0 0
        %3938 = vmatprep.subr.bf16.mxu0 0
        %3939 = vmatpush1.bf16.msra.mxu0 0
        %3940 = vmatprep.subr.bf16.mxu0 0
        %3941 = vmatpush1.bf16.msra.mxu0 0
        %3942 = vmatprep.subr.bf16.mxu0 0
        %3943 = vmatpush1.bf16.msra.mxu0 0
        %3944 = vmatprep.subr.bf16.mxu0 0
        %3945 = vmatpush1.bf16.msra.mxu0 0
        %3946 = vmatprep.subr.bf16.mxu0 0
        %3947 = vmatpush1.bf16.msra.mxu0 0
        %3948 = vmatprep.subr.bf16.mxu0 0
        %3949 = vmatpush1.bf16.msra.mxu0 0
        %3950 = vmatprep.subr.bf16.mxu0 0
        %3951 = vmatpush1.bf16.msra.mxu0 0
        %3952 = vmatprep.subr.bf16.mxu0 0
        %3953 = vmatpush1.bf16.msra.mxu0 0
        %3954 = vmatprep.subr.bf16.mxu0 0
        %3955 = vmatpush1.bf16.msra.mxu0 0
        %3956 = vmatprep.mubr.bf16.mxu0 0
        %3957 = vmatmul.mubr.bf16.gmra.mrb[0].mxu0 %v3919
        %v3958 = vpop.f32.mrb[0].mxu0
        %v3959 = vadd.f32 %v3898, %v3958
        %v3960 = vpop.f32.mrb[0].mxu0
        %v3961 = vpop.f32.mrb[0].mxu0
        %v3962 = vadd.f32 %v3898, %v3961
        %v3963 = vpop.f32.mrb[0].mxu0
        %3964 = vmatprep.mubr.bf16.mxu0 0
        %3965 = vmatmul.mubr.bf16.gmra.mrb[0].mxu0 %v3922
        %v3966 = vpop.f32.mrb[0].mxu0
        %v3967 = vadd.f32 %v3898, %v3966
        %v3968 = vpop.f32.mrb[0].mxu0
        %v3969 = vpop.f32.mrb[0].mxu0
        %v3970 = vadd.f32 %v3898, %v3969
        %v3971 = vpop.f32.mrb[0].mxu0
        %3972 = vdwg.mxu0
        %3973 = vst [vmem:[%s711] sm:$0xff] %v3959
        %3974 = vst [vmem:[%s711 + $0x8] sm:$0xff] %v3962
        %3975 = vst [vmem:[%s711 + $0x10] sm:$0xff] %v3967
        %3976 = vst [vmem:[%s711 + $0x18] sm:$0xff] %v3970
        %v3977 = vpack.c.bf16 %v3565, %v3564
        %v3978 = vpack.c.bf16 %v3567, %v3566
        %v3979 = vld [vmem:[%s18] sm:$0xf]
        %v3980 = vld [vmem:[%s18 + $0x4] sm:$0xf]
        %v3981 = vld [vmem:[%s18 + $0x8] sm:$0xf]
        %v3982 = vld [vmem:[%s18 + $0xc] sm:$0xf]
        %v3983 = vld [vmem:[%s19] sm:$0x1]
        %v3985 = vlaneseq
        %v3986 = vshrl.u32 %v3985, 7
        %v3987 = vsub.s32 0, %v3986
        %v3988 = vrot.slane %v3983, %v3987
        %3992 = vrot.lane.b32.xlu0 %v3977, 96
        %v3993 = vpop.permute.xlu0 %3992
        %3994 = vrot.lane.b32.xlu0 %v3978, 96
        %v3995 = vpop.permute.xlu0 %3994
        %v4000 = vunpack.c.l.b16 %v3979
        %v4001 = vunpack.c.l.b16 %v3980
        %v4002 = vunpack.c.l.b16 %v3981
        %v4003 = vunpack.c.l.b16 %v3982
        %v4004 = vpack.c.b16 %v4001, %v4000
        %v4005 = vpack.c.b16 %v4003, %v4002
        %v4009 = vsel %vm831, %v3993, 0
        %v4012 = vsel %vm831, %v3995, 0
        %4014 = vmatprep.subr.bf16.mxu0 0
        %4015 = vmatpush1.bf16.msra.mxu0 %v4004
        %4016 = vmatprep.subr.bf16.mxu0 0
        %4017 = vmatpush1.bf16.msra.mxu0 %v4005
        %4018 = vmatprep.subr.bf16.mxu0 0
        %4019 = vmatpush1.bf16.msra.mxu0 0
        %4020 = vmatprep.subr.bf16.mxu0 0
        %4021 = vmatpush1.bf16.msra.mxu0 0
        %4022 = vmatprep.subr.bf16.mxu0 0
        %4023 = vmatpush1.bf16.msra.mxu0 0
        %4024 = vmatprep.subr.bf16.mxu0 0
        %4025 = vmatpush1.bf16.msra.mxu0 0
        %4026 = vmatprep.subr.bf16.mxu0 0
        %4027 = vmatpush1.bf16.msra.mxu0 0
        %4028 = vmatprep.subr.bf16.mxu0 0
        %4029 = vmatpush1.bf16.msra.mxu0 0
        %4030 = vmatprep.subr.bf16.mxu0 0
        %4031 = vmatpush1.bf16.msra.mxu0 0
        %4032 = vmatprep.subr.bf16.mxu0 0
        %4033 = vmatpush1.bf16.msra.mxu0 0
        %4034 = vmatprep.subr.bf16.mxu0 0
        %4035 = vmatpush1.bf16.msra.mxu0 0
        %4036 = vmatprep.subr.bf16.mxu0 0
        %4037 = vmatpush1.bf16.msra.mxu0 0
        %4038 = vmatprep.subr.bf16.mxu0 0
        %4039 = vmatpush1.bf16.msra.mxu0 0
        %4040 = vmatprep.subr.bf16.mxu0 0
        %4041 = vmatpush1.bf16.msra.mxu0 0
        %4042 = vmatprep.subr.bf16.mxu0 0
        %4043 = vmatpush1.bf16.msra.mxu0 0
        %4044 = vmatprep.subr.bf16.mxu0 0
        %4045 = vmatpush1.bf16.msra.mxu0 0
        %4046 = vmatprep.mubr.bf16.mxu0 0
        %4047 = vmatmul.mubr.bf16.gmra.mrb[0].mxu0 %v4009
        %v4048 = vpop.f32.mrb[0].mxu0
        %v4049 = vadd.f32 %v3988, %v4048
        %v4050 = vpop.f32.mrb[0].mxu0
        %v4051 = vpop.f32.mrb[0].mxu0
        %v4052 = vadd.f32 %v3988, %v4051
        %v4053 = vpop.f32.mrb[0].mxu0
        %4054 = vmatprep.mubr.bf16.mxu0 0
        %4055 = vmatmul.mubr.bf16.gmra.mrb[0].mxu0 %v4012
        %v4056 = vpop.f32.mrb[0].mxu0
        %v4057 = vadd.f32 %v3988, %v4056
        %v4058 = vpop.f32.mrb[0].mxu0
        %v4059 = vpop.f32.mrb[0].mxu0
        %v4060 = vadd.f32 %v3988, %v4059
        %v4061 = vpop.f32.mrb[0].mxu0
        %4062 = vdwg.mxu0
        %4063 = vst [vmem:[%s718] sm:$0xff] %v4049
        %4064 = vst [vmem:[%s718 + $0x8] sm:$0xff] %v4052
        %4065 = vst [vmem:[%s718 + $0x10] sm:$0xff] %v4057
        %4066 = vst [vmem:[%s718 + $0x18] sm:$0xff] %v4060
        %s4067 = sand.u32 %s488, 1
        %s4068 = scalar_lea.sflag [#allocation4], %s4067
        %s4069 = sand.u32 %s488, 1
        %s4070 = smul.addr %s4069, 32
        %s4071 = scalar_lea.vmem [#allocation5], %s4070
        %s4072 = sand.u32 %s514, 1
        %s4073 = scalar_lea.sflag [#allocation7], %s4072
        %s4074 = sand.u32 %s514, 1
        %s4075 = smul.addr %s4074, 32
        %s4076 = scalar_lea.vmem [#allocation6], %s4075
        // Predicated region
        $region105: #{tpu_custom_call.1} parent=99 // pred_check
          %p4077 = pneg %p498
        $region106: #{tpu_custom_call.1} parent=99 // pred_check_branch
          %4079 = sbr.rel (%p4077) target = $region108
        $region107: #{tpu_custom_call.1} parent=99 // pred_region
          %s4081 = ssub.s32 512, 512
          %4082 = vsyncadd %s4068, %s4081
          %s4083 = smul.addr %s40, 4
          %s4084 = smul.addr %s4083, 128
          %s4085 = scalar_lea.hbm %s20, %s4084
          %s4086 = sshll.u32 %s4071, 4
          %s4087 = int_to_ptr.vmem [resolvable:$true] %s4086
          %4092 = dma.vmem_to_hbm [thread:$0]  %s4087, 512, %s4085, %s4068, 128, 128, 8
        $region108: #{tpu_custom_call.1} parent=99 // pred_fallthru
          _
        // Predicated region
        $region109: #{tpu_custom_call.1} parent=99 // pred_check
          %p4093 = pneg %p524
        $region110: #{tpu_custom_call.1} parent=99 // pred_check_branch
          %4095 = sbr.rel (%p4093) target = $region112
        $region111: #{tpu_custom_call.1} parent=99 // pred_region
          %s4097 = ssub.s32 512, 512
          %4098 = vsyncadd %s4073, %s4097
          %s4099 = smul.addr %s40, 4
          %s4100 = smul.addr %s4099, 128
          %s4101 = scalar_lea.hbm %s21, %s4100
          %s4102 = sshll.u32 %s4076, 4
          %s4103 = int_to_ptr.vmem [resolvable:$true] %s4102
          %4108 = dma.vmem_to_hbm [thread:$0]  %s4103, 512, %s4101, %s4073, 128, 128, 8
        $region112: #{tpu_custom_call.1} parent=99 // pred_fallthru
          _
      $region100: #{tpu_custom_call.1} parent=5 // pred_fallthru
        _
      %p4109 = scmp.le.s32.totalorder 2, %s35
      // Predicated region
      $region113: #{tpu_custom_call.1} parent=5 // pred_check
        %p4110 = pneg %p4109
      $region114: #{tpu_custom_call.1} parent=5 // pred_check_branch
        %4112 = sbr.rel (%p4110) target = $region116
      $region115: #{tpu_custom_call.1} parent=5 // pred_region
        %s4113 = ssub.s32 %s35, 2
        // Predicated region
        $region117: #{tpu_custom_call.1} parent=115 // pred_check
          %p4114 = pneg %p504
        $region118: #{tpu_custom_call.1} parent=115 // pred_check_branch
          %4116 = sbr.rel (%p4114) target = $region120
        $region119: #{tpu_custom_call.1} parent=115 // pred_region
          %s4117 = sand.u32 %s489, 1
          %s4118 = scalar_lea.sflag [#allocation4], %s4117
          %s4119 = sand.u32 %s489, 1
          %s4120 = smul.addr %s4119, 32
          %s4121 = scalar_lea.vmem [#allocation5], %s4120
          %4122 = dma.done %s4118, 512
        $region120: #{tpu_custom_call.1} parent=115 // pred_fallthru
          _
        // Predicated region
        $region121: #{tpu_custom_call.1} parent=115 // pred_check
          %p4123 = pneg %p530
        $region122: #{tpu_custom_call.1} parent=115 // pred_check_branch
          %4125 = sbr.rel (%p4123) target = $region124
        $region123: #{tpu_custom_call.1} parent=115 // pred_region
          %s4126 = sand.u32 %s515, 1
          %s4127 = scalar_lea.sflag [#allocation7], %s4126
          %s4128 = sand.u32 %s515, 1
          %s4129 = smul.addr %s4128, 32
          %s4130 = scalar_lea.vmem [#allocation6], %s4129
          %4131 = dma.done %s4127, 512
        $region124: #{tpu_custom_call.1} parent=115 // pred_fallthru
          _
      $region116: #{tpu_custom_call.1} parent=5 // pred_fallthru
        _
    $region6: #{tpu_custom_call.1} parent=1 // loop_footer
      %s39 = sadd.s32 1, %s35
    $region7: #{tpu_custom_call.1} parent=1 // loop_footer_branch
      %34 = sbr.rel target = $region3
    $region8: #{tpu_custom_call.1} parent=1 // loop_exit
      _
    %4132 = vsyncpa [#allocation3], 1
    %s4133 = scalar_lea.sflag [#allocation3], 1
    %4134 = vsyncpa %s4133, 1
    %4135 = vsyncpa [#allocation4], 1
    %s4136 = scalar_lea.sflag [#allocation4], 1
    %4137 = vsyncpa %s4136, 1
    %4138 = vsyncpa [#allocation7], 1
    %s4139 = scalar_lea.sflag [#allocation7], 1
    %4140 = vsyncpa %s4139, 1

</llo_original>
